<compile_context>
chip_gen: v5e
topology: v5e:2x2
jax: 0.10.0
libtpu: 0.0.40
codegen_flags: <defaults>
</compile_context>

<pallas_src>
import functools

import jax
import jax.numpy as jnp
from jax.experimental import pallas as pl
from jax.experimental.pallas import tpu as pltpu

EPS = 1e-5
LANE = 128
SUBLANE = 8
LPAD = 8                               # sublane-aligned left halo in the dw scratch
VMEM_LIMIT = 64 * 1024 * 1024          # <= physical VMEM on v5e/v6e (128 MiB) and v7x (64 MiB)
TILE_BUDGET = 16 * 1024 * 1024         # double-buffered per-call activation budget


def make_divisible(v, divisor=8, min_value=None):
    if min_value is None:
        min_value = divisor
    new_v = max(min_value, int(v + divisor / 2) // divisor * divisor)
    if new_v < 0.9 * v:
        new_v += divisor
    return new_v


def _round_up(v, m):
    return (v + m - 1) // m * m


def _pick_m_tile(m, row_bytes, budget=TILE_BUDGET):
    # Prefer the largest M tile that fits the (double-buffered) VMEM budget:
    # measured tiled-stream results put 512/1024 near ~85% of HBM roofline vs
    # ~63% at 256, and the ~0.35us per-grid-step overhead amortizes better.
    for t in (1024, 512, 256, 128, 64, 32, 16, 8):
        if m % t == 0 and 2 * t * row_bytes <= budget:
            return t
    # TODO(synk): ragged M (pl.cdiv grid + masked tail); fall back to one tile.
    return m


def _pad_last(a, size):
    pad = [(0, 0)] * a.ndim
    pad[-1] = (0, size - a.shape[-1])
    return jnp.pad(a, pad)


def _pad_2d(a, rows, cols):
    return jnp.pad(a, ((0, rows - a.shape[0]), (0, cols - a.shape[1])))


# ---------------------------------------------------------------------------
# Kernels
# ---------------------------------------------------------------------------

def _bn_scale_shift(s_ref, ss_ref, g_ref, b_ref, inv_count):
    """Training-mode BN (biased var) folded into y = x*scale + shift, (1, C)."""
    mean = s_ref[...] * inv_count
    var = jnp.maximum(ss_ref[...] * inv_count - mean * mean, 0.0)
    inv_std = jax.lax.rsqrt(var + EPS)
    scale = g_ref[...] * inv_std
    shift = b_ref[...] - mean * scale
    return scale, shift


def matmul_stats_kernel(x_ref, w_ref, y_ref, s_ref, ss_ref):
    """1x1 conv as (tm, K) @ (K, C) bf16 MXU matmul; emits per-step BN partials."""
    y = jnp.dot(x_ref[...].astype(jnp.bfloat16), w_ref[...],
                preferred_element_type=jnp.float32)
    yq = y.astype(y_ref.dtype)
    y_ref[...] = yq
    ys = yq.astype(jnp.float32)        # stats of the values the next stage will read
    s_ref[...] = jnp.sum(ys, axis=0, keepdims=True).reshape(s_ref.shape)
    ss_ref[...] = jnp.sum(ys * ys, axis=0, keepdims=True).reshape(ss_ref.shape)


def dw_conv_stats_kernel(x_ref, s_in_ref, ss_in_ref, g_ref, b_ref, wdw_ref,
                         y_ref, s_out_ref, ss_out_ref, xpad_ref, *, h, w,
                         inv_count):
    """Fused: previous-stage BN+ReLU, then depthwise 3x3 (stride 1, pad 1) as
    nine shifted VPU multiply-accumulates over a zero halo built in VMEM."""
    cp = x_ref.shape[-1]
    scale, shift = _bn_scale_shift(s_in_ref, ss_in_ref, g_ref, b_ref, inv_count)
    x = x_ref[0].astype(jnp.float32)                         # (h, w, cp)
    a = jnp.maximum(x * scale.reshape(1, 1, cp) + shift.reshape(1, 1, cp), 0.0)

    # Zero halo in VMEM (no HBM padding pass): zero-fill the scratch, then
    # store the activated tile at a sublane-aligned column offset (LPAD).
    xpad_ref[...] = jnp.zeros_like(xpad_ref)
    xpad_ref[1:h + 1, LPAD:LPAD + w, :] = a
    apad = xpad_ref[...]                                     # (h+2, w+LPAD+1, cp)

    wdw = wdw_ref[...]                                       # (9, cp) f32
    acc = jnp.zeros((h, w, cp), jnp.float32)
    for dy in range(3):
        for dx in range(3):
            k = dy * 3 + dx
            tap = wdw[k:k + 1, :].reshape(1, 1, cp)
            col = LPAD - 1 + dx
            acc = acc + apad[dy:dy + h, col:col + w, :] * tap

    yq = acc.astype(y_ref.dtype)
    y_ref[...] = yq.reshape(y_ref.shape)
    ys = yq.astype(jnp.float32).reshape(h * w, cp)
    s_out_ref[...] = jnp.sum(ys, axis=0, keepdims=True).reshape(s_out_ref.shape)
    ss_out_ref[...] = jnp.sum(ys * ys, axis=0, keepdims=True).reshape(ss_out_ref.shape)


def bn_relu_matmul_stats_kernel(x_ref, s_in_ref, ss_in_ref, g_ref, b_ref,
                                w_ref, y_ref, s_out_ref, ss_out_ref, *,
                                inv_count):
    """Fused: depthwise-stage BN+ReLU, then projection 1x1 bf16 matmul; emits
    the projection stage's per-step BN partials."""
    scale, shift = _bn_scale_shift(s_in_ref, ss_in_ref, g_ref, b_ref, inv_count)
    a = jnp.maximum(x_ref[...].astype(jnp.float32) * scale + shift, 0.0)
    y = jnp.dot(a.astype(jnp.bfloat16), w_ref[...],
                preferred_element_type=jnp.float32)
    yq = y.astype(y_ref.dtype)
    y_ref[...] = yq
    ys = yq.astype(jnp.float32)
    s_out_ref[...] = jnp.sum(ys, axis=0, keepdims=True).reshape(s_out_ref.shape)
    ss_out_ref[...] = jnp.sum(ys * ys, axis=0, keepdims=True).reshape(ss_out_ref.shape)


def bn_shortcut_relu_kernel(y_ref, s_ref, ss_ref, g_ref, b_ref, *rest,
                            inv_count, add_shortcut):
    """Projection BN (no activation) + identity shortcut add + final ReLU."""
    if add_shortcut:
        sc_ref, out_ref = rest
    else:
        (out_ref,) = rest
    scale, shift = _bn_scale_shift(s_ref, ss_ref, g_ref, b_ref, inv_count)
    y = y_ref[...].astype(jnp.float32) * scale + shift
    if add_shortcut:
        y = y + sc_ref[...].astype(jnp.float32)
    out_ref[...] = jnp.maximum(y, 0.0).astype(out_ref.dtype)


# ---------------------------------------------------------------------------
# Wrapper
# ---------------------------------------------------------------------------

def block_forward(x_nchw, w_exp, g_exp, b_exp, w_dw, g_dw, b_dw,
                  w_proj, g_proj, b_proj):
    """Forward pass of the inverted-residual Block (training-mode BatchNorms).

    x_nchw: (N, Cin, H, W) f32; w_exp: (Cexp, Cin, 1, 1); w_dw: (Cexp, 1, 3, 3);
    w_proj: (Cout, Cexp, 1, 1); gammas/betas: per-stage (C,) vectors.
    """
    # TODO(synk): stride != 1 (strided depthwise + AvgPool2d shortcut) and the
    # BatchNorm running_mean/running_var state updates are not implemented.
    f32, bf16 = jnp.float32, jnp.bfloat16
    n, cin, h, w = x_nchw.shape
    cexp = w_exp.shape[0]
    cout = w_proj.shape[0]
    assert w_exp.shape == (cexp, cin, 1, 1)
    assert w_dw.shape == (cexp, 1, 3, 3)
    assert w_proj.shape == (cout, cexp, 1, 1)
    use_shortcut = (cin == cout)

    cin_p = _round_up(cin, SUBLANE)        # matmul-K: no lane-128 pad needed
    cexp_p = _round_up(cexp, LANE)
    cout_p = _round_up(cout, LANE)
    m = n * h * w
    row_bytes = 4 * cin_p + 2 * cexp_p + 2 * cexp_p + 2 * cout_p + 4 * cout_p
    tm = _pick_m_tile(m, row_bytes)
    grid_m = m // tm
    inv_m = 1.0 / m

    # ---- glue: NCHW -> NHWC once, pad channels, reshape params -------------
    x_flat = _pad_last(
        jnp.transpose(x_nchw.astype(f32), (0, 2, 3, 1)).reshape(m, cin), cin_p)
    w1 = _pad_2d(jnp.transpose(w_exp.reshape(cexp, cin)).astype(f32),
                 cin_p, cexp_p).astype(bf16)                     # (cin_p, cexp_p)
    wdw = _pad_last(
        jnp.transpose(w_dw.reshape(cexp, 3, 3), (1, 2, 0)).reshape(9, cexp)
        .astype(f32), cexp_p)                                    # (9, cexp_p)
    w3 = _pad_2d(jnp.transpose(w_proj.reshape(cout, cexp)).astype(f32),
                 cexp_p, cout_p).astype(bf16)                    # (cexp_p, cout_p)
    g1, b1 = (_pad_last(v.reshape(1, cexp).astype(f32), cexp_p)
              for v in (g_exp, b_exp))
    g2, b2 = (_pad_last(v.reshape(1, cexp).astype(f32), cexp_p)
              for v in (g_dw, b_dw))
    g3, b3 = (_pad_last(v.reshape(1, cout).astype(f32), cout_p)
              for v in (g_proj, b_proj))

    params_par = pltpu.CompilerParams(dimension_semantics=("parallel",),
                                      vmem_limit_bytes=VMEM_LIMIT)

    # ---- stage 1: expansion 1x1 conv (bf16 matmul) + BN partials -----------
    y1, s1, ss1 = pl.pallas_call(
        matmul_stats_kernel,
        out_shape=(jax.ShapeDtypeStruct((m, cexp_p), bf16),
                   jax.ShapeDtypeStruct((grid_m, 1, cexp_p), f32),
                   jax.ShapeDtypeStruct((grid_m, 1, cexp_p), f32)),
        grid_spec=pltpu.PrefetchScalarGridSpec(
            num_scalar_prefetch=0,
            grid=(grid_m,),
            in_specs=[
                pl.BlockSpec((tm, cin_p), lambda i: (i, 0)),
                pl.BlockSpec((cin_p, cexp_p), lambda i: (0, 0)),
            ],
            out_specs=(
                pl.BlockSpec((tm, cexp_p), lambda i: (i, 0)),
                pl.BlockSpec((1, 1, cexp_p), lambda i: (i, 0, 0)),
                pl.BlockSpec((1, 1, cexp_p), lambda i: (i, 0, 0)),
            ),
        ),
        compiler_params=params_par,
        cost_estimate=pl.CostEstimate(
            flops=2 * m * cin_p * cexp_p, transcendentals=0,
            bytes_accessed=4 * m * cin_p + 2 * cin_p * cexp_p + 2 * m * cexp_p),
    )(x_flat, w1)
    s1r, ss1r = jnp.sum(s1, axis=0), jnp.sum(ss1, axis=0)        # (1, cexp_p)

    # ---- stage 2: exp BN+ReLU fused into depthwise 3x3 conv (stride 1) -----
    # TODO(synk): row-band spatial tiling (grid=(n, h//th)) for large H*W so
    # the per-image tile stays inside v7x's 64 MiB VMEM.
    y2, s2, ss2 = pl.pallas_call(
        functools.partial(dw_conv_stats_kernel, h=h, w=w, inv_count=inv_m),
        out_shape=(jax.ShapeDtypeStruct((n, h, w, cexp_p), bf16),
                   jax.ShapeDtypeStruct((n, 1, cexp_p), f32),
                   jax.ShapeDtypeStruct((n, 1, cexp_p), f32)),
        grid_spec=pltpu.PrefetchScalarGridSpec(
            num_scalar_prefetch=0,
            grid=(n,),
            in_specs=[
                pl.BlockSpec((1, h, w, cexp_p), lambda i: (i, 0, 0, 0)),
                pl.BlockSpec((1, cexp_p), lambda i: (0, 0)),
                pl.BlockSpec((1, cexp_p), lambda i: (0, 0)),
                pl.BlockSpec((1, cexp_p), lambda i: (0, 0)),
                pl.BlockSpec((1, cexp_p), lambda i: (0, 0)),
                pl.BlockSpec((9, cexp_p), lambda i: (0, 0)),
            ],
            out_specs=(
                pl.BlockSpec((1, h, w, cexp_p), lambda i: (i, 0, 0, 0)),
                pl.BlockSpec((1, 1, cexp_p), lambda i: (i, 0, 0)),
                pl.BlockSpec((1, 1, cexp_p), lambda i: (i, 0, 0)),
            ),
            scratch_shapes=[pltpu.VMEM((h + 2, w + LPAD + 1, cexp_p), f32)],
        ),
        compiler_params=params_par,
    )(y1.reshape(n, h, w, cexp_p), s1r, ss1r, g1, b1, wdw)
    s2r, ss2r = jnp.sum(s2, axis=0), jnp.sum(ss2, axis=0)

    # ---- stage 3: dw BN+ReLU fused into projection 1x1 conv (bf16 matmul) --
    y3, s3, ss3 = pl.pallas_call(
        functools.partial(bn_relu_matmul_stats_kernel, inv_count=inv_m),
        out_shape=(jax.ShapeDtypeStruct((m, cout_p), bf16),
                   jax.ShapeDtypeStruct((grid_m, 1, cout_p), f32),
                   jax.ShapeDtypeStruct((grid_m, 1, cout_p), f32)),
        grid_spec=pltpu.PrefetchScalarGridSpec(
            num_scalar_prefetch=0,
            grid=(grid_m,),
            in_specs=[
                pl.BlockSpec((tm, cexp_p), lambda i: (i, 0)),
                pl.BlockSpec((1, cexp_p), lambda i: (0, 0)),
                pl.BlockSpec((1, cexp_p), lambda i: (0, 0)),
                pl.BlockSpec((1, cexp_p), lambda i: (0, 0)),
                pl.BlockSpec((1, cexp_p), lambda i: (0, 0)),
                pl.BlockSpec((cexp_p, cout_p), lambda i: (0, 0)),
            ],
            out_specs=(
                pl.BlockSpec((tm, cout_p), lambda i: (i, 0)),
                pl.BlockSpec((1, 1, cout_p), lambda i: (i, 0, 0)),
                pl.BlockSpec((1, 1, cout_p), lambda i: (i, 0, 0)),
            ),
        ),
        compiler_params=params_par,
        cost_estimate=pl.CostEstimate(
            flops=2 * m * cexp_p * cout_p, transcendentals=0,
            bytes_accessed=2 * m * cexp_p + 2 * cexp_p * cout_p + 2 * m * cout_p),
    )(y2.reshape(m, cexp_p), s2r, ss2r, g2, b2, w3)
    s3r, ss3r = jnp.sum(s3, axis=0), jnp.sum(ss3, axis=0)

    # ---- stage 4: projection BN + identity shortcut + final ReLU -----------
    in_specs = [
        pl.BlockSpec((tm, cout_p), lambda i: (i, 0)),
        pl.BlockSpec((1, cout_p), lambda i: (0, 0)),
        pl.BlockSpec((1, cout_p), lambda i: (0, 0)),
        pl.BlockSpec((1, cout_p), lambda i: (0, 0)),
        pl.BlockSpec((1, cout_p), lambda i: (0, 0)),
    ]
    args = [y3, s3r, ss3r, g3, b3]
    if use_shortcut:
        # 128-padded view of x kept only for the shortcut add in this stage.
        in_specs.append(pl.BlockSpec((tm, cout_p), lambda i: (i, 0)))
        args.append(_pad_last(x_flat, cout_p))
    out_flat = pl.pallas_call(
        functools.partial(bn_shortcut_relu_kernel, inv_count=inv_m,
                          add_shortcut=use_shortcut),
        out_shape=jax.ShapeDtypeStruct((m, cout_p), bf16),
        grid_spec=pltpu.PrefetchScalarGridSpec(
            num_scalar_prefetch=0,
            grid=(grid_m,),
            in_specs=in_specs,
            out_specs=pl.BlockSpec((tm, cout_p), lambda i: (i, 0)),
        ),
        compiler_params=params_par,
        input_output_aliases={0: 0},         # overwrite y3's buffer in place
    )(*args)

    # ---- glue: strip channel padding, NHWC -> NCHW once --------------------
    out = out_flat.reshape(n, h, w, cout_p)[..., :cout].astype(f32)
    return jnp.transpose(out, (0, 3, 1, 2))


# ---------------------------------------------------------------------------
# Plain-JAX reference (mirrors the PyTorch module, training-mode BN)
# ---------------------------------------------------------------------------

def _bn_train_ref(x, gamma, beta):
    mean = jnp.mean(x, axis=(0, 2, 3), keepdims=True)
    var = jnp.mean(jnp.square(x - mean), axis=(0, 2, 3), keepdims=True)
    xn = (x - mean) * jax.lax.rsqrt(var + EPS)
    return xn * gamma.reshape(1, -1, 1, 1) + beta.reshape(1, -1, 1, 1)


def reference_forward(x, w_exp, g_exp, b_exp, w_dw, g_dw, b_dw,
                      w_proj, g_proj, b_proj):
    hp = jax.lax.Precision.HIGHEST
    dn = ("NCHW", "OIHW", "NCHW")
    y = jax.lax.conv_general_dilated(x, w_exp, (1, 1), ((0, 0), (0, 0)),
                                     dimension_numbers=dn, precision=hp)
    y = jnp.maximum(_bn_train_ref(y, g_exp, b_exp), 0.0)
    y = jax.lax.conv_general_dilated(y, w_dw, (1, 1), ((1, 1), (1, 1)),
                                     dimension_numbers=dn,
                                     feature_group_count=w_dw.shape[0],
                                     precision=hp)
    y = jnp.maximum(_bn_train_ref(y, g_dw, b_dw), 0.0)
    y = jax.lax.conv_general_dilated(y, w_proj, (1, 1), ((0, 0), (0, 0)),
                                     dimension_numbers=dn, precision=hp)
    y = _bn_train_ref(y, g_proj, b_proj)
    if x.shape[1] == w_proj.shape[0]:
        y = y + x
    return jnp.maximum(y, 0.0)


if __name__ == "__main__":
    N, CIN, H, W = 2, 4, 16, 16
    EXPANSION_RATE, STRIDE = 6, 1
    COUT = CIN                                   # -> identity shortcut path
    CEXP = make_divisible(CIN * EXPANSION_RATE, 8)

    key = jax.random.PRNGKey(0)
    kx, k1, k2, k3 = jax.random.split(key, 4)
    x = jax.random.normal(kx, (N, CIN, H, W), dtype=jnp.float32)

    def kaiming_uniform(k, shape):
        fan_in = shape[1] * shape[2] * shape[3]
        bound = float(jnp.sqrt(2.0) * jnp.sqrt(3.0 / fan_in))
        return jax.random.uniform(k, shape, jnp.float32, -bound, bound)

    w_exp = kaiming_uniform(k1, (CEXP, CIN, 1, 1))
    w_dw = kaiming_uniform(k2, (CEXP, 1, 3, 3))
    w_proj = kaiming_uniform(k3, (COUT, CEXP, 1, 1))
    g_exp = jnp.ones((CEXP,), jnp.float32)
    b_exp = jnp.zeros((CEXP,), jnp.float32)
    g_dw = jnp.ones((CEXP,), jnp.float32)
    b_dw = jnp.zeros((CEXP,), jnp.float32)
    g_proj = jnp.ones((COUT,), jnp.float32)
    b_proj = jnp.zeros((COUT,), jnp.float32)

    fwd = jax.jit(block_forward)
    out = fwd(x, w_exp, g_exp, b_exp, w_dw, g_dw, b_dw, w_proj, g_proj, b_proj)
    jax.block_until_ready(out)

    ref = reference_forward(x, w_exp, g_exp, b_exp, w_dw, g_dw, b_dw,
                            w_proj, g_proj, b_proj)
    assert out.shape == (N, COUT, H, W)
    max_err = float(jnp.max(jnp.abs(out - ref)))
    # bf16 intermediates / MXU operands vs f32 reference -> mixed-precision tol
    assert jnp.allclose(out, ref, atol=5e-2, rtol=5e-2), f"max abs err {max_err}"

    print("KERNEL_OK")
</pallas_src>

<mosaic_0001>
module attributes {stable_mosaic.version = 11 : i64} {
  func.func @matmul_stats_kernel(%arg0: i32, %arg1: memref<512x8xf32, #tpu.memory_space<vmem>>, %arg2: memref<8x128xbf16, #tpu.memory_space<vmem>>, %arg3: memref<512x128xbf16, #tpu.memory_space<vmem>>, %arg4: memref<1x1x128xf32, #tpu.memory_space<vmem>>, %arg5: memref<1x1x128xf32, #tpu.memory_space<vmem>>) attributes {dimension_semantics = [#tpu.dimension_semantics<parallel>], iteration_bounds = array<i64: 1>, scalar_prefetch = 0 : i64, scratch_operands = 0 : i64, tpu.core_type = #tpu.core_type<tc>, window_params = [{transform_indices = @transform_0, window_bounds = array<i64: 512, 8>}, {pipeline_mode = #tpu.pipeline_mode<synchronous>, transform_indices = @transform_1, window_bounds = array<i64: 8, 128>}, {transform_indices = @transform_2, window_bounds = array<i64: 512, 128>}, {transform_indices = @transform_3, window_bounds = array<i64: 1, 1, 128>}, {transform_indices = @transform_4, window_bounds = array<i64: 1, 1, 128>}]} {
    %c0 = arith.constant 0 : index
    %c0_0 = arith.constant 0 : index
    %0 = vector.load %arg1[%c0, %c0_0] : memref<512x8xf32, #tpu.memory_space<vmem>>, vector<512x8xf32>
    %1 = arith.truncf %0 : vector<512x8xf32> to vector<512x8xbf16>
    %c0_1 = arith.constant 0 : index
    %c0_2 = arith.constant 0 : index
    %2 = vector.load %arg2[%c0_1, %c0_2] : memref<8x128xbf16, #tpu.memory_space<vmem>>, vector<8x128xbf16>
    %cst = arith.constant dense<0.000000e+00> : vector<512x128xf32>
    %3 = tpu.matmul %1, %2, %cst {dimension_numbers = #tpu.dot_dimension_numbers<[1], [0], [0], [1], [0, 0, 1, 1], [], []>} : vector<512x8xbf16>, vector<8x128xbf16>, vector<512x128xf32> -> vector<512x128xf32>
    %4 = arith.truncf %3 : vector<512x128xf32> to vector<512x128xbf16>
    %c0_3 = arith.constant 0 : index
    %c0_4 = arith.constant 0 : index
    %5 = vector.load %arg3[%c0_3, %c0_4] : memref<512x128xbf16, #tpu.memory_space<vmem>>, vector<512x128xbf16>
    tpu.vector_store %arg3[%c0_3, %c0_4], %4 {strides = array<i32>} : memref<512x128xbf16, #tpu.memory_space<vmem>>, vector<512x128xbf16>,
    %6 = arith.extf %4 : vector<512x128xbf16> to vector<512x128xf32>
    %cst_5 = arith.constant dense<0.000000e+00> : vector<128xf32>
    %7 = vector.multi_reduction <add>, %6, %cst_5 [0] : vector<512x128xf32> to vector<128xf32>
    %8 = vector.shape_cast %7 : vector<128xf32> to vector<1x128xf32>
    %9 = vector.shape_cast %8 : vector<1x128xf32> to vector<1x1x128xf32>
    %c0_6 = arith.constant 0 : index
    %c0_7 = arith.constant 0 : index
    %c0_8 = arith.constant 0 : index
    %10 = vector.load %arg4[%c0_6, %c0_7, %c0_8] : memref<1x1x128xf32, #tpu.memory_space<vmem>>, vector<1x1x128xf32>
    tpu.vector_store %arg4[%c0_6, %c0_7, %c0_8], %9 {strides = array<i32>} : memref<1x1x128xf32, #tpu.memory_space<vmem>>, vector<1x1x128xf32>,
    %11 = arith.mulf %6, %6 : vector<512x128xf32>
    %cst_9 = arith.constant dense<0.000000e+00> : vector<128xf32>
    %12 = vector.multi_reduction <add>, %11, %cst_9 [0] : vector<512x128xf32> to vector<128xf32>
    %13 = vector.shape_cast %12 : vector<128xf32> to vector<1x128xf32>
    %14 = vector.shape_cast %13 : vector<1x128xf32> to vector<1x1x128xf32>
    %c0_10 = arith.constant 0 : index
    %c0_11 = arith.constant 0 : index
    %c0_12 = arith.constant 0 : index
    %15 = vector.load %arg5[%c0_10, %c0_11, %c0_12] : memref<1x1x128xf32, #tpu.memory_space<vmem>>, vector<1x1x128xf32>
    tpu.vector_store %arg5[%c0_10, %c0_11, %c0_12], %14 {strides = array<i32>} : memref<1x1x128xf32, #tpu.memory_space<vmem>>, vector<1x1x128xf32>,
    return
  }
  func.func @transform_0(%arg0: i32) -> (i32, i32) {
    %c0_i32 = arith.constant 0 : i32
    %c0_i32_0 = arith.constant 0 : i32
    return %arg0, %c0_i32 : i32, i32
  }
  func.func @transform_1(%arg0: i32) -> (i32, i32) {
    %c0_i32 = arith.constant 0 : i32
    %c0_i32_0 = arith.constant 0 : i32
    %c0_i32_1 = arith.constant 0 : i32
    return %c0_i32, %c0_i32_0 : i32, i32
  }
  func.func @transform_2(%arg0: i32) -> (i32, i32) {
    %c0_i32 = arith.constant 0 : i32
    %c0_i32_0 = arith.constant 0 : i32
    return %arg0, %c0_i32 : i32, i32
  }
  func.func @transform_3(%arg0: i32) -> (i32, i32, i32) {
    %c0_i32 = arith.constant 0 : i32
    %c0_i32_0 = arith.constant 0 : i32
    %c0_i32_1 = arith.constant 0 : i32
    return %arg0, %c0_i32, %c0_i32_0 : i32, i32, i32
  }
  func.func @transform_4(%arg0: i32) -> (i32, i32, i32) {
    %c0_i32 = arith.constant 0 : i32
    %c0_i32_0 = arith.constant 0 : i32
    %c0_i32_1 = arith.constant 0 : i32
    return %arg0, %c0_i32, %c0_i32_0 : i32, i32, i32
  }
}

module attributes {stable_mosaic.version = 11 : i64} {
  func.func @dw_conv_stats_kernel(%arg0: i32, %arg1: memref<1x16x16x128xbf16, #tpu.memory_space<vmem>>, %arg2: memref<1x128xf32, #tpu.memory_space<vmem>>, %arg3: memref<1x128xf32, #tpu.memory_space<vmem>>, %arg4: memref<1x128xf32, #tpu.memory_space<vmem>>, %arg5: memref<1x128xf32, #tpu.memory_space<vmem>>, %arg6: memref<9x128xf32, #tpu.memory_space<vmem>>, %arg7: memref<1x16x16x128xbf16, #tpu.memory_space<vmem>>, %arg8: memref<1x1x128xf32, #tpu.memory_space<vmem>>, %arg9: memref<1x1x128xf32, #tpu.memory_space<vmem>>, %arg10: memref<18x25x128xf32, #tpu.memory_space<vmem>>) attributes {dimension_semantics = [#tpu.dimension_semantics<parallel>], iteration_bounds = array<i64: 2>, scalar_prefetch = 0 : i64, scratch_operands = 1 : i64, tpu.core_type = #tpu.core_type<tc>, window_params = [{transform_indices = @transform_0, window_bounds = array<i64: 1, 16, 16, 128>}, {pipeline_mode = #tpu.pipeline_mode<synchronous>, transform_indices = @transform_1, window_bounds = array<i64: 1, 128>}, {pipeline_mode = #tpu.pipeline_mode<synchronous>, transform_indices = @transform_2, window_bounds = array<i64: 1, 128>}, {pipeline_mode = #tpu.pipeline_mode<synchronous>, transform_indices = @transform_3, window_bounds = array<i64: 1, 128>}, {pipeline_mode = #tpu.pipeline_mode<synchronous>, transform_indices = @transform_4, window_bounds = array<i64: 1, 128>}, {pipeline_mode = #tpu.pipeline_mode<synchronous>, transform_indices = @transform_5, window_bounds = array<i64: 9, 128>}, {transform_indices = @transform_6, window_bounds = array<i64: 1, 16, 16, 128>}, {transform_indices = @transform_7, window_bounds = array<i64: 1, 1, 128>}, {transform_indices = @transform_8, window_bounds = array<i64: 1, 1, 128>}]} {
    %c0 = arith.constant 0 : index
    %c0_0 = arith.constant 0 : index
    %0 = vector.load %arg2[%c0, %c0_0] : memref<1x128xf32, #tpu.memory_space<vmem>>, vector<1x128xf32>
    %cst = arith.constant 0.001953125 : f32
    %1 = vector.broadcast %cst : f32 to vector<1x128xf32>
    %2 = arith.mulf %0, %1 : vector<1x128xf32>
    %c0_1 = arith.constant 0 : index
    %c0_2 = arith.constant 0 : index
    %3 = vector.load %arg3[%c0_1, %c0_2] : memref<1x128xf32, #tpu.memory_space<vmem>>, vector<1x128xf32>
    %cst_3 = arith.constant 0.001953125 : f32
    %4 = vector.broadcast %cst_3 : f32 to vector<1x128xf32>
    %5 = arith.mulf %3, %4 : vector<1x128xf32>
    %6 = arith.mulf %2, %2 : vector<1x128xf32>
    %7 = arith.subf %5, %6 : vector<1x128xf32>
    %cst_4 = arith.constant 0.000000e+00 : f32
    %8 = vector.broadcast %cst_4 : f32 to vector<1x128xf32>
    %9 = arith.maximumf %7, %8 : vector<1x128xf32>
    %cst_5 = arith.constant 9.99999974E-6 : f32
    %10 = vector.broadcast %cst_5 : f32 to vector<1x128xf32>
    %11 = arith.addf %9, %10 : vector<1x128xf32>
    %12 = math.rsqrt %11 : vector<1x128xf32>
    %c0_6 = arith.constant 0 : index
    %c0_7 = arith.constant 0 : index
    %13 = vector.load %arg4[%c0_6, %c0_7] : memref<1x128xf32, #tpu.memory_space<vmem>>, vector<1x128xf32>
    %14 = arith.mulf %13, %12 : vector<1x128xf32>
    %c0_8 = arith.constant 0 : index
    %c0_9 = arith.constant 0 : index
    %15 = vector.load %arg5[%c0_8, %c0_9] : memref<1x128xf32, #tpu.memory_space<vmem>>, vector<1x128xf32>
    %16 = arith.mulf %2, %14 : vector<1x128xf32>
    %17 = arith.subf %15, %16 : vector<1x128xf32>
    %c0_10 = arith.constant 0 : index
    %c0_11 = arith.constant 0 : index
    %c0_12 = arith.constant 0 : index
    %c0_13 = arith.constant 0 : index
    %18 = vector.load %arg1[%c0_10, %c0_11, %c0_12, %c0_13] : memref<1x16x16x128xbf16, #tpu.memory_space<vmem>>, vector<1x16x16x128xbf16>
    %19 = vector.shape_cast %18 : vector<1x16x16x128xbf16> to vector<16x16x128xbf16>
    %20 = arith.extf %19 : vector<16x16x128xbf16> to vector<16x16x128xf32>
    %21 = vector.shape_cast %14 : vector<1x128xf32> to vector<1x1x128xf32>
    %22 = vector.broadcast %21 : vector<1x1x128xf32> to vector<16x16x128xf32>
    %23 = arith.mulf %20, %22 : vector<16x16x128xf32>
    %24 = vector.shape_cast %17 : vector<1x128xf32> to vector<1x1x128xf32>
    %25 = vector.broadcast %24 : vector<1x1x128xf32> to vector<16x16x128xf32>
    %26 = arith.addf %23, %25 : vector<16x16x128xf32>
    %cst_14 = arith.constant 0.000000e+00 : f32
    %27 = vector.broadcast %cst_14 : f32 to vector<16x16x128xf32>
    %28 = arith.maximumf %26, %27 : vector<16x16x128xf32>
    %cst_15 = arith.constant 0.000000e+00 : f32
    %29 = vector.broadcast %cst_15 : f32 to vector<18x25x128xf32>
    %c0_16 = arith.constant 0 : index
    %c0_17 = arith.constant 0 : index
    %c0_18 = arith.constant 0 : index
    %30 = vector.load %arg10[%c0_16, %c0_17, %c0_18] : memref<18x25x128xf32, #tpu.memory_space<vmem>>, vector<18x25x128xf32>
    tpu.vector_store %arg10[%c0_16, %c0_17, %c0_18], %29 {strides = array<i32>} : memref<18x25x128xf32, #tpu.memory_space<vmem>>, vector<18x25x128xf32>,
    %c1 = arith.constant 1 : index
    %c8 = arith.constant 8 : index
    %c0_19 = arith.constant 0 : index
    %31 = vector.load %arg10[%c1, %c8, %c0_19] : memref<18x25x128xf32, #tpu.memory_space<vmem>>, vector<16x16x128xf32>
    tpu.vector_store %arg10[%c1, %c8, %c0_19], %28 {strides = array<i32>} : memref<18x25x128xf32, #tpu.memory_space<vmem>>, vector<16x16x128xf32>,
    %c0_20 = arith.constant 0 : index
    %c0_21 = arith.constant 0 : index
    %c0_22 = arith.constant 0 : index
    %32 = vector.load %arg10[%c0_20, %c0_21, %c0_22] : memref<18x25x128xf32, #tpu.memory_space<vmem>>, vector<18x25x128xf32>
    %c0_23 = arith.constant 0 : index
    %c0_24 = arith.constant 0 : index
    %33 = vector.load %arg6[%c0_23, %c0_24] : memref<9x128xf32, #tpu.memory_space<vmem>>, vector<9x128xf32>
    %cst_25 = arith.constant 0.000000e+00 : f32
    %34 = vector.broadcast %cst_25 : f32 to vector<16x16x128xf32>
    %35 = vector.extract_strided_slice %33 {offsets = [0, 0], sizes = [1, 128], strides = [1, 1]} : vector<9x128xf32> to vector<1x128xf32>
    %36 = vector.shape_cast %35 : vector<1x128xf32> to vector<1x1x128xf32>
    %37 = vector.extract_strided_slice %32 {offsets = [0, 7, 0], sizes = [16, 16, 128], strides = [1, 1, 1]} : vector<18x25x128xf32> to vector<16x16x128xf32>
    %38 = vector.broadcast %36 : vector<1x1x128xf32> to vector<16x16x128xf32>
    %39 = arith.mulf %37, %38 : vector<16x16x128xf32>
    %40 = arith.addf %34, %39 : vector<16x16x128xf32>
    %41 = vector.extract_strided_slice %33 {offsets = [1, 0], sizes = [1, 128], strides = [1, 1]} : vector<9x128xf32> to vector<1x128xf32>
    %42 = vector.shape_cast %41 : vector<1x128xf32> to vector<1x1x128xf32>
    %43 = vector.extract_strided_slice %32 {offsets = [0, 8, 0], sizes = [16, 16, 128], strides = [1, 1, 1]} : vector<18x25x128xf32> to vector<16x16x128xf32>
    %44 = vector.broadcast %42 : vector<1x1x128xf32> to vector<16x16x128xf32>
    %45 = arith.mulf %43, %44 : vector<16x16x128xf32>
    %46 = arith.addf %40, %45 : vector<16x16x128xf32>
    %47 = vector.extract_strided_slice %33 {offsets = [2, 0], sizes = [1, 128], strides = [1, 1]} : vector<9x128xf32> to vector<1x128xf32>
    %48 = vector.shape_cast %47 : vector<1x128xf32> to vector<1x1x128xf32>
    %49 = vector.extract_strided_slice %32 {offsets = [0, 9, 0], sizes = [16, 16, 128], strides = [1, 1, 1]} : vector<18x25x128xf32> to vector<16x16x128xf32>
    %50 = vector.broadcast %48 : vector<1x1x128xf32> to vector<16x16x128xf32>
    %51 = arith.mulf %49, %50 : vector<16x16x128xf32>
    %52 = arith.addf %46, %51 : vector<16x16x128xf32>
    %53 = vector.extract_strided_slice %33 {offsets = [3, 0], sizes = [1, 128], strides = [1, 1]} : vector<9x128xf32> to vector<1x128xf32>
    %54 = vector.shape_cast %53 : vector<1x128xf32> to vector<1x1x128xf32>
    %55 = vector.extract_strided_slice %32 {offsets = [1, 7, 0], sizes = [16, 16, 128], strides = [1, 1, 1]} : vector<18x25x128xf32> to vector<16x16x128xf32>
    %56 = vector.broadcast %54 : vector<1x1x128xf32> to vector<16x16x128xf32>
    %57 = arith.mulf %55, %56 : vector<16x16x128xf32>
    %58 = arith.addf %52, %57 : vector<16x16x128xf32>
    %59 = vector.extract_strided_slice %33 {offsets = [4, 0], sizes = [1, 128], strides = [1, 1]} : vector<9x128xf32> to vector<1x128xf32>
    %60 = vector.shape_cast %59 : vector<1x128xf32> to vector<1x1x128xf32>
    %61 = vector.extract_strided_slice %32 {offsets = [1, 8, 0], sizes = [16, 16, 128], strides = [1, 1, 1]} : vector<18x25x128xf32> to vector<16x16x128xf32>
    %62 = vector.broadcast %60 : vector<1x1x128xf32> to vector<16x16x128xf32>
    %63 = arith.mulf %61, %62 : vector<16x16x128xf32>
    %64 = arith.addf %58, %63 : vector<16x16x128xf32>
    %65 = vector.extract_strided_slice %33 {offsets = [5, 0], sizes = [1, 128], strides = [1, 1]} : vector<9x128xf32> to vector<1x128xf32>
    %66 = vector.shape_cast %65 : vector<1x128xf32> to vector<1x1x128xf32>
    %67 = vector.extract_strided_slice %32 {offsets = [1, 9, 0], sizes = [16, 16, 128], strides = [1, 1, 1]} : vector<18x25x128xf32> to vector<16x16x128xf32>
    %68 = vector.broadcast %66 : vector<1x1x128xf32> to vector<16x16x128xf32>
    %69 = arith.mulf %67, %68 : vector<16x16x128xf32>
    %70 = arith.addf %64, %69 : vector<16x16x128xf32>
    %71 = vector.extract_strided_slice %33 {offsets = [6, 0], sizes = [1, 128], strides = [1, 1]} : vector<9x128xf32> to vector<1x128xf32>
    %72 = vector.shape_cast %71 : vector<1x128xf32> to vector<1x1x128xf32>
    %73 = vector.extract_strided_slice %32 {offsets = [2, 7, 0], sizes = [16, 16, 128], strides = [1, 1, 1]} : vector<18x25x128xf32> to vector<16x16x128xf32>
    %74 = vector.broadcast %72 : vector<1x1x128xf32> to vector<16x16x128xf32>
    %75 = arith.mulf %73, %74 : vector<16x16x128xf32>
    %76 = arith.addf %70, %75 : vector<16x16x128xf32>
    %77 = vector.extract_strided_slice %33 {offsets = [7, 0], sizes = [1, 128], strides = [1, 1]} : vector<9x128xf32> to vector<1x128xf32>
    %78 = vector.shape_cast %77 : vector<1x128xf32> to vector<1x1x128xf32>
    %79 = vector.extract_strided_slice %32 {offsets = [2, 8, 0], sizes = [16, 16, 128], strides = [1, 1, 1]} : vector<18x25x128xf32> to vector<16x16x128xf32>
    %80 = vector.broadcast %78 : vector<1x1x128xf32> to vector<16x16x128xf32>
    %81 = arith.mulf %79, %80 : vector<16x16x128xf32>
    %82 = arith.addf %76, %81 : vector<16x16x128xf32>
    %83 = vector.extract_strided_slice %33 {offsets = [8, 0], sizes = [1, 128], strides = [1, 1]} : vector<9x128xf32> to vector<1x128xf32>
    %84 = vector.shape_cast %83 : vector<1x128xf32> to vector<1x1x128xf32>
    %85 = vector.extract_strided_slice %32 {offsets = [2, 9, 0], sizes = [16, 16, 128], strides = [1, 1, 1]} : vector<18x25x128xf32> to vector<16x16x128xf32>
    %86 = vector.broadcast %84 : vector<1x1x128xf32> to vector<16x16x128xf32>
    %87 = arith.mulf %85, %86 : vector<16x16x128xf32>
    %88 = arith.addf %82, %87 : vector<16x16x128xf32>
    %89 = arith.truncf %88 : vector<16x16x128xf32> to vector<16x16x128xbf16>
    %90 = vector.shape_cast %89 : vector<16x16x128xbf16> to vector<1x16x16x128xbf16>
    %c0_26 = arith.constant 0 : index
    %c0_27 = arith.constant 0 : index
    %c0_28 = arith.constant 0 : index
    %c0_29 = arith.constant 0 : index
    %91 = vector.load %arg7[%c0_26, %c0_27, %c0_28, %c0_29] : memref<1x16x16x128xbf16, #tpu.memory_space<vmem>>, vector<1x16x16x128xbf16>
    tpu.vector_store %arg7[%c0_26, %c0_27, %c0_28, %c0_29], %90 {strides = array<i32>} : memref<1x16x16x128xbf16, #tpu.memory_space<vmem>>, vector<1x16x16x128xbf16>,
    %92 = arith.extf %89 : vector<16x16x128xbf16> to vector<16x16x128xf32>
    %93 = vector.shape_cast %92 : vector<16x16x128xf32> to vector<256x128xf32>
    %cst_30 = arith.constant dense<0.000000e+00> : vector<128xf32>
    %94 = vector.multi_reduction <add>, %93, %cst_30 [0] : vector<256x128xf32> to vector<128xf32>
    %95 = vector.shape_cast %94 : vector<128xf32> to vector<1x128xf32>
    %96 = vector.shape_cast %95 : vector<1x128xf32> to vector<1x1x128xf32>
    %c0_31 = arith.constant 0 : index
    %c0_32 = arith.constant 0 : index
    %c0_33 = arith.constant 0 : index
    %97 = vector.load %arg8[%c0_31, %c0_32, %c0_33] : memref<1x1x128xf32, #tpu.memory_space<vmem>>, vector<1x1x128xf32>
    tpu.vector_store %arg8[%c0_31, %c0_32, %c0_33], %96 {strides = array<i32>} : memref<1x1x128xf32, #tpu.memory_space<vmem>>, vector<1x1x128xf32>,
    %98 = arith.mulf %93, %93 : vector<256x128xf32>
    %cst_34 = arith.constant dense<0.000000e+00> : vector<128xf32>
    %99 = vector.multi_reduction <add>, %98, %cst_34 [0] : vector<256x128xf32> to vector<128xf32>
    %100 = vector.shape_cast %99 : vector<128xf32> to vector<1x128xf32>
    %101 = vector.shape_cast %100 : vector<1x128xf32> to vector<1x1x128xf32>
    %c0_35 = arith.constant 0 : index
    %c0_36 = arith.constant 0 : index
    %c0_37 = arith.constant 0 : index
    %102 = vector.load %arg9[%c0_35, %c0_36, %c0_37] : memref<1x1x128xf32, #tpu.memory_space<vmem>>, vector<1x1x128xf32>
    tpu.vector_store %arg9[%c0_35, %c0_36, %c0_37], %101 {strides = array<i32>} : memref<1x1x128xf32, #tpu.memory_space<vmem>>, vector<1x1x128xf32>,
    return
  }
  func.func @transform_0(%arg0: i32) -> (i32, i32, i32, i32) {
    %c0_i32 = arith.constant 0 : i32
    %c0_i32_0 = arith.constant 0 : i32
    %c0_i32_1 = arith.constant 0 : i32
    %c0_i32_2 = arith.constant 0 : i32
    return %arg0, %c0_i32, %c0_i32_0, %c0_i32_1 : i32, i32, i32, i32
  }
  func.func @transform_1(%arg0: i32) -> (i32, i32) {
    %c0_i32 = arith.constant 0 : i32
    %c0_i32_0 = arith.constant 0 : i32
    %c0_i32_1 = arith.constant 0 : i32
    return %c0_i32, %c0_i32_0 : i32, i32
  }
  func.func @transform_2(%arg0: i32) -> (i32, i32) {
    %c0_i32 = arith.constant 0 : i32
    %c0_i32_0 = arith.constant 0 : i32
    %c0_i32_1 = arith.constant 0 : i32
    return %c0_i32, %c0_i32_0 : i32, i32
  }
  func.func @transform_3(%arg0: i32) -> (i32, i32) {
    %c0_i32 = arith.constant 0 : i32
    %c0_i32_0 = arith.constant 0 : i32
    %c0_i32_1 = arith.constant 0 : i32
    return %c0_i32, %c0_i32_0 : i32, i32
  }
  func.func @transform_4(%arg0: i32) -> (i32, i32) {
    %c0_i32 = arith.constant 0 : i32
    %c0_i32_0 = arith.constant 0 : i32
    %c0_i32_1 = arith.constant 0 : i32
    return %c0_i32, %c0_i32_0 : i32, i32
  }
  func.func @transform_5(%arg0: i32) -> (i32, i32) {
    %c0_i32 = arith.constant 0 : i32
    %c0_i32_0 = arith.constant 0 : i32
    %c0_i32_1 = arith.constant 0 : i32
    return %c0_i32, %c0_i32_0 : i32, i32
  }
  func.func @transform_6(%arg0: i32) -> (i32, i32, i32, i32) {
    %c0_i32 = arith.constant 0 : i32
    %c0_i32_0 = arith.constant 0 : i32
    %c0_i32_1 = arith.constant 0 : i32
    %c0_i32_2 = arith.constant 0 : i32
    return %arg0, %c0_i32, %c0_i32_0, %c0_i32_1 : i32, i32, i32, i32
  }
  func.func @transform_7(%arg0: i32) -> (i32, i32, i32) {
    %c0_i32 = arith.constant 0 : i32
    %c0_i32_0 = arith.constant 0 : i32
    %c0_i32_1 = arith.constant 0 : i32
    return %arg0, %c0_i32, %c0_i32_0 : i32, i32, i32
  }
  func.func @transform_8(%arg0: i32) -> (i32, i32, i32) {
    %c0_i32 = arith.constant 0 : i32
    %c0_i32_0 = arith.constant 0 : i32
    %c0_i32_1 = arith.constant 0 : i32
    return %arg0, %c0_i32, %c0_i32_0 : i32, i32, i32
  }
}

module attributes {stable_mosaic.version = 11 : i64} {
  func.func @bn_relu_matmul_stats_kernel(%arg0: i32, %arg1: memref<512x128xbf16, #tpu.memory_space<vmem>>, %arg2: memref<1x128xf32, #tpu.memory_space<vmem>>, %arg3: memref<1x128xf32, #tpu.memory_space<vmem>>, %arg4: memref<1x128xf32, #tpu.memory_space<vmem>>, %arg5: memref<1x128xf32, #tpu.memory_space<vmem>>, %arg6: memref<128x128xbf16, #tpu.memory_space<vmem>>, %arg7: memref<512x128xbf16, #tpu.memory_space<vmem>>, %arg8: memref<1x1x128xf32, #tpu.memory_space<vmem>>, %arg9: memref<1x1x128xf32, #tpu.memory_space<vmem>>) attributes {dimension_semantics = [#tpu.dimension_semantics<parallel>], iteration_bounds = array<i64: 1>, scalar_prefetch = 0 : i64, scratch_operands = 0 : i64, tpu.core_type = #tpu.core_type<tc>, window_params = [{transform_indices = @transform_0, window_bounds = array<i64: 512, 128>}, {pipeline_mode = #tpu.pipeline_mode<synchronous>, transform_indices = @transform_1, window_bounds = array<i64: 1, 128>}, {pipeline_mode = #tpu.pipeline_mode<synchronous>, transform_indices = @transform_2, window_bounds = array<i64: 1, 128>}, {pipeline_mode = #tpu.pipeline_mode<synchronous>, transform_indices = @transform_3, window_bounds = array<i64: 1, 128>}, {pipeline_mode = #tpu.pipeline_mode<synchronous>, transform_indices = @transform_4, window_bounds = array<i64: 1, 128>}, {pipeline_mode = #tpu.pipeline_mode<synchronous>, transform_indices = @transform_5, window_bounds = array<i64: 128, 128>}, {transform_indices = @transform_6, window_bounds = array<i64: 512, 128>}, {transform_indices = @transform_7, window_bounds = array<i64: 1, 1, 128>}, {transform_indices = @transform_8, window_bounds = array<i64: 1, 1, 128>}]} {
    %c0 = arith.constant 0 : index
    %c0_0 = arith.constant 0 : index
    %0 = vector.load %arg2[%c0, %c0_0] : memref<1x128xf32, #tpu.memory_space<vmem>>, vector<1x128xf32>
    %cst = arith.constant 0.001953125 : f32
    %1 = vector.broadcast %cst : f32 to vector<1x128xf32>
    %2 = arith.mulf %0, %1 : vector<1x128xf32>
    %c0_1 = arith.constant 0 : index
    %c0_2 = arith.constant 0 : index
    %3 = vector.load %arg3[%c0_1, %c0_2] : memref<1x128xf32, #tpu.memory_space<vmem>>, vector<1x128xf32>
    %cst_3 = arith.constant 0.001953125 : f32
    %4 = vector.broadcast %cst_3 : f32 to vector<1x128xf32>
    %5 = arith.mulf %3, %4 : vector<1x128xf32>
    %6 = arith.mulf %2, %2 : vector<1x128xf32>
    %7 = arith.subf %5, %6 : vector<1x128xf32>
    %cst_4 = arith.constant 0.000000e+00 : f32
    %8 = vector.broadcast %cst_4 : f32 to vector<1x128xf32>
    %9 = arith.maximumf %7, %8 : vector<1x128xf32>
    %cst_5 = arith.constant 9.99999974E-6 : f32
    %10 = vector.broadcast %cst_5 : f32 to vector<1x128xf32>
    %11 = arith.addf %9, %10 : vector<1x128xf32>
    %12 = math.rsqrt %11 : vector<1x128xf32>
    %c0_6 = arith.constant 0 : index
    %c0_7 = arith.constant 0 : index
    %13 = vector.load %arg4[%c0_6, %c0_7] : memref<1x128xf32, #tpu.memory_space<vmem>>, vector<1x128xf32>
    %14 = arith.mulf %13, %12 : vector<1x128xf32>
    %c0_8 = arith.constant 0 : index
    %c0_9 = arith.constant 0 : index
    %15 = vector.load %arg5[%c0_8, %c0_9] : memref<1x128xf32, #tpu.memory_space<vmem>>, vector<1x128xf32>
    %16 = arith.mulf %2, %14 : vector<1x128xf32>
    %17 = arith.subf %15, %16 : vector<1x128xf32>
    %c0_10 = arith.constant 0 : index
    %c0_11 = arith.constant 0 : index
    %18 = vector.load %arg1[%c0_10, %c0_11] : memref<512x128xbf16, #tpu.memory_space<vmem>>, vector<512x128xbf16>
    %19 = arith.extf %18 : vector<512x128xbf16> to vector<512x128xf32>
    %20 = vector.broadcast %14 : vector<1x128xf32> to vector<512x128xf32>
    %21 = arith.mulf %19, %20 : vector<512x128xf32>
    %22 = vector.broadcast %17 : vector<1x128xf32> to vector<512x128xf32>
    %23 = arith.addf %21, %22 : vector<512x128xf32>
    %cst_12 = arith.constant 0.000000e+00 : f32
    %24 = vector.broadcast %cst_12 : f32 to vector<512x128xf32>
    %25 = arith.maximumf %23, %24 : vector<512x128xf32>
    %26 = arith.truncf %25 : vector<512x128xf32> to vector<512x128xbf16>
    %c0_13 = arith.constant 0 : index
    %c0_14 = arith.constant 0 : index
    %27 = vector.load %arg6[%c0_13, %c0_14] : memref<128x128xbf16, #tpu.memory_space<vmem>>, vector<128x128xbf16>
    %cst_15 = arith.constant dense<0.000000e+00> : vector<512x128xf32>
    %28 = tpu.matmul %26, %27, %cst_15 {dimension_numbers = #tpu.dot_dimension_numbers<[1], [0], [0], [1], [0, 0, 1, 1], [], []>} : vector<512x128xbf16>, vector<128x128xbf16>, vector<512x128xf32> -> vector<512x128xf32>
    %29 = arith.truncf %28 : vector<512x128xf32> to vector<512x128xbf16>
    %c0_16 = arith.constant 0 : index
    %c0_17 = arith.constant 0 : index
    %30 = vector.load %arg7[%c0_16, %c0_17] : memref<512x128xbf16, #tpu.memory_space<vmem>>, vector<512x128xbf16>
    tpu.vector_store %arg7[%c0_16, %c0_17], %29 {strides = array<i32>} : memref<512x128xbf16, #tpu.memory_space<vmem>>, vector<512x128xbf16>,
    %31 = arith.extf %29 : vector<512x128xbf16> to vector<512x128xf32>
    %cst_18 = arith.constant dense<0.000000e+00> : vector<128xf32>
    %32 = vector.multi_reduction <add>, %31, %cst_18 [0] : vector<512x128xf32> to vector<128xf32>
    %33 = vector.shape_cast %32 : vector<128xf32> to vector<1x128xf32>
    %34 = vector.shape_cast %33 : vector<1x128xf32> to vector<1x1x128xf32>
    %c0_19 = arith.constant 0 : index
    %c0_20 = arith.constant 0 : index
    %c0_21 = arith.constant 0 : index
    %35 = vector.load %arg8[%c0_19, %c0_20, %c0_21] : memref<1x1x128xf32, #tpu.memory_space<vmem>>, vector<1x1x128xf32>
    tpu.vector_store %arg8[%c0_19, %c0_20, %c0_21], %34 {strides = array<i32>} : memref<1x1x128xf32, #tpu.memory_space<vmem>>, vector<1x1x128xf32>,
    %36 = arith.mulf %31, %31 : vector<512x128xf32>
    %cst_22 = arith.constant dense<0.000000e+00> : vector<128xf32>
    %37 = vector.multi_reduction <add>, %36, %cst_22 [0] : vector<512x128xf32> to vector<128xf32>
    %38 = vector.shape_cast %37 : vector<128xf32> to vector<1x128xf32>
    %39 = vector.shape_cast %38 : vector<1x128xf32> to vector<1x1x128xf32>
    %c0_23 = arith.constant 0 : index
    %c0_24 = arith.constant 0 : index
    %c0_25 = arith.constant 0 : index
    %40 = vector.load %arg9[%c0_23, %c0_24, %c0_25] : memref<1x1x128xf32, #tpu.memory_space<vmem>>, vector<1x1x128xf32>
    tpu.vector_store %arg9[%c0_23, %c0_24, %c0_25], %39 {strides = array<i32>} : memref<1x1x128xf32, #tpu.memory_space<vmem>>, vector<1x1x128xf32>,
    return
  }
  func.func @transform_0(%arg0: i32) -> (i32, i32) {
    %c0_i32 = arith.constant 0 : i32
    %c0_i32_0 = arith.constant 0 : i32
    return %arg0, %c0_i32 : i32, i32
  }
  func.func @transform_1(%arg0: i32) -> (i32, i32) {
    %c0_i32 = arith.constant 0 : i32
    %c0_i32_0 = arith.constant 0 : i32
    %c0_i32_1 = arith.constant 0 : i32
    return %c0_i32, %c0_i32_0 : i32, i32
  }
  func.func @transform_2(%arg0: i32) -> (i32, i32) {
    %c0_i32 = arith.constant 0 : i32
    %c0_i32_0 = arith.constant 0 : i32
    %c0_i32_1 = arith.constant 0 : i32
    return %c0_i32, %c0_i32_0 : i32, i32
  }
  func.func @transform_3(%arg0: i32) -> (i32, i32) {
    %c0_i32 = arith.constant 0 : i32
    %c0_i32_0 = arith.constant 0 : i32
    %c0_i32_1 = arith.constant 0 : i32
    return %c0_i32, %c0_i32_0 : i32, i32
  }
  func.func @transform_4(%arg0: i32) -> (i32, i32) {
    %c0_i32 = arith.constant 0 : i32
    %c0_i32_0 = arith.constant 0 : i32
    %c0_i32_1 = arith.constant 0 : i32
    return %c0_i32, %c0_i32_0 : i32, i32
  }
  func.func @transform_5(%arg0: i32) -> (i32, i32) {
    %c0_i32 = arith.constant 0 : i32
    %c0_i32_0 = arith.constant 0 : i32
    %c0_i32_1 = arith.constant 0 : i32
    return %c0_i32, %c0_i32_0 : i32, i32
  }
  func.func @transform_6(%arg0: i32) -> (i32, i32) {
    %c0_i32 = arith.constant 0 : i32
    %c0_i32_0 = arith.constant 0 : i32
    return %arg0, %c0_i32 : i32, i32
  }
  func.func @transform_7(%arg0: i32) -> (i32, i32, i32) {
    %c0_i32 = arith.constant 0 : i32
    %c0_i32_0 = arith.constant 0 : i32
    %c0_i32_1 = arith.constant 0 : i32
    return %arg0, %c0_i32, %c0_i32_0 : i32, i32, i32
  }
  func.func @transform_8(%arg0: i32) -> (i32, i32, i32) {
    %c0_i32 = arith.constant 0 : i32
    %c0_i32_0 = arith.constant 0 : i32
    %c0_i32_1 = arith.constant 0 : i32
    return %arg0, %c0_i32, %c0_i32_0 : i32, i32, i32
  }
}

module attributes {stable_mosaic.version = 11 : i64} {
  func.func @bn_shortcut_relu_kernel(%arg0: i32, %arg1: memref<512x128xbf16, #tpu.memory_space<vmem>>, %arg2: memref<1x128xf32, #tpu.memory_space<vmem>>, %arg3: memref<1x128xf32, #tpu.memory_space<vmem>>, %arg4: memref<1x128xf32, #tpu.memory_space<vmem>>, %arg5: memref<1x128xf32, #tpu.memory_space<vmem>>, %arg6: memref<512x128xf32, #tpu.memory_space<vmem>>, %arg7: memref<512x128xbf16, #tpu.memory_space<vmem>>) attributes {dimension_semantics = [#tpu.dimension_semantics<parallel>], iteration_bounds = array<i64: 1>, scalar_prefetch = 0 : i64, scratch_operands = 0 : i64, tpu.core_type = #tpu.core_type<tc>, window_params = [{transform_indices = @transform_0, window_bounds = array<i64: 512, 128>}, {pipeline_mode = #tpu.pipeline_mode<synchronous>, transform_indices = @transform_1, window_bounds = array<i64: 1, 128>}, {pipeline_mode = #tpu.pipeline_mode<synchronous>, transform_indices = @transform_2, window_bounds = array<i64: 1, 128>}, {pipeline_mode = #tpu.pipeline_mode<synchronous>, transform_indices = @transform_3, window_bounds = array<i64: 1, 128>}, {pipeline_mode = #tpu.pipeline_mode<synchronous>, transform_indices = @transform_4, window_bounds = array<i64: 1, 128>}, {transform_indices = @transform_5, window_bounds = array<i64: 512, 128>}, {transform_indices = @transform_6, window_bounds = array<i64: 512, 128>}]} {
    %c0 = arith.constant 0 : index
    %c0_0 = arith.constant 0 : index
    %0 = vector.load %arg2[%c0, %c0_0] : memref<1x128xf32, #tpu.memory_space<vmem>>, vector<1x128xf32>
    %cst = arith.constant 0.001953125 : f32
    %1 = vector.broadcast %cst : f32 to vector<1x128xf32>
    %2 = arith.mulf %0, %1 : vector<1x128xf32>
    %c0_1 = arith.constant 0 : index
    %c0_2 = arith.constant 0 : index
    %3 = vector.load %arg3[%c0_1, %c0_2] : memref<1x128xf32, #tpu.memory_space<vmem>>, vector<1x128xf32>
    %cst_3 = arith.constant 0.001953125 : f32
    %4 = vector.broadcast %cst_3 : f32 to vector<1x128xf32>
    %5 = arith.mulf %3, %4 : vector<1x128xf32>
    %6 = arith.mulf %2, %2 : vector<1x128xf32>
    %7 = arith.subf %5, %6 : vector<1x128xf32>
    %cst_4 = arith.constant 0.000000e+00 : f32
    %8 = vector.broadcast %cst_4 : f32 to vector<1x128xf32>
    %9 = arith.maximumf %7, %8 : vector<1x128xf32>
    %cst_5 = arith.constant 9.99999974E-6 : f32
    %10 = vector.broadcast %cst_5 : f32 to vector<1x128xf32>
    %11 = arith.addf %9, %10 : vector<1x128xf32>
    %12 = math.rsqrt %11 : vector<1x128xf32>
    %c0_6 = arith.constant 0 : index
    %c0_7 = arith.constant 0 : index
    %13 = vector.load %arg4[%c0_6, %c0_7] : memref<1x128xf32, #tpu.memory_space<vmem>>, vector<1x128xf32>
    %14 = arith.mulf %13, %12 : vector<1x128xf32>
    %c0_8 = arith.constant 0 : index
    %c0_9 = arith.constant 0 : index
    %15 = vector.load %arg5[%c0_8, %c0_9] : memref<1x128xf32, #tpu.memory_space<vmem>>, vector<1x128xf32>
    %16 = arith.mulf %2, %14 : vector<1x128xf32>
    %17 = arith.subf %15, %16 : vector<1x128xf32>
    %c0_10 = arith.constant 0 : index
    %c0_11 = arith.constant 0 : index
    %18 = vector.load %arg1[%c0_10, %c0_11] : memref<512x128xbf16, #tpu.memory_space<vmem>>, vector<512x128xbf16>
    %19 = arith.extf %18 : vector<512x128xbf16> to vector<512x128xf32>
    %20 = vector.broadcast %14 : vector<1x128xf32> to vector<512x128xf32>
    %21 = arith.mulf %19, %20 : vector<512x128xf32>
    %22 = vector.broadcast %17 : vector<1x128xf32> to vector<512x128xf32>
    %23 = arith.addf %21, %22 : vector<512x128xf32>
    %c0_12 = arith.constant 0 : index
    %c0_13 = arith.constant 0 : index
    %24 = vector.load %arg6[%c0_12, %c0_13] : memref<512x128xf32, #tpu.memory_space<vmem>>, vector<512x128xf32>
    %25 = arith.addf %23, %24 : vector<512x128xf32>
    %cst_14 = arith.constant 0.000000e+00 : f32
    %26 = vector.broadcast %cst_14 : f32 to vector<512x128xf32>
    %27 = arith.maximumf %25, %26 : vector<512x128xf32>
    %28 = arith.truncf %27 : vector<512x128xf32> to vector<512x128xbf16>
    %c0_15 = arith.constant 0 : index
    %c0_16 = arith.constant 0 : index
    %29 = vector.load %arg7[%c0_15, %c0_16] : memref<512x128xbf16, #tpu.memory_space<vmem>>, vector<512x128xbf16>
    tpu.vector_store %arg7[%c0_15, %c0_16], %28 {strides = array<i32>} : memref<512x128xbf16, #tpu.memory_space<vmem>>, vector<512x128xbf16>,
    return
  }
  func.func @transform_0(%arg0: i32) -> (i32, i32) {
    %c0_i32 = arith.constant 0 : i32
    %c0_i32_0 = arith.constant 0 : i32
    return %arg0, %c0_i32 : i32, i32
  }
  func.func @transform_1(%arg0: i32) -> (i32, i32) {
    %c0_i32 = arith.constant 0 : i32
    %c0_i32_0 = arith.constant 0 : i32
    %c0_i32_1 = arith.constant 0 : i32
    return %c0_i32, %c0_i32_0 : i32, i32
  }
  func.func @transform_2(%arg0: i32) -> (i32, i32) {
    %c0_i32 = arith.constant 0 : i32
    %c0_i32_0 = arith.constant 0 : i32
    %c0_i32_1 = arith.constant 0 : i32
    return %c0_i32, %c0_i32_0 : i32, i32
  }
  func.func @transform_3(%arg0: i32) -> (i32, i32) {
    %c0_i32 = arith.constant 0 : i32
    %c0_i32_0 = arith.constant 0 : i32
    %c0_i32_1 = arith.constant 0 : i32
    return %c0_i32, %c0_i32_0 : i32, i32
  }
  func.func @transform_4(%arg0: i32) -> (i32, i32) {
    %c0_i32 = arith.constant 0 : i32
    %c0_i32_0 = arith.constant 0 : i32
    %c0_i32_1 = arith.constant 0 : i32
    return %c0_i32, %c0_i32_0 : i32, i32
  }
  func.func @transform_5(%arg0: i32) -> (i32, i32) {
    %c0_i32 = arith.constant 0 : i32
    %c0_i32_0 = arith.constant 0 : i32
    return %arg0, %c0_i32 : i32, i32
  }
  func.func @transform_6(%arg0: i32) -> (i32, i32) {
    %c0_i32 = arith.constant 0 : i32
    %c0_i32_0 = arith.constant 0 : i32
    return %arg0, %c0_i32 : i32, i32
  }
}

</mosaic_0001>

<llo_original>
// kernel: block_forward.4
$region0: #{block_forward.4}
  #allocation0 [shape = 'u32[]', space=smem, size = 0x4, offset = 0x4, fixed_abs, tag = 'smem constant byte address 0x4 - core index']
  #allocation1 [shape = 'u32[72,128]{1,0:T(1,128)}', space=vmem, size = 0x9000, scoped, tag = 'internal scratch']
  %s0 = inlined_call_operand.vmem [shape: f32[512,8], index: 0, kind: input, shape index: {}]
  %s1 = inlined_call_operand.vmem [shape: bf16[8,128], index: 1, kind: input, shape index: {}]
  %s2 = inlined_call_operand.vmem [shape: bf16[512,128], index: 2, kind: output, shape index: {0}]
  %s3 = inlined_call_operand.vmem [shape: f32[1,1,128], index: 3, kind: output, shape index: {1}]
  %s4 = inlined_call_operand.vmem [shape: f32[1,1,128], index: 4, kind: output, shape index: {2}]
  %5 = xla_tuple %s2, %s3, %s4
  %s6 = sld [smem:[#allocation0]]
  $region34: #{block_forward.4} parent=0
    _
  %s8 = ssub.s32 1, %s6
  %s9 = scalar_select 0, %s8, %s6
  // Predicated region
  $region2: #{block_forward.4} parent=0 // pred_check
    _
  $region3: #{block_forward.4} parent=0 // pred_check_branch
    %11 = sbr.rel (0) target = $region5
  $region4: #{block_forward.4} parent=0 // pred_region
    _
  $region5: #{block_forward.4} parent=0 // pred_fallthru
    _
  // Predicated region
  $region6: #{block_forward.4} parent=0 // pred_check
    _
  $region7: #{block_forward.4} parent=0 // pred_check_branch
    %13 = sbr.rel (0) target = $region9
  $region8: #{block_forward.4} parent=0 // pred_region
    _
  $region9: #{block_forward.4} parent=0 // pred_fallthru
    _
  %v15 = vld [vmem:[%s0] sm:$0xff]
  %v16 = vld [vmem:[%s0 + $0x8] sm:$0xff]
  %v17 = vld [vmem:[%s0 + $0x10] sm:$0xff]
  %v18 = vld [vmem:[%s0 + $0x18] sm:$0xff]
  %v19 = vld [vmem:[%s0 + $0x20] sm:$0xff]
  %v20 = vld [vmem:[%s0 + $0x28] sm:$0xff]
  %v21 = vld [vmem:[%s0 + $0x30] sm:$0xff]
  %v22 = vld [vmem:[%s0 + $0x38] sm:$0xff]
  %v23 = vld [vmem:[%s0 + $0x40] sm:$0xff]
  %v24 = vld [vmem:[%s0 + $0x48] sm:$0xff]
  %v25 = vld [vmem:[%s0 + $0x50] sm:$0xff]
  %v26 = vld [vmem:[%s0 + $0x58] sm:$0xff]
  %v27 = vld [vmem:[%s0 + $0x60] sm:$0xff]
  %v28 = vld [vmem:[%s0 + $0x68] sm:$0xff]
  %v29 = vld [vmem:[%s0 + $0x70] sm:$0xff]
  %v30 = vld [vmem:[%s0 + $0x78] sm:$0xff]
  %v31 = vld [vmem:[%s0 + $0x80] sm:$0xff]
  %v32 = vld [vmem:[%s0 + $0x88] sm:$0xff]
  %v33 = vld [vmem:[%s0 + $0x90] sm:$0xff]
  %v34 = vld [vmem:[%s0 + $0x98] sm:$0xff]
  %v35 = vld [vmem:[%s0 + $0xa0] sm:$0xff]
  %v36 = vld [vmem:[%s0 + $0xa8] sm:$0xff]
  %v37 = vld [vmem:[%s0 + $0xb0] sm:$0xff]
  %v38 = vld [vmem:[%s0 + $0xb8] sm:$0xff]
  %v39 = vld [vmem:[%s0 + $0xc0] sm:$0xff]
  %v40 = vld [vmem:[%s0 + $0xc8] sm:$0xff]
  %v41 = vld [vmem:[%s0 + $0xd0] sm:$0xff]
  %v42 = vld [vmem:[%s0 + $0xd8] sm:$0xff]
  %v43 = vld [vmem:[%s0 + $0xe0] sm:$0xff]
  %v44 = vld [vmem:[%s0 + $0xe8] sm:$0xff]
  %v45 = vld [vmem:[%s0 + $0xf0] sm:$0xff]
  %v46 = vld [vmem:[%s0 + $0xf8] sm:$0xff]
  %v47 = vld [vmem:[%s0 + $0x100] sm:$0xff]
  %v48 = vld [vmem:[%s0 + $0x108] sm:$0xff]
  %v49 = vld [vmem:[%s0 + $0x110] sm:$0xff]
  %v50 = vld [vmem:[%s0 + $0x118] sm:$0xff]
  %v51 = vld [vmem:[%s0 + $0x120] sm:$0xff]
  %v52 = vld [vmem:[%s0 + $0x128] sm:$0xff]
  %v53 = vld [vmem:[%s0 + $0x130] sm:$0xff]
  %v54 = vld [vmem:[%s0 + $0x138] sm:$0xff]
  %v55 = vld [vmem:[%s0 + $0x140] sm:$0xff]
  %v56 = vld [vmem:[%s0 + $0x148] sm:$0xff]
  %v57 = vld [vmem:[%s0 + $0x150] sm:$0xff]
  %v58 = vld [vmem:[%s0 + $0x158] sm:$0xff]
  %v59 = vld [vmem:[%s0 + $0x160] sm:$0xff]
  %v60 = vld [vmem:[%s0 + $0x168] sm:$0xff]
  %v61 = vld [vmem:[%s0 + $0x170] sm:$0xff]
  %v62 = vld [vmem:[%s0 + $0x178] sm:$0xff]
  %v63 = vld [vmem:[%s0 + $0x180] sm:$0xff]
  %v64 = vld [vmem:[%s0 + $0x188] sm:$0xff]
  %v65 = vld [vmem:[%s0 + $0x190] sm:$0xff]
  %v66 = vld [vmem:[%s0 + $0x198] sm:$0xff]
  %v67 = vld [vmem:[%s0 + $0x1a0] sm:$0xff]
  %v68 = vld [vmem:[%s0 + $0x1a8] sm:$0xff]
  %v69 = vld [vmem:[%s0 + $0x1b0] sm:$0xff]
  %v70 = vld [vmem:[%s0 + $0x1b8] sm:$0xff]
  %v71 = vld [vmem:[%s0 + $0x1c0] sm:$0xff]
  %v72 = vld [vmem:[%s0 + $0x1c8] sm:$0xff]
  %v73 = vld [vmem:[%s0 + $0x1d0] sm:$0xff]
  %v74 = vld [vmem:[%s0 + $0x1d8] sm:$0xff]
  %v75 = vld [vmem:[%s0 + $0x1e0] sm:$0xff]
  %v76 = vld [vmem:[%s0 + $0x1e8] sm:$0xff]
  %v77 = vld [vmem:[%s0 + $0x1f0] sm:$0xff]
  %v78 = vld [vmem:[%s0 + $0x1f8] sm:$0xff]
  %v79 = vpack.c.bf16 %v16, %v15
  %v80 = vpack.c.bf16 %v18, %v17
  %v81 = vpack.c.bf16 %v20, %v19
  %v82 = vpack.c.bf16 %v22, %v21
  %v83 = vpack.c.bf16 %v24, %v23
  %v84 = vpack.c.bf16 %v26, %v25
  %v85 = vpack.c.bf16 %v28, %v27
  %v86 = vpack.c.bf16 %v30, %v29
  %v87 = vpack.c.bf16 %v32, %v31
  %v88 = vpack.c.bf16 %v34, %v33
  %v89 = vpack.c.bf16 %v36, %v35
  %v90 = vpack.c.bf16 %v38, %v37
  %v91 = vpack.c.bf16 %v40, %v39
  %v92 = vpack.c.bf16 %v42, %v41
  %v93 = vpack.c.bf16 %v44, %v43
  %v94 = vpack.c.bf16 %v46, %v45
  %v95 = vpack.c.bf16 %v48, %v47
  %v96 = vpack.c.bf16 %v50, %v49
  %v97 = vpack.c.bf16 %v52, %v51
  %v98 = vpack.c.bf16 %v54, %v53
  %v99 = vpack.c.bf16 %v56, %v55
  %v100 = vpack.c.bf16 %v58, %v57
  %v101 = vpack.c.bf16 %v60, %v59
  %v102 = vpack.c.bf16 %v62, %v61
  %v103 = vpack.c.bf16 %v64, %v63
  %v104 = vpack.c.bf16 %v66, %v65
  %v105 = vpack.c.bf16 %v68, %v67
  %v106 = vpack.c.bf16 %v70, %v69
  %v107 = vpack.c.bf16 %v72, %v71
  %v108 = vpack.c.bf16 %v74, %v73
  %v109 = vpack.c.bf16 %v76, %v75
  %v110 = vpack.c.bf16 %v78, %v77
  %v111 = vld [vmem:[%s1] sm:$0xf]
  %vm112 = vcmask 64512
  %v114 = vsel %vm112, %v79, 0
  %v117 = vsel %vm112, %v80, 0
  %v120 = vsel %vm112, %v81, 0
  %v123 = vsel %vm112, %v82, 0
  %v126 = vsel %vm112, %v83, 0
  %v129 = vsel %vm112, %v84, 0
  %v132 = vsel %vm112, %v85, 0
  %v135 = vsel %vm112, %v86, 0
  %v138 = vsel %vm112, %v87, 0
  %v141 = vsel %vm112, %v88, 0
  %v144 = vsel %vm112, %v89, 0
  %v147 = vsel %vm112, %v90, 0
  %v150 = vsel %vm112, %v91, 0
  %v153 = vsel %vm112, %v92, 0
  %v156 = vsel %vm112, %v93, 0
  %v159 = vsel %vm112, %v94, 0
  %v162 = vsel %vm112, %v95, 0
  %v165 = vsel %vm112, %v96, 0
  %v168 = vsel %vm112, %v97, 0
  %v171 = vsel %vm112, %v98, 0
  %v174 = vsel %vm112, %v99, 0
  %v177 = vsel %vm112, %v100, 0
  %v180 = vsel %vm112, %v101, 0
  %v183 = vsel %vm112, %v102, 0
  %v186 = vsel %vm112, %v103, 0
  %v189 = vsel %vm112, %v104, 0
  %v192 = vsel %vm112, %v105, 0
  %v195 = vsel %vm112, %v106, 0
  %v198 = vsel %vm112, %v107, 0
  %v201 = vsel %vm112, %v108, 0
  %v204 = vsel %vm112, %v109, 0
  %v207 = vsel %vm112, %v110, 0
  %vm209 = vcmask 1043456
  %v211 = vsel %vm209, %v111, 0
  %213 = vmatpush.bf16.msra.mxu0 0
  %214 = vmatpush.bf16.msra.mxu0 0
  %215 = vmatpush.bf16.msra.mxu0 0
  %216 = vmatpush.bf16.msra.mxu0 0
  %217 = vmatpush.bf16.msra.mxu0 0
  %218 = vmatpush.bf16.msra.mxu0 0
  %219 = vmatpush.bf16.msra.mxu0 0
  %220 = vmatpush.bf16.msra.mxu0 %v211
  %221 = vmatmul.bf16.gmra.mxu0 %v114
  %v222 = vpop.f32.mrf.mxu0
  %v223 = vadd.f32 0.0, %v222
  %v224 = vpop.f32.mrf.mxu0
  %v225 = vadd.f32 0.0, %v224
  %226 = vmatmul.bf16.gmra.mxu0 %v117
  %v227 = vpop.f32.mrf.mxu0
  %v228 = vadd.f32 0.0, %v227
  %v229 = vpop.f32.mrf.mxu0
  %v230 = vadd.f32 0.0, %v229
  %231 = vmatmul.bf16.gmra.mxu0 %v120
  %v232 = vpop.f32.mrf.mxu0
  %v233 = vadd.f32 0.0, %v232
  %v234 = vpop.f32.mrf.mxu0
  %v235 = vadd.f32 0.0, %v234
  %236 = vmatmul.bf16.gmra.mxu0 %v123
  %v237 = vpop.f32.mrf.mxu0
  %v238 = vadd.f32 0.0, %v237
  %v239 = vpop.f32.mrf.mxu0
  %v240 = vadd.f32 0.0, %v239
  %241 = vmatmul.bf16.gmra.mxu0 %v126
  %v242 = vpop.f32.mrf.mxu0
  %v243 = vadd.f32 0.0, %v242
  %v244 = vpop.f32.mrf.mxu0
  %v245 = vadd.f32 0.0, %v244
  %246 = vmatmul.bf16.gmra.mxu0 %v129
  %v247 = vpop.f32.mrf.mxu0
  %v248 = vadd.f32 0.0, %v247
  %v249 = vpop.f32.mrf.mxu0
  %v250 = vadd.f32 0.0, %v249
  %251 = vmatmul.bf16.gmra.mxu0 %v132
  %v252 = vpop.f32.mrf.mxu0
  %v253 = vadd.f32 0.0, %v252
  %v254 = vpop.f32.mrf.mxu0
  %v255 = vadd.f32 0.0, %v254
  %256 = vmatmul.bf16.gmra.mxu0 %v135
  %v257 = vpop.f32.mrf.mxu0
  %v258 = vadd.f32 0.0, %v257
  %v259 = vpop.f32.mrf.mxu0
  %v260 = vadd.f32 0.0, %v259
  %261 = vmatmul.bf16.gmra.mxu0 %v138
  %v262 = vpop.f32.mrf.mxu0
  %v263 = vadd.f32 0.0, %v262
  %v264 = vpop.f32.mrf.mxu0
  %v265 = vadd.f32 0.0, %v264
  %266 = vmatmul.bf16.gmra.mxu0 %v141
  %v267 = vpop.f32.mrf.mxu0
  %v268 = vadd.f32 0.0, %v267
  %v269 = vpop.f32.mrf.mxu0
  %v270 = vadd.f32 0.0, %v269
  %271 = vmatmul.bf16.gmra.mxu0 %v144
  %v272 = vpop.f32.mrf.mxu0
  %v273 = vadd.f32 0.0, %v272
  %v274 = vpop.f32.mrf.mxu0
  %v275 = vadd.f32 0.0, %v274
  %276 = vmatmul.bf16.gmra.mxu0 %v147
  %v277 = vpop.f32.mrf.mxu0
  %v278 = vadd.f32 0.0, %v277
  %v279 = vpop.f32.mrf.mxu0
  %v280 = vadd.f32 0.0, %v279
  %281 = vmatmul.bf16.gmra.mxu0 %v150
  %v282 = vpop.f32.mrf.mxu0
  %v283 = vadd.f32 0.0, %v282
  %v284 = vpop.f32.mrf.mxu0
  %v285 = vadd.f32 0.0, %v284
  %286 = vmatmul.bf16.gmra.mxu0 %v153
  %v287 = vpop.f32.mrf.mxu0
  %v288 = vadd.f32 0.0, %v287
  %v289 = vpop.f32.mrf.mxu0
  %v290 = vadd.f32 0.0, %v289
  %291 = vmatmul.bf16.gmra.mxu0 %v156
  %v292 = vpop.f32.mrf.mxu0
  %v293 = vadd.f32 0.0, %v292
  %v294 = vpop.f32.mrf.mxu0
  %v295 = vadd.f32 0.0, %v294
  %296 = vmatmul.bf16.gmra.mxu0 %v159
  %v297 = vpop.f32.mrf.mxu0
  %v298 = vadd.f32 0.0, %v297
  %v299 = vpop.f32.mrf.mxu0
  %v300 = vadd.f32 0.0, %v299
  %301 = vmatmul.bf16.gmra.mxu0 %v162
  %v302 = vpop.f32.mrf.mxu0
  %v303 = vadd.f32 0.0, %v302
  %v304 = vpop.f32.mrf.mxu0
  %v305 = vadd.f32 0.0, %v304
  %306 = vmatmul.bf16.gmra.mxu0 %v165
  %v307 = vpop.f32.mrf.mxu0
  %v308 = vadd.f32 0.0, %v307
  %v309 = vpop.f32.mrf.mxu0
  %v310 = vadd.f32 0.0, %v309
  %311 = vmatmul.bf16.gmra.mxu0 %v168
  %v312 = vpop.f32.mrf.mxu0
  %v313 = vadd.f32 0.0, %v312
  %v314 = vpop.f32.mrf.mxu0
  %v315 = vadd.f32 0.0, %v314
  %316 = vmatmul.bf16.gmra.mxu0 %v171
  %v317 = vpop.f32.mrf.mxu0
  %v318 = vadd.f32 0.0, %v317
  %v319 = vpop.f32.mrf.mxu0
  %v320 = vadd.f32 0.0, %v319
  %321 = vmatmul.bf16.gmra.mxu0 %v174
  %v322 = vpop.f32.mrf.mxu0
  %v323 = vadd.f32 0.0, %v322
  %v324 = vpop.f32.mrf.mxu0
  %v325 = vadd.f32 0.0, %v324
  %326 = vmatmul.bf16.gmra.mxu0 %v177
  %v327 = vpop.f32.mrf.mxu0
  %v328 = vadd.f32 0.0, %v327
  %v329 = vpop.f32.mrf.mxu0
  %v330 = vadd.f32 0.0, %v329
  %331 = vmatmul.bf16.gmra.mxu0 %v180
  %v332 = vpop.f32.mrf.mxu0
  %v333 = vadd.f32 0.0, %v332
  %v334 = vpop.f32.mrf.mxu0
  %v335 = vadd.f32 0.0, %v334
  %336 = vmatmul.bf16.gmra.mxu0 %v183
  %v337 = vpop.f32.mrf.mxu0
  %v338 = vadd.f32 0.0, %v337
  %v339 = vpop.f32.mrf.mxu0
  %v340 = vadd.f32 0.0, %v339
  %341 = vmatmul.bf16.gmra.mxu0 %v186
  %v342 = vpop.f32.mrf.mxu0
  %v343 = vadd.f32 0.0, %v342
  %v344 = vpop.f32.mrf.mxu0
  %v345 = vadd.f32 0.0, %v344
  %346 = vmatmul.bf16.gmra.mxu0 %v189
  %v347 = vpop.f32.mrf.mxu0
  %v348 = vadd.f32 0.0, %v347
  %v349 = vpop.f32.mrf.mxu0
  %v350 = vadd.f32 0.0, %v349
  %351 = vmatmul.bf16.gmra.mxu0 %v192
  %v352 = vpop.f32.mrf.mxu0
  %v353 = vadd.f32 0.0, %v352
  %v354 = vpop.f32.mrf.mxu0
  %v355 = vadd.f32 0.0, %v354
  %356 = vmatmul.bf16.gmra.mxu0 %v195
  %v357 = vpop.f32.mrf.mxu0
  %v358 = vadd.f32 0.0, %v357
  %v359 = vpop.f32.mrf.mxu0
  %v360 = vadd.f32 0.0, %v359
  %361 = vmatmul.bf16.gmra.mxu0 %v198
  %v362 = vpop.f32.mrf.mxu0
  %v363 = vadd.f32 0.0, %v362
  %v364 = vpop.f32.mrf.mxu0
  %v365 = vadd.f32 0.0, %v364
  %366 = vmatmul.bf16.gmra.mxu0 %v201
  %v367 = vpop.f32.mrf.mxu0
  %v368 = vadd.f32 0.0, %v367
  %v369 = vpop.f32.mrf.mxu0
  %v370 = vadd.f32 0.0, %v369
  %371 = vmatmul.bf16.gmra.mxu0 %v204
  %v372 = vpop.f32.mrf.mxu0
  %v373 = vadd.f32 0.0, %v372
  %v374 = vpop.f32.mrf.mxu0
  %v375 = vadd.f32 0.0, %v374
  %376 = vmatmul.bf16.gmra.mxu0 %v207
  %v377 = vpop.f32.mrf.mxu0
  %v378 = vadd.f32 0.0, %v377
  %v379 = vpop.f32.mrf.mxu0
  %v380 = vadd.f32 0.0, %v379
  %381 = vdwg.mxu0
  %v382 = vpack.c.bf16 %v223, %v223
  %v383 = vpack.c.bf16 %v225, %v225
  %v384 = vpack.c.bf16 %v228, %v228
  %v385 = vpack.c.bf16 %v230, %v230
  %v386 = vpack.c.bf16 %v233, %v233
  %v387 = vpack.c.bf16 %v235, %v235
  %v388 = vpack.c.bf16 %v238, %v238
  %v389 = vpack.c.bf16 %v240, %v240
  %v390 = vpack.c.bf16 %v243, %v243
  %v391 = vpack.c.bf16 %v245, %v245
  %v392 = vpack.c.bf16 %v248, %v248
  %v393 = vpack.c.bf16 %v250, %v250
  %v394 = vpack.c.bf16 %v253, %v253
  %v395 = vpack.c.bf16 %v255, %v255
  %v396 = vpack.c.bf16 %v258, %v258
  %v397 = vpack.c.bf16 %v260, %v260
  %v398 = vpack.c.bf16 %v263, %v263
  %v399 = vpack.c.bf16 %v265, %v265
  %v400 = vpack.c.bf16 %v268, %v268
  %v401 = vpack.c.bf16 %v270, %v270
  %v402 = vpack.c.bf16 %v273, %v273
  %v403 = vpack.c.bf16 %v275, %v275
  %v404 = vpack.c.bf16 %v278, %v278
  %v405 = vpack.c.bf16 %v280, %v280
  %v406 = vpack.c.bf16 %v283, %v283
  %v407 = vpack.c.bf16 %v285, %v285
  %v408 = vpack.c.bf16 %v288, %v288
  %v409 = vpack.c.bf16 %v290, %v290
  %v410 = vpack.c.bf16 %v293, %v293
  %v411 = vpack.c.bf16 %v295, %v295
  %v412 = vpack.c.bf16 %v298, %v298
  %v413 = vpack.c.bf16 %v300, %v300
  %v414 = vpack.c.bf16 %v303, %v303
  %v415 = vpack.c.bf16 %v305, %v305
  %v416 = vpack.c.bf16 %v308, %v308
  %v417 = vpack.c.bf16 %v310, %v310
  %v418 = vpack.c.bf16 %v313, %v313
  %v419 = vpack.c.bf16 %v315, %v315
  %v420 = vpack.c.bf16 %v318, %v318
  %v421 = vpack.c.bf16 %v320, %v320
  %v422 = vpack.c.bf16 %v323, %v323
  %v423 = vpack.c.bf16 %v325, %v325
  %v424 = vpack.c.bf16 %v328, %v328
  %v425 = vpack.c.bf16 %v330, %v330
  %v426 = vpack.c.bf16 %v333, %v333
  %v427 = vpack.c.bf16 %v335, %v335
  %v428 = vpack.c.bf16 %v338, %v338
  %v429 = vpack.c.bf16 %v340, %v340
  %v430 = vpack.c.bf16 %v343, %v343
  %v431 = vpack.c.bf16 %v345, %v345
  %v432 = vpack.c.bf16 %v348, %v348
  %v433 = vpack.c.bf16 %v350, %v350
  %v434 = vpack.c.bf16 %v353, %v353
  %v435 = vpack.c.bf16 %v355, %v355
  %v436 = vpack.c.bf16 %v358, %v358
  %v437 = vpack.c.bf16 %v360, %v360
  %v438 = vpack.c.bf16 %v363, %v363
  %v439 = vpack.c.bf16 %v365, %v365
  %v440 = vpack.c.bf16 %v368, %v368
  %v441 = vpack.c.bf16 %v370, %v370
  %v442 = vpack.c.bf16 %v373, %v373
  %v443 = vpack.c.bf16 %v375, %v375
  %v444 = vpack.c.bf16 %v378, %v378
  %v445 = vpack.c.bf16 %v380, %v380
  %446 = vst [vmem:[%s2] sm:$0xf] %v382
  %447 = vst [vmem:[%s2 + $0x4] sm:$0xf] %v383
  %448 = vst [vmem:[%s2 + $0x8] sm:$0xf] %v384
  %449 = vst [vmem:[%s2 + $0xc] sm:$0xf] %v385
  %450 = vst [vmem:[%s2 + $0x10] sm:$0xf] %v386
  %451 = vst [vmem:[%s2 + $0x14] sm:$0xf] %v387
  %452 = vst [vmem:[%s2 + $0x18] sm:$0xf] %v388
  %453 = vst [vmem:[%s2 + $0x1c] sm:$0xf] %v389
  %454 = vst [vmem:[%s2 + $0x20] sm:$0xf] %v390
  %455 = vst [vmem:[%s2 + $0x24] sm:$0xf] %v391
  %456 = vst [vmem:[%s2 + $0x28] sm:$0xf] %v392
  %457 = vst [vmem:[%s2 + $0x2c] sm:$0xf] %v393
  %458 = vst [vmem:[%s2 + $0x30] sm:$0xf] %v394
  %459 = vst [vmem:[%s2 + $0x34] sm:$0xf] %v395
  %460 = vst [vmem:[%s2 + $0x38] sm:$0xf] %v396
  %461 = vst [vmem:[%s2 + $0x3c] sm:$0xf] %v397
  %462 = vst [vmem:[%s2 + $0x40] sm:$0xf] %v398
  %463 = vst [vmem:[%s2 + $0x44] sm:$0xf] %v399
  %464 = vst [vmem:[%s2 + $0x48] sm:$0xf] %v400
  %465 = vst [vmem:[%s2 + $0x4c] sm:$0xf] %v401
  %466 = vst [vmem:[%s2 + $0x50] sm:$0xf] %v402
  %467 = vst [vmem:[%s2 + $0x54] sm:$0xf] %v403
  %468 = vst [vmem:[%s2 + $0x58] sm:$0xf] %v404
  %469 = vst [vmem:[%s2 + $0x5c] sm:$0xf] %v405
  %470 = vst [vmem:[%s2 + $0x60] sm:$0xf] %v406
  %471 = vst [vmem:[%s2 + $0x64] sm:$0xf] %v407
  %472 = vst [vmem:[%s2 + $0x68] sm:$0xf] %v408
  %473 = vst [vmem:[%s2 + $0x6c] sm:$0xf] %v409
  %474 = vst [vmem:[%s2 + $0x70] sm:$0xf] %v410
  %475 = vst [vmem:[%s2 + $0x74] sm:$0xf] %v411
  %476 = vst [vmem:[%s2 + $0x78] sm:$0xf] %v412
  %477 = vst [vmem:[%s2 + $0x7c] sm:$0xf] %v413
  %478 = vst [vmem:[%s2 + $0x80] sm:$0xf] %v414
  %479 = vst [vmem:[%s2 + $0x84] sm:$0xf] %v415
  %480 = vst [vmem:[%s2 + $0x88] sm:$0xf] %v416
  %481 = vst [vmem:[%s2 + $0x8c] sm:$0xf] %v417
  %482 = vst [vmem:[%s2 + $0x90] sm:$0xf] %v418
  %483 = vst [vmem:[%s2 + $0x94] sm:$0xf] %v419
  %484 = vst [vmem:[%s2 + $0x98] sm:$0xf] %v420
  %485 = vst [vmem:[%s2 + $0x9c] sm:$0xf] %v421
  %486 = vst [vmem:[%s2 + $0xa0] sm:$0xf] %v422
  %487 = vst [vmem:[%s2 + $0xa4] sm:$0xf] %v423
  %488 = vst [vmem:[%s2 + $0xa8] sm:$0xf] %v424
  %489 = vst [vmem:[%s2 + $0xac] sm:$0xf] %v425
  %490 = vst [vmem:[%s2 + $0xb0] sm:$0xf] %v426
  %491 = vst [vmem:[%s2 + $0xb4] sm:$0xf] %v427
  %492 = vst [vmem:[%s2 + $0xb8] sm:$0xf] %v428
  %493 = vst [vmem:[%s2 + $0xbc] sm:$0xf] %v429
  %494 = vst [vmem:[%s2 + $0xc0] sm:$0xf] %v430
  %495 = vst [vmem:[%s2 + $0xc4] sm:$0xf] %v431
  %496 = vst [vmem:[%s2 + $0xc8] sm:$0xf] %v432
  %497 = vst [vmem:[%s2 + $0xcc] sm:$0xf] %v433
  %498 = vst [vmem:[%s2 + $0xd0] sm:$0xf] %v434
  %499 = vst [vmem:[%s2 + $0xd4] sm:$0xf] %v435
  %500 = vst [vmem:[%s2 + $0xd8] sm:$0xf] %v436
  %501 = vst [vmem:[%s2 + $0xdc] sm:$0xf] %v437
  %502 = vst [vmem:[%s2 + $0xe0] sm:$0xf] %v438
  %503 = vst [vmem:[%s2 + $0xe4] sm:$0xf] %v439
  %504 = vst [vmem:[%s2 + $0xe8] sm:$0xf] %v440
  %505 = vst [vmem:[%s2 + $0xec] sm:$0xf] %v441
  %506 = vst [vmem:[%s2 + $0xf0] sm:$0xf] %v442
  %507 = vst [vmem:[%s2 + $0xf4] sm:$0xf] %v443
  %508 = vst [vmem:[%s2 + $0xf8] sm:$0xf] %v444
  %509 = vst [vmem:[%s2 + $0xfc] sm:$0xf] %v445
  %v510 = vunpack.c.l.bf16 %v382
  %v511 = vunpack.c.l.bf16 %v383
  %v512 = vunpack.c.l.bf16 %v384
  %v513 = vunpack.c.l.bf16 %v385
  %v514 = vunpack.c.l.bf16 %v386
  %v515 = vunpack.c.l.bf16 %v387
  %v516 = vunpack.c.l.bf16 %v388
  %v517 = vunpack.c.l.bf16 %v389
  %v518 = vunpack.c.l.bf16 %v390
  %v519 = vunpack.c.l.bf16 %v391
  %v520 = vunpack.c.l.bf16 %v392
  %v521 = vunpack.c.l.bf16 %v393
  %v522 = vunpack.c.l.bf16 %v394
  %v523 = vunpack.c.l.bf16 %v395
  %v524 = vunpack.c.l.bf16 %v396
  %v525 = vunpack.c.l.bf16 %v397
  %v526 = vunpack.c.l.bf16 %v398
  %v527 = vunpack.c.l.bf16 %v399
  %v528 = vunpack.c.l.bf16 %v400
  %v529 = vunpack.c.l.bf16 %v401
  %v530 = vunpack.c.l.bf16 %v402
  %v531 = vunpack.c.l.bf16 %v403
  %v532 = vunpack.c.l.bf16 %v404
  %v533 = vunpack.c.l.bf16 %v405
  %v534 = vunpack.c.l.bf16 %v406
  %v535 = vunpack.c.l.bf16 %v407
  %v536 = vunpack.c.l.bf16 %v408
  %v537 = vunpack.c.l.bf16 %v409
  %v538 = vunpack.c.l.bf16 %v410
  %v539 = vunpack.c.l.bf16 %v411
  %v540 = vunpack.c.l.bf16 %v412
  %v541 = vunpack.c.l.bf16 %v413
  %v542 = vunpack.c.l.bf16 %v414
  %v543 = vunpack.c.l.bf16 %v415
  %v544 = vunpack.c.l.bf16 %v416
  %v545 = vunpack.c.l.bf16 %v417
  %v546 = vunpack.c.l.bf16 %v418
  %v547 = vunpack.c.l.bf16 %v419
  %v548 = vunpack.c.l.bf16 %v420
  %v549 = vunpack.c.l.bf16 %v421
  %v550 = vunpack.c.l.bf16 %v422
  %v551 = vunpack.c.l.bf16 %v423
  %v552 = vunpack.c.l.bf16 %v424
  %v553 = vunpack.c.l.bf16 %v425
  %v554 = vunpack.c.l.bf16 %v426
  %v555 = vunpack.c.l.bf16 %v427
  %v556 = vunpack.c.l.bf16 %v428
  %v557 = vunpack.c.l.bf16 %v429
  %v558 = vunpack.c.l.bf16 %v430
  %v559 = vunpack.c.l.bf16 %v431
  %v560 = vunpack.c.l.bf16 %v432
  %v561 = vunpack.c.l.bf16 %v433
  %v562 = vunpack.c.l.bf16 %v434
  %v563 = vunpack.c.l.bf16 %v435
  %v564 = vunpack.c.l.bf16 %v436
  %v565 = vunpack.c.l.bf16 %v437
  %v566 = vunpack.c.l.bf16 %v438
  %v567 = vunpack.c.l.bf16 %v439
  %v568 = vunpack.c.l.bf16 %v440
  %v569 = vunpack.c.l.bf16 %v441
  %v570 = vunpack.c.l.bf16 %v442
  %v571 = vunpack.c.l.bf16 %v443
  %v572 = vunpack.c.l.bf16 %v444
  %v573 = vunpack.c.l.bf16 %v445
  %v574 = vadd.f32 %v510, %v511
  %v575 = vadd.f32 %v574, %v512
  %v576 = vadd.f32 %v575, %v513
  %v577 = vadd.f32 %v576, %v514
  %v578 = vadd.f32 %v577, %v515
  %v579 = vadd.f32 %v578, %v516
  %v580 = vadd.f32 %v579, %v517
  %v581 = vadd.f32 %v580, %v518
  %v582 = vadd.f32 %v581, %v519
  %v583 = vadd.f32 %v582, %v520
  %v584 = vadd.f32 %v583, %v521
  %v585 = vadd.f32 %v584, %v522
  %v586 = vadd.f32 %v585, %v523
  %v587 = vadd.f32 %v586, %v524
  %v588 = vadd.f32 %v587, %v525
  %v589 = vadd.f32 %v588, %v526
  %v590 = vadd.f32 %v589, %v527
  %v591 = vadd.f32 %v590, %v528
  %v592 = vadd.f32 %v591, %v529
  %v593 = vadd.f32 %v592, %v530
  %v594 = vadd.f32 %v593, %v531
  %v595 = vadd.f32 %v594, %v532
  %v596 = vadd.f32 %v595, %v533
  %v597 = vadd.f32 %v596, %v534
  %v598 = vadd.f32 %v597, %v535
  %v599 = vadd.f32 %v598, %v536
  %v600 = vadd.f32 %v599, %v537
  %v601 = vadd.f32 %v600, %v538
  %v602 = vadd.f32 %v601, %v539
  %v603 = vadd.f32 %v602, %v540
  %v604 = vadd.f32 %v603, %v541
  %v605 = vadd.f32 %v604, %v542
  %v606 = vadd.f32 %v605, %v543
  %v607 = vadd.f32 %v606, %v544
  %v608 = vadd.f32 %v607, %v545
  %v609 = vadd.f32 %v608, %v546
  %v610 = vadd.f32 %v609, %v547
  %v611 = vadd.f32 %v610, %v548
  %v612 = vadd.f32 %v611, %v549
  %v613 = vadd.f32 %v612, %v550
  %v614 = vadd.f32 %v613, %v551
  %v615 = vadd.f32 %v614, %v552
  %v616 = vadd.f32 %v615, %v553
  %v617 = vadd.f32 %v616, %v554
  %v618 = vadd.f32 %v617, %v555
  %v619 = vadd.f32 %v618, %v556
  %v620 = vadd.f32 %v619, %v557
  %v621 = vadd.f32 %v620, %v558
  %v622 = vadd.f32 %v621, %v559
  %v623 = vadd.f32 %v622, %v560
  %v624 = vadd.f32 %v623, %v561
  %v625 = vadd.f32 %v624, %v562
  %v626 = vadd.f32 %v625, %v563
  %v627 = vadd.f32 %v626, %v564
  %v628 = vadd.f32 %v627, %v565
  %v629 = vadd.f32 %v628, %v566
  %v630 = vadd.f32 %v629, %v567
  %v631 = vadd.f32 %v630, %v568
  %v632 = vadd.f32 %v631, %v569
  %v633 = vadd.f32 %v632, %v570
  %v634 = vadd.f32 %v633, %v571
  %v635 = vadd.f32 %v634, %v572
  %v636 = vadd.f32 %v635, %v573
  %v637 = vrot.slane %v636, 4
  %v638 = vadd.f32 %v636, %v637
  %v639 = vrot.slane %v638, 2
  %v640 = vadd.f32 %v638, %v639
  %v641 = vrot.slane %v640, 1
  %v642 = vadd.f32 %v640, %v641
  %643 = vst [vmem:[%s3] sm:$0x1] %v642
  %v644 = vmul.f32 %v510, %v510
  %v645 = vmul.f32 %v511, %v511
  %v646 = vmul.f32 %v512, %v512
  %v647 = vmul.f32 %v513, %v513
  %v648 = vmul.f32 %v514, %v514
  %v649 = vmul.f32 %v515, %v515
  %v650 = vmul.f32 %v516, %v516
  %v651 = vmul.f32 %v517, %v517
  %v652 = vmul.f32 %v518, %v518
  %v653 = vmul.f32 %v519, %v519
  %v654 = vmul.f32 %v520, %v520
  %v655 = vmul.f32 %v521, %v521
  %v656 = vmul.f32 %v522, %v522
  %v657 = vmul.f32 %v523, %v523
  %v658 = vmul.f32 %v524, %v524
  %v659 = vmul.f32 %v525, %v525
  %v660 = vmul.f32 %v526, %v526
  %v661 = vmul.f32 %v527, %v527
  %v662 = vmul.f32 %v528, %v528
  %v663 = vmul.f32 %v529, %v529
  %v664 = vmul.f32 %v530, %v530
  %v665 = vmul.f32 %v531, %v531
  %v666 = vmul.f32 %v532, %v532
  %v667 = vmul.f32 %v533, %v533
  %v668 = vmul.f32 %v534, %v534
  %v669 = vmul.f32 %v535, %v535
  %v670 = vmul.f32 %v536, %v536
  %v671 = vmul.f32 %v537, %v537
  %v672 = vmul.f32 %v538, %v538
  %v673 = vmul.f32 %v539, %v539
  %v674 = vmul.f32 %v540, %v540
  %v675 = vmul.f32 %v541, %v541
  %v676 = vmul.f32 %v542, %v542
  %v677 = vmul.f32 %v543, %v543
  %v678 = vmul.f32 %v544, %v544
  %v679 = vmul.f32 %v545, %v545
  %v680 = vmul.f32 %v546, %v546
  %v681 = vmul.f32 %v547, %v547
  %v682 = vmul.f32 %v548, %v548
  %v683 = vmul.f32 %v549, %v549
  %v684 = vmul.f32 %v550, %v550
  %v685 = vmul.f32 %v551, %v551
  %v686 = vmul.f32 %v552, %v552
  %v687 = vmul.f32 %v553, %v553
  %v688 = vmul.f32 %v554, %v554
  %v689 = vmul.f32 %v555, %v555
  %v690 = vmul.f32 %v556, %v556
  %v691 = vmul.f32 %v557, %v557
  %v692 = vmul.f32 %v558, %v558
  %v693 = vmul.f32 %v559, %v559
  %v694 = vmul.f32 %v560, %v560
  %v695 = vmul.f32 %v561, %v561
  %v696 = vmul.f32 %v562, %v562
  %v697 = vmul.f32 %v563, %v563
  %v698 = vmul.f32 %v564, %v564
  %v699 = vmul.f32 %v565, %v565
  %v700 = vmul.f32 %v566, %v566
  %v701 = vmul.f32 %v567, %v567
  %v702 = vmul.f32 %v568, %v568
  %v703 = vmul.f32 %v569, %v569
  %v704 = vmul.f32 %v570, %v570
  %v705 = vmul.f32 %v571, %v571
  %v706 = vmul.f32 %v572, %v572
  %v707 = vmul.f32 %v573, %v573
  %v708 = vadd.f32 %v644, %v645
  %v709 = vadd.f32 %v708, %v646
  %v710 = vadd.f32 %v709, %v647
  %v711 = vadd.f32 %v710, %v648
  %v712 = vadd.f32 %v711, %v649
  %v713 = vadd.f32 %v712, %v650
  %v714 = vadd.f32 %v713, %v651
  %v715 = vadd.f32 %v714, %v652
  %v716 = vadd.f32 %v715, %v653
  %v717 = vadd.f32 %v716, %v654
  %v718 = vadd.f32 %v717, %v655
  %v719 = vadd.f32 %v718, %v656
  %v720 = vadd.f32 %v719, %v657
  %v721 = vadd.f32 %v720, %v658
  %v722 = vadd.f32 %v721, %v659
  %v723 = vadd.f32 %v722, %v660
  %v724 = vadd.f32 %v723, %v661
  %v725 = vadd.f32 %v724, %v662
  %v726 = vadd.f32 %v725, %v663
  %v727 = vadd.f32 %v726, %v664
  %v728 = vadd.f32 %v727, %v665
  %v729 = vadd.f32 %v728, %v666
  %v730 = vadd.f32 %v729, %v667
  %v731 = vadd.f32 %v730, %v668
  %v732 = vadd.f32 %v731, %v669
  %v733 = vadd.f32 %v732, %v670
  %v734 = vadd.f32 %v733, %v671
  %v735 = vadd.f32 %v734, %v672
  %v736 = vadd.f32 %v735, %v673
  %v737 = vadd.f32 %v736, %v674
  %v738 = vadd.f32 %v737, %v675
  %v739 = vadd.f32 %v738, %v676
  %v740 = vadd.f32 %v739, %v677
  %v741 = vadd.f32 %v740, %v678
  %v742 = vadd.f32 %v741, %v679
  %v743 = vadd.f32 %v742, %v680
  %v744 = vadd.f32 %v743, %v681
  %v745 = vadd.f32 %v744, %v682
  %v746 = vadd.f32 %v745, %v683
  %v747 = vadd.f32 %v746, %v684
  %v748 = vadd.f32 %v747, %v685
  %v749 = vadd.f32 %v748, %v686
  %v750 = vadd.f32 %v749, %v687
  %v751 = vadd.f32 %v750, %v688
  %v752 = vadd.f32 %v751, %v689
  %v753 = vadd.f32 %v752, %v690
  %v754 = vadd.f32 %v753, %v691
  %v755 = vadd.f32 %v754, %v692
  %v756 = vadd.f32 %v755, %v693
  %v757 = vadd.f32 %v756, %v694
  %v758 = vadd.f32 %v757, %v695
  %v759 = vadd.f32 %v758, %v696
  %v760 = vadd.f32 %v759, %v697
  %v761 = vadd.f32 %v760, %v698
  %v762 = vadd.f32 %v761, %v699
  %v763 = vadd.f32 %v762, %v700
  %v764 = vadd.f32 %v763, %v701
  %v765 = vadd.f32 %v764, %v702
  %v766 = vadd.f32 %v765, %v703
  %v767 = vadd.f32 %v766, %v704
  %v768 = vadd.f32 %v767, %v705
  %v769 = vadd.f32 %v768, %v706
  %v770 = vadd.f32 %v769, %v707
  %v771 = vrot.slane %v770, 4
  %v772 = vadd.f32 %v770, %v771
  %v773 = vrot.slane %v772, 2
  %v774 = vadd.f32 %v772, %v773
  %v775 = vrot.slane %v774, 1
  %v776 = vadd.f32 %v774, %v775
  %777 = vst [vmem:[%s4] sm:$0x1] %v776
  // Predicated region
  $region10: #{block_forward.4} parent=0 // pred_check
    _
  $region11: #{block_forward.4} parent=0 // pred_check_branch
    %779 = sbr.rel (0) target = $region13
  $region12: #{block_forward.4} parent=0 // pred_region
    _
  $region13: #{block_forward.4} parent=0 // pred_fallthru
    _
  // Predicated region
  $region14: #{block_forward.4} parent=0 // pred_check
    _
  $region15: #{block_forward.4} parent=0 // pred_check_branch
    %781 = sbr.rel (0) target = $region17
  $region16: #{block_forward.4} parent=0 // pred_region
    _
  $region17: #{block_forward.4} parent=0 // pred_fallthru
    _
  // Predicated region
  $region18: #{block_forward.4} parent=0 // pred_check
    _
  $region19: #{block_forward.4} parent=0 // pred_check_branch
    %783 = sbr.rel (0) target = $region21
  $region20: #{block_forward.4} parent=0 // pred_region
    _
  $region21: #{block_forward.4} parent=0 // pred_fallthru
    _
  // Predicated region
  $region22: #{block_forward.4} parent=0 // pred_check
    _
  $region23: #{block_forward.4} parent=0 // pred_check_branch
    %785 = sbr.rel (0) target = $region25
  $region24: #{block_forward.4} parent=0 // pred_region
    _
  $region25: #{block_forward.4} parent=0 // pred_fallthru
    _
  // Predicated region
  $region26: #{block_forward.4} parent=0 // pred_check
    _
  $region27: #{block_forward.4} parent=0 // pred_check_branch
    %787 = sbr.rel (0) target = $region29
  $region28: #{block_forward.4} parent=0 // pred_region
    _
  $region29: #{block_forward.4} parent=0 // pred_fallthru
    _
  // Predicated region
  $region30: #{block_forward.4} parent=0 // pred_check
    _
  $region31: #{block_forward.4} parent=0 // pred_check_branch
    %789 = sbr.rel (0) target = $region33
  $region32: #{block_forward.4} parent=0 // pred_region
    _
  $region33: #{block_forward.4} parent=0 // pred_fallthru
    _

// kernel: block_forward.7
$region0: #{block_forward.7}
  #allocation0 [shape = 'u32[]', space=smem, size = 0x4, offset = 0x4, fixed_abs, tag = 'smem constant byte address 0x4 - core index']
  #allocation1 [shape = 'u32[72,128]{1,0:T(1,128)}', space=vmem, size = 0x9000, scoped, tag = 'internal scratch']
  %s0 = inlined_call_operand.vmem [shape: bf16[512,128], index: 0, kind: input, shape index: {}, may-alias: {0,6}]
  %s1 = inlined_call_operand.vmem [shape: f32[1,128], index: 1, kind: input, shape index: {}]
  %s2 = inlined_call_operand.vmem [shape: f32[1,128], index: 2, kind: input, shape index: {}]
  %s3 = inlined_call_operand.vmem [shape: f32[1,128], index: 3, kind: input, shape index: {}]
  %s4 = inlined_call_operand.vmem [shape: f32[1,128], index: 4, kind: input, shape index: {}]
  %s5 = inlined_call_operand.vmem [shape: f32[512,128], index: 5, kind: input, shape index: {}]
  %s6 = inlined_call_operand.vmem [shape: bf16[512,128], index: 6, kind: output, shape index: {}, may-alias: {0,6}]
  %s7 = sld [smem:[#allocation0]]
  $region34: #{block_forward.7} parent=0
    _
  %s9 = ssub.s32 1, %s7
  %s10 = scalar_select 0, %s9, %s7
  // Predicated region
  $region2: #{block_forward.7} parent=0 // pred_check
    _
  $region3: #{block_forward.7} parent=0 // pred_check_branch
    %12 = sbr.rel (0) target = $region5
  $region4: #{block_forward.7} parent=0 // pred_region
    _
  $region5: #{block_forward.7} parent=0 // pred_fallthru
    _
  // Predicated region
  $region6: #{block_forward.7} parent=0 // pred_check
    _
  $region7: #{block_forward.7} parent=0 // pred_check_branch
    %14 = sbr.rel (0) target = $region9
  $region8: #{block_forward.7} parent=0 // pred_region
    _
  $region9: #{block_forward.7} parent=0 // pred_fallthru
    _
  // Predicated region
  $region10: #{block_forward.7} parent=0 // pred_check
    _
  $region11: #{block_forward.7} parent=0 // pred_check_branch
    %16 = sbr.rel (0) target = $region13
  $region12: #{block_forward.7} parent=0 // pred_region
    _
  $region13: #{block_forward.7} parent=0 // pred_fallthru
    _
  // Predicated region
  $region14: #{block_forward.7} parent=0 // pred_check
    _
  $region15: #{block_forward.7} parent=0 // pred_check_branch
    %18 = sbr.rel (0) target = $region17
  $region16: #{block_forward.7} parent=0 // pred_region
    _
  $region17: #{block_forward.7} parent=0 // pred_fallthru
    _
  // Predicated region
  $region18: #{block_forward.7} parent=0 // pred_check
    _
  $region19: #{block_forward.7} parent=0 // pred_check_branch
    %20 = sbr.rel (0) target = $region21
  $region20: #{block_forward.7} parent=0 // pred_region
    _
  $region21: #{block_forward.7} parent=0 // pred_fallthru
    _
  // Predicated region
  $region22: #{block_forward.7} parent=0 // pred_check
    _
  $region23: #{block_forward.7} parent=0 // pred_check_branch
    %22 = sbr.rel (0) target = $region25
  $region24: #{block_forward.7} parent=0 // pred_region
    _
  $region25: #{block_forward.7} parent=0 // pred_fallthru
    _
  %v23 = vld [vmem:[%s1] sm:$0x1]
  %v24 = vmul.f32 %v23, 0.001953125
  %v25 = vld [vmem:[%s2] sm:$0x1]
  %v26 = vmul.f32 %v25, 0.001953125
  %v27 = vmul.f32 %v24, %v24
  %v28 = vsub.f32 %v26, %v27
  %v29 = vmax.f32 %v28, 0.0
  %v30 = vadd.f32 %v29, 1e-05
  %v31 = vrsqrt.pop %v30
  %v32 = vmul.f32 %v31, %v30
  %v33 = vmul.f32 %v32, %v31
  %v34 = vmul.f32 0.5, %v33
  %v35 = vsub.f32 1.5, %v34
  %v36 = vmul.f32 %v31, %v35
  %vm37 = vweird.f32 %v30
  %vm38 = vweird.f32 %v31
  %vm39 = vmor %vm37, %vm38
  %v40 = vsel %vm39, %v31, %v36
  %v41 = vld [vmem:[%s3] sm:$0x1]
  %v42 = vmul.f32 %v41, %v40
  %v43 = vld [vmem:[%s4] sm:$0x1]
  %v44 = vmul.f32 %v24, %v42
  %v45 = vsub.f32 %v43, %v44
  %v46 = vld [vmem:[%s0] sm:$0xf]
  %v47 = vld [vmem:[%s0 + $0x4] sm:$0xf]
  %v48 = vld [vmem:[%s0 + $0x8] sm:$0xf]
  %v49 = vld [vmem:[%s0 + $0xc] sm:$0xf]
  %v50 = vld [vmem:[%s0 + $0x10] sm:$0xf]
  %v51 = vld [vmem:[%s0 + $0x14] sm:$0xf]
  %v52 = vld [vmem:[%s0 + $0x18] sm:$0xf]
  %v53 = vld [vmem:[%s0 + $0x1c] sm:$0xf]
  %v54 = vld [vmem:[%s0 + $0x20] sm:$0xf]
  %v55 = vld [vmem:[%s0 + $0x24] sm:$0xf]
  %v56 = vld [vmem:[%s0 + $0x28] sm:$0xf]
  %v57 = vld [vmem:[%s0 + $0x2c] sm:$0xf]
  %v58 = vld [vmem:[%s0 + $0x30] sm:$0xf]
  %v59 = vld [vmem:[%s0 + $0x34] sm:$0xf]
  %v60 = vld [vmem:[%s0 + $0x38] sm:$0xf]
  %v61 = vld [vmem:[%s0 + $0x3c] sm:$0xf]
  %v62 = vld [vmem:[%s0 + $0x40] sm:$0xf]
  %v63 = vld [vmem:[%s0 + $0x44] sm:$0xf]
  %v64 = vld [vmem:[%s0 + $0x48] sm:$0xf]
  %v65 = vld [vmem:[%s0 + $0x4c] sm:$0xf]
  %v66 = vld [vmem:[%s0 + $0x50] sm:$0xf]
  %v67 = vld [vmem:[%s0 + $0x54] sm:$0xf]
  %v68 = vld [vmem:[%s0 + $0x58] sm:$0xf]
  %v69 = vld [vmem:[%s0 + $0x5c] sm:$0xf]
  %v70 = vld [vmem:[%s0 + $0x60] sm:$0xf]
  %v71 = vld [vmem:[%s0 + $0x64] sm:$0xf]
  %v72 = vld [vmem:[%s0 + $0x68] sm:$0xf]
  %v73 = vld [vmem:[%s0 + $0x6c] sm:$0xf]
  %v74 = vld [vmem:[%s0 + $0x70] sm:$0xf]
  %v75 = vld [vmem:[%s0 + $0x74] sm:$0xf]
  %v76 = vld [vmem:[%s0 + $0x78] sm:$0xf]
  %v77 = vld [vmem:[%s0 + $0x7c] sm:$0xf]
  %v78 = vld [vmem:[%s0 + $0x80] sm:$0xf]
  %v79 = vld [vmem:[%s0 + $0x84] sm:$0xf]
  %v80 = vld [vmem:[%s0 + $0x88] sm:$0xf]
  %v81 = vld [vmem:[%s0 + $0x8c] sm:$0xf]
  %v82 = vld [vmem:[%s0 + $0x90] sm:$0xf]
  %v83 = vld [vmem:[%s0 + $0x94] sm:$0xf]
  %v84 = vld [vmem:[%s0 + $0x98] sm:$0xf]
  %v85 = vld [vmem:[%s0 + $0x9c] sm:$0xf]
  %v86 = vld [vmem:[%s0 + $0xa0] sm:$0xf]
  %v87 = vld [vmem:[%s0 + $0xa4] sm:$0xf]
  %v88 = vld [vmem:[%s0 + $0xa8] sm:$0xf]
  %v89 = vld [vmem:[%s0 + $0xac] sm:$0xf]
  %v90 = vld [vmem:[%s0 + $0xb0] sm:$0xf]
  %v91 = vld [vmem:[%s0 + $0xb4] sm:$0xf]
  %v92 = vld [vmem:[%s0 + $0xb8] sm:$0xf]
  %v93 = vld [vmem:[%s0 + $0xbc] sm:$0xf]
  %v94 = vld [vmem:[%s0 + $0xc0] sm:$0xf]
  %v95 = vld [vmem:[%s0 + $0xc4] sm:$0xf]
  %v96 = vld [vmem:[%s0 + $0xc8] sm:$0xf]
  %v97 = vld [vmem:[%s0 + $0xcc] sm:$0xf]
  %v98 = vld [vmem:[%s0 + $0xd0] sm:$0xf]
  %v99 = vld [vmem:[%s0 + $0xd4] sm:$0xf]
  %v100 = vld [vmem:[%s0 + $0xd8] sm:$0xf]
  %v101 = vld [vmem:[%s0 + $0xdc] sm:$0xf]
  %v102 = vld [vmem:[%s0 + $0xe0] sm:$0xf]
  %v103 = vld [vmem:[%s0 + $0xe4] sm:$0xf]
  %v104 = vld [vmem:[%s0 + $0xe8] sm:$0xf]
  %v105 = vld [vmem:[%s0 + $0xec] sm:$0xf]
  %v106 = vld [vmem:[%s0 + $0xf0] sm:$0xf]
  %v107 = vld [vmem:[%s0 + $0xf4] sm:$0xf]
  %v108 = vld [vmem:[%s0 + $0xf8] sm:$0xf]
  %v109 = vld [vmem:[%s0 + $0xfc] sm:$0xf]
  %v110 = vunpack.c.l.bf16 %v46
  %v111 = vunpack.c.l.bf16 %v47
  %v112 = vunpack.c.l.bf16 %v48
  %v113 = vunpack.c.l.bf16 %v49
  %v114 = vunpack.c.l.bf16 %v50
  %v115 = vunpack.c.l.bf16 %v51
  %v116 = vunpack.c.l.bf16 %v52
  %v117 = vunpack.c.l.bf16 %v53
  %v118 = vunpack.c.l.bf16 %v54
  %v119 = vunpack.c.l.bf16 %v55
  %v120 = vunpack.c.l.bf16 %v56
  %v121 = vunpack.c.l.bf16 %v57
  %v122 = vunpack.c.l.bf16 %v58
  %v123 = vunpack.c.l.bf16 %v59
  %v124 = vunpack.c.l.bf16 %v60
  %v125 = vunpack.c.l.bf16 %v61
  %v126 = vunpack.c.l.bf16 %v62
  %v127 = vunpack.c.l.bf16 %v63
  %v128 = vunpack.c.l.bf16 %v64
  %v129 = vunpack.c.l.bf16 %v65
  %v130 = vunpack.c.l.bf16 %v66
  %v131 = vunpack.c.l.bf16 %v67
  %v132 = vunpack.c.l.bf16 %v68
  %v133 = vunpack.c.l.bf16 %v69
  %v134 = vunpack.c.l.bf16 %v70
  %v135 = vunpack.c.l.bf16 %v71
  %v136 = vunpack.c.l.bf16 %v72
  %v137 = vunpack.c.l.bf16 %v73
  %v138 = vunpack.c.l.bf16 %v74
  %v139 = vunpack.c.l.bf16 %v75
  %v140 = vunpack.c.l.bf16 %v76
  %v141 = vunpack.c.l.bf16 %v77
  %v142 = vunpack.c.l.bf16 %v78
  %v143 = vunpack.c.l.bf16 %v79
  %v144 = vunpack.c.l.bf16 %v80
  %v145 = vunpack.c.l.bf16 %v81
  %v146 = vunpack.c.l.bf16 %v82
  %v147 = vunpack.c.l.bf16 %v83
  %v148 = vunpack.c.l.bf16 %v84
  %v149 = vunpack.c.l.bf16 %v85
  %v150 = vunpack.c.l.bf16 %v86
  %v151 = vunpack.c.l.bf16 %v87
  %v152 = vunpack.c.l.bf16 %v88
  %v153 = vunpack.c.l.bf16 %v89
  %v154 = vunpack.c.l.bf16 %v90
  %v155 = vunpack.c.l.bf16 %v91
  %v156 = vunpack.c.l.bf16 %v92
  %v157 = vunpack.c.l.bf16 %v93
  %v158 = vunpack.c.l.bf16 %v94
  %v159 = vunpack.c.l.bf16 %v95
  %v160 = vunpack.c.l.bf16 %v96
  %v161 = vunpack.c.l.bf16 %v97
  %v162 = vunpack.c.l.bf16 %v98
  %v163 = vunpack.c.l.bf16 %v99
  %v164 = vunpack.c.l.bf16 %v100
  %v165 = vunpack.c.l.bf16 %v101
  %v166 = vunpack.c.l.bf16 %v102
  %v167 = vunpack.c.l.bf16 %v103
  %v168 = vunpack.c.l.bf16 %v104
  %v169 = vunpack.c.l.bf16 %v105
  %v170 = vunpack.c.l.bf16 %v106
  %v171 = vunpack.c.l.bf16 %v107
  %v172 = vunpack.c.l.bf16 %v108
  %v173 = vunpack.c.l.bf16 %v109
  %v175 = vperm.slane %v42, 0
  %v177 = vmul.f32 %v110, %v175
  %v178 = vmul.f32 %v111, %v175
  %v179 = vmul.f32 %v112, %v175
  %v180 = vmul.f32 %v113, %v175
  %v181 = vmul.f32 %v114, %v175
  %v182 = vmul.f32 %v115, %v175
  %v183 = vmul.f32 %v116, %v175
  %v184 = vmul.f32 %v117, %v175
  %v185 = vmul.f32 %v118, %v175
  %v186 = vmul.f32 %v119, %v175
  %v187 = vmul.f32 %v120, %v175
  %v188 = vmul.f32 %v121, %v175
  %v189 = vmul.f32 %v122, %v175
  %v190 = vmul.f32 %v123, %v175
  %v191 = vmul.f32 %v124, %v175
  %v192 = vmul.f32 %v125, %v175
  %v193 = vmul.f32 %v126, %v175
  %v194 = vmul.f32 %v127, %v175
  %v195 = vmul.f32 %v128, %v175
  %v196 = vmul.f32 %v129, %v175
  %v197 = vmul.f32 %v130, %v175
  %v198 = vmul.f32 %v131, %v175
  %v199 = vmul.f32 %v132, %v175
  %v200 = vmul.f32 %v133, %v175
  %v201 = vmul.f32 %v134, %v175
  %v202 = vmul.f32 %v135, %v175
  %v203 = vmul.f32 %v136, %v175
  %v204 = vmul.f32 %v137, %v175
  %v205 = vmul.f32 %v138, %v175
  %v206 = vmul.f32 %v139, %v175
  %v207 = vmul.f32 %v140, %v175
  %v208 = vmul.f32 %v141, %v175
  %v209 = vmul.f32 %v142, %v175
  %v210 = vmul.f32 %v143, %v175
  %v211 = vmul.f32 %v144, %v175
  %v212 = vmul.f32 %v145, %v175
  %v213 = vmul.f32 %v146, %v175
  %v214 = vmul.f32 %v147, %v175
  %v215 = vmul.f32 %v148, %v175
  %v216 = vmul.f32 %v149, %v175
  %v217 = vmul.f32 %v150, %v175
  %v218 = vmul.f32 %v151, %v175
  %v219 = vmul.f32 %v152, %v175
  %v220 = vmul.f32 %v153, %v175
  %v221 = vmul.f32 %v154, %v175
  %v222 = vmul.f32 %v155, %v175
  %v223 = vmul.f32 %v156, %v175
  %v224 = vmul.f32 %v157, %v175
  %v225 = vmul.f32 %v158, %v175
  %v226 = vmul.f32 %v159, %v175
  %v227 = vmul.f32 %v160, %v175
  %v228 = vmul.f32 %v161, %v175
  %v229 = vmul.f32 %v162, %v175
  %v230 = vmul.f32 %v163, %v175
  %v231 = vmul.f32 %v164, %v175
  %v232 = vmul.f32 %v165, %v175
  %v233 = vmul.f32 %v166, %v175
  %v234 = vmul.f32 %v167, %v175
  %v235 = vmul.f32 %v168, %v175
  %v236 = vmul.f32 %v169, %v175
  %v237 = vmul.f32 %v170, %v175
  %v238 = vmul.f32 %v171, %v175
  %v239 = vmul.f32 %v172, %v175
  %v240 = vmul.f32 %v173, %v175
  %v242 = vperm.slane %v45, 0
  %v244 = vadd.f32 %v177, %v242
  %v245 = vadd.f32 %v178, %v242
  %v246 = vadd.f32 %v179, %v242
  %v247 = vadd.f32 %v180, %v242
  %v248 = vadd.f32 %v181, %v242
  %v249 = vadd.f32 %v182, %v242
  %v250 = vadd.f32 %v183, %v242
  %v251 = vadd.f32 %v184, %v242
  %v252 = vadd.f32 %v185, %v242
  %v253 = vadd.f32 %v186, %v242
  %v254 = vadd.f32 %v187, %v242
  %v255 = vadd.f32 %v188, %v242
  %v256 = vadd.f32 %v189, %v242
  %v257 = vadd.f32 %v190, %v242
  %v258 = vadd.f32 %v191, %v242
  %v259 = vadd.f32 %v192, %v242
  %v260 = vadd.f32 %v193, %v242
  %v261 = vadd.f32 %v194, %v242
  %v262 = vadd.f32 %v195, %v242
  %v263 = vadd.f32 %v196, %v242
  %v264 = vadd.f32 %v197, %v242
  %v265 = vadd.f32 %v198, %v242
  %v266 = vadd.f32 %v199, %v242
  %v267 = vadd.f32 %v200, %v242
  %v268 = vadd.f32 %v201, %v242
  %v269 = vadd.f32 %v202, %v242
  %v270 = vadd.f32 %v203, %v242
  %v271 = vadd.f32 %v204, %v242
  %v272 = vadd.f32 %v205, %v242
  %v273 = vadd.f32 %v206, %v242
  %v274 = vadd.f32 %v207, %v242
  %v275 = vadd.f32 %v208, %v242
  %v276 = vadd.f32 %v209, %v242
  %v277 = vadd.f32 %v210, %v242
  %v278 = vadd.f32 %v211, %v242
  %v279 = vadd.f32 %v212, %v242
  %v280 = vadd.f32 %v213, %v242
  %v281 = vadd.f32 %v214, %v242
  %v282 = vadd.f32 %v215, %v242
  %v283 = vadd.f32 %v216, %v242
  %v284 = vadd.f32 %v217, %v242
  %v285 = vadd.f32 %v218, %v242
  %v286 = vadd.f32 %v219, %v242
  %v287 = vadd.f32 %v220, %v242
  %v288 = vadd.f32 %v221, %v242
  %v289 = vadd.f32 %v222, %v242
  %v290 = vadd.f32 %v223, %v242
  %v291 = vadd.f32 %v224, %v242
  %v292 = vadd.f32 %v225, %v242
  %v293 = vadd.f32 %v226, %v242
  %v294 = vadd.f32 %v227, %v242
  %v295 = vadd.f32 %v228, %v242
  %v296 = vadd.f32 %v229, %v242
  %v297 = vadd.f32 %v230, %v242
  %v298 = vadd.f32 %v231, %v242
  %v299 = vadd.f32 %v232, %v242
  %v300 = vadd.f32 %v233, %v242
  %v301 = vadd.f32 %v234, %v242
  %v302 = vadd.f32 %v235, %v242
  %v303 = vadd.f32 %v236, %v242
  %v304 = vadd.f32 %v237, %v242
  %v305 = vadd.f32 %v238, %v242
  %v306 = vadd.f32 %v239, %v242
  %v307 = vadd.f32 %v240, %v242
  %v308 = vld [vmem:[%s5] sm:$0xff]
  %v309 = vld [vmem:[%s5 + $0x8] sm:$0xff]
  %v310 = vld [vmem:[%s5 + $0x10] sm:$0xff]
  %v311 = vld [vmem:[%s5 + $0x18] sm:$0xff]
  %v312 = vld [vmem:[%s5 + $0x20] sm:$0xff]
  %v313 = vld [vmem:[%s5 + $0x28] sm:$0xff]
  %v314 = vld [vmem:[%s5 + $0x30] sm:$0xff]
  %v315 = vld [vmem:[%s5 + $0x38] sm:$0xff]
  %v316 = vld [vmem:[%s5 + $0x40] sm:$0xff]
  %v317 = vld [vmem:[%s5 + $0x48] sm:$0xff]
  %v318 = vld [vmem:[%s5 + $0x50] sm:$0xff]
  %v319 = vld [vmem:[%s5 + $0x58] sm:$0xff]
  %v320 = vld [vmem:[%s5 + $0x60] sm:$0xff]
  %v321 = vld [vmem:[%s5 + $0x68] sm:$0xff]
  %v322 = vld [vmem:[%s5 + $0x70] sm:$0xff]
  %v323 = vld [vmem:[%s5 + $0x78] sm:$0xff]
  %v324 = vld [vmem:[%s5 + $0x80] sm:$0xff]
  %v325 = vld [vmem:[%s5 + $0x88] sm:$0xff]
  %v326 = vld [vmem:[%s5 + $0x90] sm:$0xff]
  %v327 = vld [vmem:[%s5 + $0x98] sm:$0xff]
  %v328 = vld [vmem:[%s5 + $0xa0] sm:$0xff]
  %v329 = vld [vmem:[%s5 + $0xa8] sm:$0xff]
  %v330 = vld [vmem:[%s5 + $0xb0] sm:$0xff]
  %v331 = vld [vmem:[%s5 + $0xb8] sm:$0xff]
  %v332 = vld [vmem:[%s5 + $0xc0] sm:$0xff]
  %v333 = vld [vmem:[%s5 + $0xc8] sm:$0xff]
  %v334 = vld [vmem:[%s5 + $0xd0] sm:$0xff]
  %v335 = vld [vmem:[%s5 + $0xd8] sm:$0xff]
  %v336 = vld [vmem:[%s5 + $0xe0] sm:$0xff]
  %v337 = vld [vmem:[%s5 + $0xe8] sm:$0xff]
  %v338 = vld [vmem:[%s5 + $0xf0] sm:$0xff]
  %v339 = vld [vmem:[%s5 + $0xf8] sm:$0xff]
  %v340 = vld [vmem:[%s5 + $0x100] sm:$0xff]
  %v341 = vld [vmem:[%s5 + $0x108] sm:$0xff]
  %v342 = vld [vmem:[%s5 + $0x110] sm:$0xff]
  %v343 = vld [vmem:[%s5 + $0x118] sm:$0xff]
  %v344 = vld [vmem:[%s5 + $0x120] sm:$0xff]
  %v345 = vld [vmem:[%s5 + $0x128] sm:$0xff]
  %v346 = vld [vmem:[%s5 + $0x130] sm:$0xff]
  %v347 = vld [vmem:[%s5 + $0x138] sm:$0xff]
  %v348 = vld [vmem:[%s5 + $0x140] sm:$0xff]
  %v349 = vld [vmem:[%s5 + $0x148] sm:$0xff]
  %v350 = vld [vmem:[%s5 + $0x150] sm:$0xff]
  %v351 = vld [vmem:[%s5 + $0x158] sm:$0xff]
  %v352 = vld [vmem:[%s5 + $0x160] sm:$0xff]
  %v353 = vld [vmem:[%s5 + $0x168] sm:$0xff]
  %v354 = vld [vmem:[%s5 + $0x170] sm:$0xff]
  %v355 = vld [vmem:[%s5 + $0x178] sm:$0xff]
  %v356 = vld [vmem:[%s5 + $0x180] sm:$0xff]
  %v357 = vld [vmem:[%s5 + $0x188] sm:$0xff]
  %v358 = vld [vmem:[%s5 + $0x190] sm:$0xff]
  %v359 = vld [vmem:[%s5 + $0x198] sm:$0xff]
  %v360 = vld [vmem:[%s5 + $0x1a0] sm:$0xff]
  %v361 = vld [vmem:[%s5 + $0x1a8] sm:$0xff]
  %v362 = vld [vmem:[%s5 + $0x1b0] sm:$0xff]
  %v363 = vld [vmem:[%s5 + $0x1b8] sm:$0xff]
  %v364 = vld [vmem:[%s5 + $0x1c0] sm:$0xff]
  %v365 = vld [vmem:[%s5 + $0x1c8] sm:$0xff]
  %v366 = vld [vmem:[%s5 + $0x1d0] sm:$0xff]
  %v367 = vld [vmem:[%s5 + $0x1d8] sm:$0xff]
  %v368 = vld [vmem:[%s5 + $0x1e0] sm:$0xff]
  %v369 = vld [vmem:[%s5 + $0x1e8] sm:$0xff]
  %v370 = vld [vmem:[%s5 + $0x1f0] sm:$0xff]
  %v371 = vld [vmem:[%s5 + $0x1f8] sm:$0xff]
  %v372 = vadd.f32 %v244, %v308
  %v373 = vadd.f32 %v245, %v309
  %v374 = vadd.f32 %v246, %v310
  %v375 = vadd.f32 %v247, %v311
  %v376 = vadd.f32 %v248, %v312
  %v377 = vadd.f32 %v249, %v313
  %v378 = vadd.f32 %v250, %v314
  %v379 = vadd.f32 %v251, %v315
  %v380 = vadd.f32 %v252, %v316
  %v381 = vadd.f32 %v253, %v317
  %v382 = vadd.f32 %v254, %v318
  %v383 = vadd.f32 %v255, %v319
  %v384 = vadd.f32 %v256, %v320
  %v385 = vadd.f32 %v257, %v321
  %v386 = vadd.f32 %v258, %v322
  %v387 = vadd.f32 %v259, %v323
  %v388 = vadd.f32 %v260, %v324
  %v389 = vadd.f32 %v261, %v325
  %v390 = vadd.f32 %v262, %v326
  %v391 = vadd.f32 %v263, %v327
  %v392 = vadd.f32 %v264, %v328
  %v393 = vadd.f32 %v265, %v329
  %v394 = vadd.f32 %v266, %v330
  %v395 = vadd.f32 %v267, %v331
  %v396 = vadd.f32 %v268, %v332
  %v397 = vadd.f32 %v269, %v333
  %v398 = vadd.f32 %v270, %v334
  %v399 = vadd.f32 %v271, %v335
  %v400 = vadd.f32 %v272, %v336
  %v401 = vadd.f32 %v273, %v337
  %v402 = vadd.f32 %v274, %v338
  %v403 = vadd.f32 %v275, %v339
  %v404 = vadd.f32 %v276, %v340
  %v405 = vadd.f32 %v277, %v341
  %v406 = vadd.f32 %v278, %v342
  %v407 = vadd.f32 %v279, %v343
  %v408 = vadd.f32 %v280, %v344
  %v409 = vadd.f32 %v281, %v345
  %v410 = vadd.f32 %v282, %v346
  %v411 = vadd.f32 %v283, %v347
  %v412 = vadd.f32 %v284, %v348
  %v413 = vadd.f32 %v285, %v349
  %v414 = vadd.f32 %v286, %v350
  %v415 = vadd.f32 %v287, %v351
  %v416 = vadd.f32 %v288, %v352
  %v417 = vadd.f32 %v289, %v353
  %v418 = vadd.f32 %v290, %v354
  %v419 = vadd.f32 %v291, %v355
  %v420 = vadd.f32 %v292, %v356
  %v421 = vadd.f32 %v293, %v357
  %v422 = vadd.f32 %v294, %v358
  %v423 = vadd.f32 %v295, %v359
  %v424 = vadd.f32 %v296, %v360
  %v425 = vadd.f32 %v297, %v361
  %v426 = vadd.f32 %v298, %v362
  %v427 = vadd.f32 %v299, %v363
  %v428 = vadd.f32 %v300, %v364
  %v429 = vadd.f32 %v301, %v365
  %v430 = vadd.f32 %v302, %v366
  %v431 = vadd.f32 %v303, %v367
  %v432 = vadd.f32 %v304, %v368
  %v433 = vadd.f32 %v305, %v369
  %v434 = vadd.f32 %v306, %v370
  %v435 = vadd.f32 %v307, %v371
  %v436 = vmax.f32 %v372, 0.0
  %v437 = vmax.f32 %v373, 0.0
  %v438 = vmax.f32 %v374, 0.0
  %v439 = vmax.f32 %v375, 0.0
  %v440 = vmax.f32 %v376, 0.0
  %v441 = vmax.f32 %v377, 0.0
  %v442 = vmax.f32 %v378, 0.0
  %v443 = vmax.f32 %v379, 0.0
  %v444 = vmax.f32 %v380, 0.0
  %v445 = vmax.f32 %v381, 0.0
  %v446 = vmax.f32 %v382, 0.0
  %v447 = vmax.f32 %v383, 0.0
  %v448 = vmax.f32 %v384, 0.0
  %v449 = vmax.f32 %v385, 0.0
  %v450 = vmax.f32 %v386, 0.0
  %v451 = vmax.f32 %v387, 0.0
  %v452 = vmax.f32 %v388, 0.0
  %v453 = vmax.f32 %v389, 0.0
  %v454 = vmax.f32 %v390, 0.0
  %v455 = vmax.f32 %v391, 0.0
  %v456 = vmax.f32 %v392, 0.0
  %v457 = vmax.f32 %v393, 0.0
  %v458 = vmax.f32 %v394, 0.0
  %v459 = vmax.f32 %v395, 0.0
  %v460 = vmax.f32 %v396, 0.0
  %v461 = vmax.f32 %v397, 0.0
  %v462 = vmax.f32 %v398, 0.0
  %v463 = vmax.f32 %v399, 0.0
  %v464 = vmax.f32 %v400, 0.0
  %v465 = vmax.f32 %v401, 0.0
  %v466 = vmax.f32 %v402, 0.0
  %v467 = vmax.f32 %v403, 0.0
  %v468 = vmax.f32 %v404, 0.0
  %v469 = vmax.f32 %v405, 0.0
  %v470 = vmax.f32 %v406, 0.0
  %v471 = vmax.f32 %v407, 0.0
  %v472 = vmax.f32 %v408, 0.0
  %v473 = vmax.f32 %v409, 0.0
  %v474 = vmax.f32 %v410, 0.0
  %v475 = vmax.f32 %v411, 0.0
  %v476 = vmax.f32 %v412, 0.0
  %v477 = vmax.f32 %v413, 0.0
  %v478 = vmax.f32 %v414, 0.0
  %v479 = vmax.f32 %v415, 0.0
  %v480 = vmax.f32 %v416, 0.0
  %v481 = vmax.f32 %v417, 0.0
  %v482 = vmax.f32 %v418, 0.0
  %v483 = vmax.f32 %v419, 0.0
  %v484 = vmax.f32 %v420, 0.0
  %v485 = vmax.f32 %v421, 0.0
  %v486 = vmax.f32 %v422, 0.0
  %v487 = vmax.f32 %v423, 0.0
  %v488 = vmax.f32 %v424, 0.0
  %v489 = vmax.f32 %v425, 0.0
  %v490 = vmax.f32 %v426, 0.0
  %v491 = vmax.f32 %v427, 0.0
  %v492 = vmax.f32 %v428, 0.0
  %v493 = vmax.f32 %v429, 0.0
  %v494 = vmax.f32 %v430, 0.0
  %v495 = vmax.f32 %v431, 0.0
  %v496 = vmax.f32 %v432, 0.0
  %v497 = vmax.f32 %v433, 0.0
  %v498 = vmax.f32 %v434, 0.0
  %v499 = vmax.f32 %v435, 0.0
  %v500 = vpack.c.bf16 %v436, %v436
  %v501 = vpack.c.bf16 %v437, %v437
  %v502 = vpack.c.bf16 %v438, %v438
  %v503 = vpack.c.bf16 %v439, %v439
  %v504 = vpack.c.bf16 %v440, %v440
  %v505 = vpack.c.bf16 %v441, %v441
  %v506 = vpack.c.bf16 %v442, %v442
  %v507 = vpack.c.bf16 %v443, %v443
  %v508 = vpack.c.bf16 %v444, %v444
  %v509 = vpack.c.bf16 %v445, %v445
  %v510 = vpack.c.bf16 %v446, %v446
  %v511 = vpack.c.bf16 %v447, %v447
  %v512 = vpack.c.bf16 %v448, %v448
  %v513 = vpack.c.bf16 %v449, %v449
  %v514 = vpack.c.bf16 %v450, %v450
  %v515 = vpack.c.bf16 %v451, %v451
  %v516 = vpack.c.bf16 %v452, %v452
  %v517 = vpack.c.bf16 %v453, %v453
  %v518 = vpack.c.bf16 %v454, %v454
  %v519 = vpack.c.bf16 %v455, %v455
  %v520 = vpack.c.bf16 %v456, %v456
  %v521 = vpack.c.bf16 %v457, %v457
  %v522 = vpack.c.bf16 %v458, %v458
  %v523 = vpack.c.bf16 %v459, %v459
  %v524 = vpack.c.bf16 %v460, %v460
  %v525 = vpack.c.bf16 %v461, %v461
  %v526 = vpack.c.bf16 %v462, %v462
  %v527 = vpack.c.bf16 %v463, %v463
  %v528 = vpack.c.bf16 %v464, %v464
  %v529 = vpack.c.bf16 %v465, %v465
  %v530 = vpack.c.bf16 %v466, %v466
  %v531 = vpack.c.bf16 %v467, %v467
  %v532 = vpack.c.bf16 %v468, %v468
  %v533 = vpack.c.bf16 %v469, %v469
  %v534 = vpack.c.bf16 %v470, %v470
  %v535 = vpack.c.bf16 %v471, %v471
  %v536 = vpack.c.bf16 %v472, %v472
  %v537 = vpack.c.bf16 %v473, %v473
  %v538 = vpack.c.bf16 %v474, %v474
  %v539 = vpack.c.bf16 %v475, %v475
  %v540 = vpack.c.bf16 %v476, %v476
  %v541 = vpack.c.bf16 %v477, %v477
  %v542 = vpack.c.bf16 %v478, %v478
  %v543 = vpack.c.bf16 %v479, %v479
  %v544 = vpack.c.bf16 %v480, %v480
  %v545 = vpack.c.bf16 %v481, %v481
  %v546 = vpack.c.bf16 %v482, %v482
  %v547 = vpack.c.bf16 %v483, %v483
  %v548 = vpack.c.bf16 %v484, %v484
  %v549 = vpack.c.bf16 %v485, %v485
  %v550 = vpack.c.bf16 %v486, %v486
  %v551 = vpack.c.bf16 %v487, %v487
  %v552 = vpack.c.bf16 %v488, %v488
  %v553 = vpack.c.bf16 %v489, %v489
  %v554 = vpack.c.bf16 %v490, %v490
  %v555 = vpack.c.bf16 %v491, %v491
  %v556 = vpack.c.bf16 %v492, %v492
  %v557 = vpack.c.bf16 %v493, %v493
  %v558 = vpack.c.bf16 %v494, %v494
  %v559 = vpack.c.bf16 %v495, %v495
  %v560 = vpack.c.bf16 %v496, %v496
  %v561 = vpack.c.bf16 %v497, %v497
  %v562 = vpack.c.bf16 %v498, %v498
  %v563 = vpack.c.bf16 %v499, %v499
  %564 = vst [vmem:[%s6] sm:$0xf] %v500
  %565 = vst [vmem:[%s6 + $0x4] sm:$0xf] %v501
  %566 = vst [vmem:[%s6 + $0x8] sm:$0xf] %v502
  %567 = vst [vmem:[%s6 + $0xc] sm:$0xf] %v503
  %568 = vst [vmem:[%s6 + $0x10] sm:$0xf] %v504
  %569 = vst [vmem:[%s6 + $0x14] sm:$0xf] %v505
  %570 = vst [vmem:[%s6 + $0x18] sm:$0xf] %v506
  %571 = vst [vmem:[%s6 + $0x1c] sm:$0xf] %v507
  %572 = vst [vmem:[%s6 + $0x20] sm:$0xf] %v508
  %573 = vst [vmem:[%s6 + $0x24] sm:$0xf] %v509
  %574 = vst [vmem:[%s6 + $0x28] sm:$0xf] %v510
  %575 = vst [vmem:[%s6 + $0x2c] sm:$0xf] %v511
  %576 = vst [vmem:[%s6 + $0x30] sm:$0xf] %v512
  %577 = vst [vmem:[%s6 + $0x34] sm:$0xf] %v513
  %578 = vst [vmem:[%s6 + $0x38] sm:$0xf] %v514
  %579 = vst [vmem:[%s6 + $0x3c] sm:$0xf] %v515
  %580 = vst [vmem:[%s6 + $0x40] sm:$0xf] %v516
  %581 = vst [vmem:[%s6 + $0x44] sm:$0xf] %v517
  %582 = vst [vmem:[%s6 + $0x48] sm:$0xf] %v518
  %583 = vst [vmem:[%s6 + $0x4c] sm:$0xf] %v519
  %584 = vst [vmem:[%s6 + $0x50] sm:$0xf] %v520
  %585 = vst [vmem:[%s6 + $0x54] sm:$0xf] %v521
  %586 = vst [vmem:[%s6 + $0x58] sm:$0xf] %v522
  %587 = vst [vmem:[%s6 + $0x5c] sm:$0xf] %v523
  %588 = vst [vmem:[%s6 + $0x60] sm:$0xf] %v524
  %589 = vst [vmem:[%s6 + $0x64] sm:$0xf] %v525
  %590 = vst [vmem:[%s6 + $0x68] sm:$0xf] %v526
  %591 = vst [vmem:[%s6 + $0x6c] sm:$0xf] %v527
  %592 = vst [vmem:[%s6 + $0x70] sm:$0xf] %v528
  %593 = vst [vmem:[%s6 + $0x74] sm:$0xf] %v529
  %594 = vst [vmem:[%s6 + $0x78] sm:$0xf] %v530
  %595 = vst [vmem:[%s6 + $0x7c] sm:$0xf] %v531
  %596 = vst [vmem:[%s6 + $0x80] sm:$0xf] %v532
  %597 = vst [vmem:[%s6 + $0x84] sm:$0xf] %v533
  %598 = vst [vmem:[%s6 + $0x88] sm:$0xf] %v534
  %599 = vst [vmem:[%s6 + $0x8c] sm:$0xf] %v535
  %600 = vst [vmem:[%s6 + $0x90] sm:$0xf] %v536
  %601 = vst [vmem:[%s6 + $0x94] sm:$0xf] %v537
  %602 = vst [vmem:[%s6 + $0x98] sm:$0xf] %v538
  %603 = vst [vmem:[%s6 + $0x9c] sm:$0xf] %v539
  %604 = vst [vmem:[%s6 + $0xa0] sm:$0xf] %v540
  %605 = vst [vmem:[%s6 + $0xa4] sm:$0xf] %v541
  %606 = vst [vmem:[%s6 + $0xa8] sm:$0xf] %v542
  %607 = vst [vmem:[%s6 + $0xac] sm:$0xf] %v543
  %608 = vst [vmem:[%s6 + $0xb0] sm:$0xf] %v544
  %609 = vst [vmem:[%s6 + $0xb4] sm:$0xf] %v545
  %610 = vst [vmem:[%s6 + $0xb8] sm:$0xf] %v546
  %611 = vst [vmem:[%s6 + $0xbc] sm:$0xf] %v547
  %612 = vst [vmem:[%s6 + $0xc0] sm:$0xf] %v548
  %613 = vst [vmem:[%s6 + $0xc4] sm:$0xf] %v549
  %614 = vst [vmem:[%s6 + $0xc8] sm:$0xf] %v550
  %615 = vst [vmem:[%s6 + $0xcc] sm:$0xf] %v551
  %616 = vst [vmem:[%s6 + $0xd0] sm:$0xf] %v552
  %617 = vst [vmem:[%s6 + $0xd4] sm:$0xf] %v553
  %618 = vst [vmem:[%s6 + $0xd8] sm:$0xf] %v554
  %619 = vst [vmem:[%s6 + $0xdc] sm:$0xf] %v555
  %620 = vst [vmem:[%s6 + $0xe0] sm:$0xf] %v556
  %621 = vst [vmem:[%s6 + $0xe4] sm:$0xf] %v557
  %622 = vst [vmem:[%s6 + $0xe8] sm:$0xf] %v558
  %623 = vst [vmem:[%s6 + $0xec] sm:$0xf] %v559
  %624 = vst [vmem:[%s6 + $0xf0] sm:$0xf] %v560
  %625 = vst [vmem:[%s6 + $0xf4] sm:$0xf] %v561
  %626 = vst [vmem:[%s6 + $0xf8] sm:$0xf] %v562
  %627 = vst [vmem:[%s6 + $0xfc] sm:$0xf] %v563
  // Predicated region
  $region26: #{block_forward.7} parent=0 // pred_check
    _
  $region27: #{block_forward.7} parent=0 // pred_check_branch
    %629 = sbr.rel (0) target = $region29
  $region28: #{block_forward.7} parent=0 // pred_region
    _
  $region29: #{block_forward.7} parent=0 // pred_fallthru
    _
  // Predicated region
  $region30: #{block_forward.7} parent=0 // pred_check
    _
  $region31: #{block_forward.7} parent=0 // pred_check_branch
    %631 = sbr.rel (0) target = $region33
  $region32: #{block_forward.7} parent=0 // pred_region
    _
  $region33: #{block_forward.7} parent=0 // pred_fallthru
    _

// kernel: block_forward.6
$region0: #{block_forward.6}
  #allocation0 [shape = 'u32[]', space=smem, size = 0x4, offset = 0x4, fixed_abs, tag = 'smem constant byte address 0x4 - core index']
  #allocation1 [shape = 'u32[72,128]{1,0:T(1,128)}', space=vmem, size = 0x9000, scoped, tag = 'internal scratch']
  %s0 = inlined_call_operand.vmem [shape: bf16[512,128], index: 0, kind: input, shape index: {}]
  %s1 = inlined_call_operand.vmem [shape: f32[1,128], index: 1, kind: input, shape index: {}]
  %s2 = inlined_call_operand.vmem [shape: f32[1,128], index: 2, kind: input, shape index: {}]
  %s3 = inlined_call_operand.vmem [shape: f32[1,128], index: 3, kind: input, shape index: {}]
  %s4 = inlined_call_operand.vmem [shape: f32[1,128], index: 4, kind: input, shape index: {}]
  %s5 = inlined_call_operand.vmem [shape: bf16[128,128], index: 5, kind: input, shape index: {}]
  %s6 = inlined_call_operand.vmem [shape: bf16[512,128], index: 6, kind: output, shape index: {0}]
  %s7 = inlined_call_operand.vmem [shape: f32[1,1,128], index: 7, kind: output, shape index: {1}]
  %s8 = inlined_call_operand.vmem [shape: f32[1,1,128], index: 8, kind: output, shape index: {2}]
  %9 = xla_tuple %s6, %s7, %s8
  %s10 = sld [smem:[#allocation0]]
  $region50: #{block_forward.6} parent=0
    _
  %s12 = ssub.s32 1, %s10
  %s13 = scalar_select 0, %s12, %s10
  // Predicated region
  $region2: #{block_forward.6} parent=0 // pred_check
    _
  $region3: #{block_forward.6} parent=0 // pred_check_branch
    %15 = sbr.rel (0) target = $region5
  $region4: #{block_forward.6} parent=0 // pred_region
    _
  $region5: #{block_forward.6} parent=0 // pred_fallthru
    _
  // Predicated region
  $region6: #{block_forward.6} parent=0 // pred_check
    _
  $region7: #{block_forward.6} parent=0 // pred_check_branch
    %17 = sbr.rel (0) target = $region9
  $region8: #{block_forward.6} parent=0 // pred_region
    _
  $region9: #{block_forward.6} parent=0 // pred_fallthru
    _
  // Predicated region
  $region10: #{block_forward.6} parent=0 // pred_check
    _
  $region11: #{block_forward.6} parent=0 // pred_check_branch
    %19 = sbr.rel (0) target = $region13
  $region12: #{block_forward.6} parent=0 // pred_region
    _
  $region13: #{block_forward.6} parent=0 // pred_fallthru
    _
  // Predicated region
  $region14: #{block_forward.6} parent=0 // pred_check
    _
  $region15: #{block_forward.6} parent=0 // pred_check_branch
    %21 = sbr.rel (0) target = $region17
  $region16: #{block_forward.6} parent=0 // pred_region
    _
  $region17: #{block_forward.6} parent=0 // pred_fallthru
    _
  // Predicated region
  $region18: #{block_forward.6} parent=0 // pred_check
    _
  $region19: #{block_forward.6} parent=0 // pred_check_branch
    %23 = sbr.rel (0) target = $region21
  $region20: #{block_forward.6} parent=0 // pred_region
    _
  $region21: #{block_forward.6} parent=0 // pred_fallthru
    _
  // Predicated region
  $region22: #{block_forward.6} parent=0 // pred_check
    _
  $region23: #{block_forward.6} parent=0 // pred_check_branch
    %25 = sbr.rel (0) target = $region25
  $region24: #{block_forward.6} parent=0 // pred_region
    _
  $region25: #{block_forward.6} parent=0 // pred_fallthru
    _
  %v26 = vld [vmem:[%s1] sm:$0x1]
  %v27 = vmul.f32 %v26, 0.001953125
  %v28 = vld [vmem:[%s2] sm:$0x1]
  %v29 = vmul.f32 %v28, 0.001953125
  %v30 = vmul.f32 %v27, %v27
  %v31 = vsub.f32 %v29, %v30
  %v32 = vmax.f32 %v31, 0.0
  %v33 = vadd.f32 %v32, 1e-05
  %v34 = vrsqrt.pop %v33
  %v35 = vmul.f32 %v34, %v33
  %v36 = vmul.f32 %v35, %v34
  %v37 = vmul.f32 0.5, %v36
  %v38 = vsub.f32 1.5, %v37
  %v39 = vmul.f32 %v34, %v38
  %vm40 = vweird.f32 %v33
  %vm41 = vweird.f32 %v34
  %vm42 = vmor %vm40, %vm41
  %v43 = vsel %vm42, %v34, %v39
  %v44 = vld [vmem:[%s3] sm:$0x1]
  %v45 = vmul.f32 %v44, %v43
  %v46 = vld [vmem:[%s4] sm:$0x1]
  %v47 = vmul.f32 %v27, %v45
  %v48 = vsub.f32 %v46, %v47
  %v49 = vld [vmem:[%s0] sm:$0xf]
  %v50 = vld [vmem:[%s0 + $0x4] sm:$0xf]
  %v51 = vld [vmem:[%s0 + $0x8] sm:$0xf]
  %v52 = vld [vmem:[%s0 + $0xc] sm:$0xf]
  %v53 = vld [vmem:[%s0 + $0x10] sm:$0xf]
  %v54 = vld [vmem:[%s0 + $0x14] sm:$0xf]
  %v55 = vld [vmem:[%s0 + $0x18] sm:$0xf]
  %v56 = vld [vmem:[%s0 + $0x1c] sm:$0xf]
  %v57 = vld [vmem:[%s0 + $0x20] sm:$0xf]
  %v58 = vld [vmem:[%s0 + $0x24] sm:$0xf]
  %v59 = vld [vmem:[%s0 + $0x28] sm:$0xf]
  %v60 = vld [vmem:[%s0 + $0x2c] sm:$0xf]
  %v61 = vld [vmem:[%s0 + $0x30] sm:$0xf]
  %v62 = vld [vmem:[%s0 + $0x34] sm:$0xf]
  %v63 = vld [vmem:[%s0 + $0x38] sm:$0xf]
  %v64 = vld [vmem:[%s0 + $0x3c] sm:$0xf]
  %v65 = vld [vmem:[%s0 + $0x40] sm:$0xf]
  %v66 = vld [vmem:[%s0 + $0x44] sm:$0xf]
  %v67 = vld [vmem:[%s0 + $0x48] sm:$0xf]
  %v68 = vld [vmem:[%s0 + $0x4c] sm:$0xf]
  %v69 = vld [vmem:[%s0 + $0x50] sm:$0xf]
  %v70 = vld [vmem:[%s0 + $0x54] sm:$0xf]
  %v71 = vld [vmem:[%s0 + $0x58] sm:$0xf]
  %v72 = vld [vmem:[%s0 + $0x5c] sm:$0xf]
  %v73 = vld [vmem:[%s0 + $0x60] sm:$0xf]
  %v74 = vld [vmem:[%s0 + $0x64] sm:$0xf]
  %v75 = vld [vmem:[%s0 + $0x68] sm:$0xf]
  %v76 = vld [vmem:[%s0 + $0x6c] sm:$0xf]
  %v77 = vld [vmem:[%s0 + $0x70] sm:$0xf]
  %v78 = vld [vmem:[%s0 + $0x74] sm:$0xf]
  %v79 = vld [vmem:[%s0 + $0x78] sm:$0xf]
  %v80 = vld [vmem:[%s0 + $0x7c] sm:$0xf]
  %v81 = vld [vmem:[%s0 + $0x80] sm:$0xf]
  %v82 = vld [vmem:[%s0 + $0x84] sm:$0xf]
  %v83 = vld [vmem:[%s0 + $0x88] sm:$0xf]
  %v84 = vld [vmem:[%s0 + $0x8c] sm:$0xf]
  %v85 = vld [vmem:[%s0 + $0x90] sm:$0xf]
  %v86 = vld [vmem:[%s0 + $0x94] sm:$0xf]
  %v87 = vld [vmem:[%s0 + $0x98] sm:$0xf]
  %v88 = vld [vmem:[%s0 + $0x9c] sm:$0xf]
  %v89 = vld [vmem:[%s0 + $0xa0] sm:$0xf]
  %v90 = vld [vmem:[%s0 + $0xa4] sm:$0xf]
  %v91 = vld [vmem:[%s0 + $0xa8] sm:$0xf]
  %v92 = vld [vmem:[%s0 + $0xac] sm:$0xf]
  %v93 = vld [vmem:[%s0 + $0xb0] sm:$0xf]
  %v94 = vld [vmem:[%s0 + $0xb4] sm:$0xf]
  %v95 = vld [vmem:[%s0 + $0xb8] sm:$0xf]
  %v96 = vld [vmem:[%s0 + $0xbc] sm:$0xf]
  %v97 = vld [vmem:[%s0 + $0xc0] sm:$0xf]
  %v98 = vld [vmem:[%s0 + $0xc4] sm:$0xf]
  %v99 = vld [vmem:[%s0 + $0xc8] sm:$0xf]
  %v100 = vld [vmem:[%s0 + $0xcc] sm:$0xf]
  %v101 = vld [vmem:[%s0 + $0xd0] sm:$0xf]
  %v102 = vld [vmem:[%s0 + $0xd4] sm:$0xf]
  %v103 = vld [vmem:[%s0 + $0xd8] sm:$0xf]
  %v104 = vld [vmem:[%s0 + $0xdc] sm:$0xf]
  %v105 = vld [vmem:[%s0 + $0xe0] sm:$0xf]
  %v106 = vld [vmem:[%s0 + $0xe4] sm:$0xf]
  %v107 = vld [vmem:[%s0 + $0xe8] sm:$0xf]
  %v108 = vld [vmem:[%s0 + $0xec] sm:$0xf]
  %v109 = vld [vmem:[%s0 + $0xf0] sm:$0xf]
  %v110 = vld [vmem:[%s0 + $0xf4] sm:$0xf]
  %v111 = vld [vmem:[%s0 + $0xf8] sm:$0xf]
  %v112 = vld [vmem:[%s0 + $0xfc] sm:$0xf]
  %v113 = vunpack.c.l.bf16 %v49
  %v114 = vunpack.c.l.bf16 %v50
  %v115 = vunpack.c.l.bf16 %v51
  %v116 = vunpack.c.l.bf16 %v52
  %v117 = vunpack.c.l.bf16 %v53
  %v118 = vunpack.c.l.bf16 %v54
  %v119 = vunpack.c.l.bf16 %v55
  %v120 = vunpack.c.l.bf16 %v56
  %v121 = vunpack.c.l.bf16 %v57
  %v122 = vunpack.c.l.bf16 %v58
  %v123 = vunpack.c.l.bf16 %v59
  %v124 = vunpack.c.l.bf16 %v60
  %v125 = vunpack.c.l.bf16 %v61
  %v126 = vunpack.c.l.bf16 %v62
  %v127 = vunpack.c.l.bf16 %v63
  %v128 = vunpack.c.l.bf16 %v64
  %v129 = vunpack.c.l.bf16 %v65
  %v130 = vunpack.c.l.bf16 %v66
  %v131 = vunpack.c.l.bf16 %v67
  %v132 = vunpack.c.l.bf16 %v68
  %v133 = vunpack.c.l.bf16 %v69
  %v134 = vunpack.c.l.bf16 %v70
  %v135 = vunpack.c.l.bf16 %v71
  %v136 = vunpack.c.l.bf16 %v72
  %v137 = vunpack.c.l.bf16 %v73
  %v138 = vunpack.c.l.bf16 %v74
  %v139 = vunpack.c.l.bf16 %v75
  %v140 = vunpack.c.l.bf16 %v76
  %v141 = vunpack.c.l.bf16 %v77
  %v142 = vunpack.c.l.bf16 %v78
  %v143 = vunpack.c.l.bf16 %v79
  %v144 = vunpack.c.l.bf16 %v80
  %v145 = vunpack.c.l.bf16 %v81
  %v146 = vunpack.c.l.bf16 %v82
  %v147 = vunpack.c.l.bf16 %v83
  %v148 = vunpack.c.l.bf16 %v84
  %v149 = vunpack.c.l.bf16 %v85
  %v150 = vunpack.c.l.bf16 %v86
  %v151 = vunpack.c.l.bf16 %v87
  %v152 = vunpack.c.l.bf16 %v88
  %v153 = vunpack.c.l.bf16 %v89
  %v154 = vunpack.c.l.bf16 %v90
  %v155 = vunpack.c.l.bf16 %v91
  %v156 = vunpack.c.l.bf16 %v92
  %v157 = vunpack.c.l.bf16 %v93
  %v158 = vunpack.c.l.bf16 %v94
  %v159 = vunpack.c.l.bf16 %v95
  %v160 = vunpack.c.l.bf16 %v96
  %v161 = vunpack.c.l.bf16 %v97
  %v162 = vunpack.c.l.bf16 %v98
  %v163 = vunpack.c.l.bf16 %v99
  %v164 = vunpack.c.l.bf16 %v100
  %v165 = vunpack.c.l.bf16 %v101
  %v166 = vunpack.c.l.bf16 %v102
  %v167 = vunpack.c.l.bf16 %v103
  %v168 = vunpack.c.l.bf16 %v104
  %v169 = vunpack.c.l.bf16 %v105
  %v170 = vunpack.c.l.bf16 %v106
  %v171 = vunpack.c.l.bf16 %v107
  %v172 = vunpack.c.l.bf16 %v108
  %v173 = vunpack.c.l.bf16 %v109
  %v174 = vunpack.c.l.bf16 %v110
  %v175 = vunpack.c.l.bf16 %v111
  %v176 = vunpack.c.l.bf16 %v112
  %v178 = vperm.slane %v45, 0
  %v180 = vmul.f32 %v113, %v178
  %v181 = vmul.f32 %v114, %v178
  %v182 = vmul.f32 %v115, %v178
  %v183 = vmul.f32 %v116, %v178
  %v184 = vmul.f32 %v117, %v178
  %v185 = vmul.f32 %v118, %v178
  %v186 = vmul.f32 %v119, %v178
  %v187 = vmul.f32 %v120, %v178
  %v188 = vmul.f32 %v121, %v178
  %v189 = vmul.f32 %v122, %v178
  %v190 = vmul.f32 %v123, %v178
  %v191 = vmul.f32 %v124, %v178
  %v192 = vmul.f32 %v125, %v178
  %v193 = vmul.f32 %v126, %v178
  %v194 = vmul.f32 %v127, %v178
  %v195 = vmul.f32 %v128, %v178
  %v196 = vmul.f32 %v129, %v178
  %v197 = vmul.f32 %v130, %v178
  %v198 = vmul.f32 %v131, %v178
  %v199 = vmul.f32 %v132, %v178
  %v200 = vmul.f32 %v133, %v178
  %v201 = vmul.f32 %v134, %v178
  %v202 = vmul.f32 %v135, %v178
  %v203 = vmul.f32 %v136, %v178
  %v204 = vmul.f32 %v137, %v178
  %v205 = vmul.f32 %v138, %v178
  %v206 = vmul.f32 %v139, %v178
  %v207 = vmul.f32 %v140, %v178
  %v208 = vmul.f32 %v141, %v178
  %v209 = vmul.f32 %v142, %v178
  %v210 = vmul.f32 %v143, %v178
  %v211 = vmul.f32 %v144, %v178
  %v212 = vmul.f32 %v145, %v178
  %v213 = vmul.f32 %v146, %v178
  %v214 = vmul.f32 %v147, %v178
  %v215 = vmul.f32 %v148, %v178
  %v216 = vmul.f32 %v149, %v178
  %v217 = vmul.f32 %v150, %v178
  %v218 = vmul.f32 %v151, %v178
  %v219 = vmul.f32 %v152, %v178
  %v220 = vmul.f32 %v153, %v178
  %v221 = vmul.f32 %v154, %v178
  %v222 = vmul.f32 %v155, %v178
  %v223 = vmul.f32 %v156, %v178
  %v224 = vmul.f32 %v157, %v178
  %v225 = vmul.f32 %v158, %v178
  %v226 = vmul.f32 %v159, %v178
  %v227 = vmul.f32 %v160, %v178
  %v228 = vmul.f32 %v161, %v178
  %v229 = vmul.f32 %v162, %v178
  %v230 = vmul.f32 %v163, %v178
  %v231 = vmul.f32 %v164, %v178
  %v232 = vmul.f32 %v165, %v178
  %v233 = vmul.f32 %v166, %v178
  %v234 = vmul.f32 %v167, %v178
  %v235 = vmul.f32 %v168, %v178
  %v236 = vmul.f32 %v169, %v178
  %v237 = vmul.f32 %v170, %v178
  %v238 = vmul.f32 %v171, %v178
  %v239 = vmul.f32 %v172, %v178
  %v240 = vmul.f32 %v173, %v178
  %v241 = vmul.f32 %v174, %v178
  %v242 = vmul.f32 %v175, %v178
  %v243 = vmul.f32 %v176, %v178
  %v245 = vperm.slane %v48, 0
  %v247 = vadd.f32 %v180, %v245
  %v248 = vadd.f32 %v181, %v245
  %v249 = vadd.f32 %v182, %v245
  %v250 = vadd.f32 %v183, %v245
  %v251 = vadd.f32 %v184, %v245
  %v252 = vadd.f32 %v185, %v245
  %v253 = vadd.f32 %v186, %v245
  %v254 = vadd.f32 %v187, %v245
  %v255 = vadd.f32 %v188, %v245
  %v256 = vadd.f32 %v189, %v245
  %v257 = vadd.f32 %v190, %v245
  %v258 = vadd.f32 %v191, %v245
  %v259 = vadd.f32 %v192, %v245
  %v260 = vadd.f32 %v193, %v245
  %v261 = vadd.f32 %v194, %v245
  %v262 = vadd.f32 %v195, %v245
  %v263 = vadd.f32 %v196, %v245
  %v264 = vadd.f32 %v197, %v245
  %v265 = vadd.f32 %v198, %v245
  %v266 = vadd.f32 %v199, %v245
  %v267 = vadd.f32 %v200, %v245
  %v268 = vadd.f32 %v201, %v245
  %v269 = vadd.f32 %v202, %v245
  %v270 = vadd.f32 %v203, %v245
  %v271 = vadd.f32 %v204, %v245
  %v272 = vadd.f32 %v205, %v245
  %v273 = vadd.f32 %v206, %v245
  %v274 = vadd.f32 %v207, %v245
  %v275 = vadd.f32 %v208, %v245
  %v276 = vadd.f32 %v209, %v245
  %v277 = vadd.f32 %v210, %v245
  %v278 = vadd.f32 %v211, %v245
  %v279 = vadd.f32 %v212, %v245
  %v280 = vadd.f32 %v213, %v245
  %v281 = vadd.f32 %v214, %v245
  %v282 = vadd.f32 %v215, %v245
  %v283 = vadd.f32 %v216, %v245
  %v284 = vadd.f32 %v217, %v245
  %v285 = vadd.f32 %v218, %v245
  %v286 = vadd.f32 %v219, %v245
  %v287 = vadd.f32 %v220, %v245
  %v288 = vadd.f32 %v221, %v245
  %v289 = vadd.f32 %v222, %v245
  %v290 = vadd.f32 %v223, %v245
  %v291 = vadd.f32 %v224, %v245
  %v292 = vadd.f32 %v225, %v245
  %v293 = vadd.f32 %v226, %v245
  %v294 = vadd.f32 %v227, %v245
  %v295 = vadd.f32 %v228, %v245
  %v296 = vadd.f32 %v229, %v245
  %v297 = vadd.f32 %v230, %v245
  %v298 = vadd.f32 %v231, %v245
  %v299 = vadd.f32 %v232, %v245
  %v300 = vadd.f32 %v233, %v245
  %v301 = vadd.f32 %v234, %v245
  %v302 = vadd.f32 %v235, %v245
  %v303 = vadd.f32 %v236, %v245
  %v304 = vadd.f32 %v237, %v245
  %v305 = vadd.f32 %v238, %v245
  %v306 = vadd.f32 %v239, %v245
  %v307 = vadd.f32 %v240, %v245
  %v308 = vadd.f32 %v241, %v245
  %v309 = vadd.f32 %v242, %v245
  %v310 = vadd.f32 %v243, %v245
  %v311 = vmax.f32 %v247, 0.0
  %v312 = vmax.f32 %v248, 0.0
  %v313 = vmax.f32 %v249, 0.0
  %v314 = vmax.f32 %v250, 0.0
  %v315 = vmax.f32 %v251, 0.0
  %v316 = vmax.f32 %v252, 0.0
  %v317 = vmax.f32 %v253, 0.0
  %v318 = vmax.f32 %v254, 0.0
  %v319 = vmax.f32 %v255, 0.0
  %v320 = vmax.f32 %v256, 0.0
  %v321 = vmax.f32 %v257, 0.0
  %v322 = vmax.f32 %v258, 0.0
  %v323 = vmax.f32 %v259, 0.0
  %v324 = vmax.f32 %v260, 0.0
  %v325 = vmax.f32 %v261, 0.0
  %v326 = vmax.f32 %v262, 0.0
  %v327 = vmax.f32 %v263, 0.0
  %v328 = vmax.f32 %v264, 0.0
  %v329 = vmax.f32 %v265, 0.0
  %v330 = vmax.f32 %v266, 0.0
  %v331 = vmax.f32 %v267, 0.0
  %v332 = vmax.f32 %v268, 0.0
  %v333 = vmax.f32 %v269, 0.0
  %v334 = vmax.f32 %v270, 0.0
  %v335 = vmax.f32 %v271, 0.0
  %v336 = vmax.f32 %v272, 0.0
  %v337 = vmax.f32 %v273, 0.0
  %v338 = vmax.f32 %v274, 0.0
  %v339 = vmax.f32 %v275, 0.0
  %v340 = vmax.f32 %v276, 0.0
  %v341 = vmax.f32 %v277, 0.0
  %v342 = vmax.f32 %v278, 0.0
  %v343 = vmax.f32 %v279, 0.0
  %v344 = vmax.f32 %v280, 0.0
  %v345 = vmax.f32 %v281, 0.0
  %v346 = vmax.f32 %v282, 0.0
  %v347 = vmax.f32 %v283, 0.0
  %v348 = vmax.f32 %v284, 0.0
  %v349 = vmax.f32 %v285, 0.0
  %v350 = vmax.f32 %v286, 0.0
  %v351 = vmax.f32 %v287, 0.0
  %v352 = vmax.f32 %v288, 0.0
  %v353 = vmax.f32 %v289, 0.0
  %v354 = vmax.f32 %v290, 0.0
  %v355 = vmax.f32 %v291, 0.0
  %v356 = vmax.f32 %v292, 0.0
  %v357 = vmax.f32 %v293, 0.0
  %v358 = vmax.f32 %v294, 0.0
  %v359 = vmax.f32 %v295, 0.0
  %v360 = vmax.f32 %v296, 0.0
  %v361 = vmax.f32 %v297, 0.0
  %v362 = vmax.f32 %v298, 0.0
  %v363 = vmax.f32 %v299, 0.0
  %v364 = vmax.f32 %v300, 0.0
  %v365 = vmax.f32 %v301, 0.0
  %v366 = vmax.f32 %v302, 0.0
  %v367 = vmax.f32 %v303, 0.0
  %v368 = vmax.f32 %v304, 0.0
  %v369 = vmax.f32 %v305, 0.0
  %v370 = vmax.f32 %v306, 0.0
  %v371 = vmax.f32 %v307, 0.0
  %v372 = vmax.f32 %v308, 0.0
  %v373 = vmax.f32 %v309, 0.0
  %v374 = vmax.f32 %v310, 0.0
  %v375 = vpack.c.bf16 %v312, %v311
  %v376 = vpack.c.bf16 %v314, %v313
  %v377 = vpack.c.bf16 %v316, %v315
  %v378 = vpack.c.bf16 %v318, %v317
  %v379 = vpack.c.bf16 %v320, %v319
  %v380 = vpack.c.bf16 %v322, %v321
  %v381 = vpack.c.bf16 %v324, %v323
  %v382 = vpack.c.bf16 %v326, %v325
  %v383 = vpack.c.bf16 %v328, %v327
  %v384 = vpack.c.bf16 %v330, %v329
  %v385 = vpack.c.bf16 %v332, %v331
  %v386 = vpack.c.bf16 %v334, %v333
  %v387 = vpack.c.bf16 %v336, %v335
  %v388 = vpack.c.bf16 %v338, %v337
  %v389 = vpack.c.bf16 %v340, %v339
  %v390 = vpack.c.bf16 %v342, %v341
  %v391 = vpack.c.bf16 %v344, %v343
  %v392 = vpack.c.bf16 %v346, %v345
  %v393 = vpack.c.bf16 %v348, %v347
  %v394 = vpack.c.bf16 %v350, %v349
  %v395 = vpack.c.bf16 %v352, %v351
  %v396 = vpack.c.bf16 %v354, %v353
  %v397 = vpack.c.bf16 %v356, %v355
  %v398 = vpack.c.bf16 %v358, %v357
  %v399 = vpack.c.bf16 %v360, %v359
  %v400 = vpack.c.bf16 %v362, %v361
  %v401 = vpack.c.bf16 %v364, %v363
  %v402 = vpack.c.bf16 %v366, %v365
  %v403 = vpack.c.bf16 %v368, %v367
  %v404 = vpack.c.bf16 %v370, %v369
  %v405 = vpack.c.bf16 %v372, %v371
  %v406 = vpack.c.bf16 %v374, %v373
  %v407 = vld [vmem:[%s5] sm:$0xf]
  %v408 = vld [vmem:[%s5 + $0x4] sm:$0xf]
  %v409 = vld [vmem:[%s5 + $0x8] sm:$0xf]
  %v410 = vld [vmem:[%s5 + $0xc] sm:$0xf]
  %v411 = vld [vmem:[%s5 + $0x10] sm:$0xf]
  %v412 = vld [vmem:[%s5 + $0x14] sm:$0xf]
  %v413 = vld [vmem:[%s5 + $0x18] sm:$0xf]
  %v414 = vld [vmem:[%s5 + $0x1c] sm:$0xf]
  %v415 = vld [vmem:[%s5 + $0x20] sm:$0xf]
  %v416 = vld [vmem:[%s5 + $0x24] sm:$0xf]
  %v417 = vld [vmem:[%s5 + $0x28] sm:$0xf]
  %v418 = vld [vmem:[%s5 + $0x2c] sm:$0xf]
  %v419 = vld [vmem:[%s5 + $0x30] sm:$0xf]
  %v420 = vld [vmem:[%s5 + $0x34] sm:$0xf]
  %v421 = vld [vmem:[%s5 + $0x38] sm:$0xf]
  %v422 = vld [vmem:[%s5 + $0x3c] sm:$0xf]
  %v439 = vunpack.c.l.b16 %v407
  %v440 = vunpack.c.l.b16 %v408
  %v441 = vunpack.c.l.b16 %v409
  %v442 = vunpack.c.l.b16 %v410
  %v443 = vunpack.c.l.b16 %v411
  %v444 = vunpack.c.l.b16 %v412
  %v445 = vunpack.c.l.b16 %v413
  %v446 = vunpack.c.l.b16 %v414
  %v447 = vunpack.c.l.b16 %v415
  %v448 = vunpack.c.l.b16 %v416
  %v449 = vunpack.c.l.b16 %v417
  %v450 = vunpack.c.l.b16 %v418
  %v451 = vunpack.c.l.b16 %v419
  %v452 = vunpack.c.l.b16 %v420
  %v453 = vunpack.c.l.b16 %v421
  %v454 = vunpack.c.l.b16 %v422
  %v455 = vpack.c.b16 %v440, %v439
  %v456 = vpack.c.b16 %v442, %v441
  %v457 = vpack.c.b16 %v444, %v443
  %v458 = vpack.c.b16 %v446, %v445
  %v459 = vpack.c.b16 %v448, %v447
  %v460 = vpack.c.b16 %v450, %v449
  %v461 = vpack.c.b16 %v452, %v451
  %v462 = vpack.c.b16 %v454, %v453
  %471 = vmatpush.bf16.msra.mxu0 %v462
  %472 = vmatpush.bf16.msra.mxu0 %v461
  %473 = vmatpush.bf16.msra.mxu0 %v460
  %474 = vmatpush.bf16.msra.mxu0 %v459
  %475 = vmatpush.bf16.msra.mxu0 %v458
  %476 = vmatpush.bf16.msra.mxu0 %v457
  %477 = vmatpush.bf16.msra.mxu0 %v456
  %478 = vmatpush.bf16.msra.mxu0 %v455
  %479 = vmatmul.bf16.gmra.mxu0 %v375
  %v480 = vpop.f32.mrf.mxu0
  %v481 = vadd.f32 0.0, %v480
  %v482 = vpop.f32.mrf.mxu0
  %v483 = vadd.f32 0.0, %v482
  %484 = vmatmul.bf16.gmra.mxu0 %v376
  %v485 = vpop.f32.mrf.mxu0
  %v486 = vadd.f32 0.0, %v485
  %v487 = vpop.f32.mrf.mxu0
  %v488 = vadd.f32 0.0, %v487
  %489 = vmatmul.bf16.gmra.mxu0 %v377
  %v490 = vpop.f32.mrf.mxu0
  %v491 = vadd.f32 0.0, %v490
  %v492 = vpop.f32.mrf.mxu0
  %v493 = vadd.f32 0.0, %v492
  %494 = vmatmul.bf16.gmra.mxu0 %v378
  %v495 = vpop.f32.mrf.mxu0
  %v496 = vadd.f32 0.0, %v495
  %v497 = vpop.f32.mrf.mxu0
  %v498 = vadd.f32 0.0, %v497
  %499 = vmatmul.bf16.gmra.mxu0 %v379
  %v500 = vpop.f32.mrf.mxu0
  %v501 = vadd.f32 0.0, %v500
  %v502 = vpop.f32.mrf.mxu0
  %v503 = vadd.f32 0.0, %v502
  %504 = vmatmul.bf16.gmra.mxu0 %v380
  %v505 = vpop.f32.mrf.mxu0
  %v506 = vadd.f32 0.0, %v505
  %v507 = vpop.f32.mrf.mxu0
  %v508 = vadd.f32 0.0, %v507
  %509 = vmatmul.bf16.gmra.mxu0 %v381
  %v510 = vpop.f32.mrf.mxu0
  %v511 = vadd.f32 0.0, %v510
  %v512 = vpop.f32.mrf.mxu0
  %v513 = vadd.f32 0.0, %v512
  %514 = vmatmul.bf16.gmra.mxu0 %v382
  %v515 = vpop.f32.mrf.mxu0
  %v516 = vadd.f32 0.0, %v515
  %v517 = vpop.f32.mrf.mxu0
  %v518 = vadd.f32 0.0, %v517
  %519 = vmatmul.bf16.gmra.mxu0 %v383
  %v520 = vpop.f32.mrf.mxu0
  %v521 = vadd.f32 0.0, %v520
  %v522 = vpop.f32.mrf.mxu0
  %v523 = vadd.f32 0.0, %v522
  %524 = vmatmul.bf16.gmra.mxu0 %v384
  %v525 = vpop.f32.mrf.mxu0
  %v526 = vadd.f32 0.0, %v525
  %v527 = vpop.f32.mrf.mxu0
  %v528 = vadd.f32 0.0, %v527
  %529 = vmatmul.bf16.gmra.mxu0 %v385
  %v530 = vpop.f32.mrf.mxu0
  %v531 = vadd.f32 0.0, %v530
  %v532 = vpop.f32.mrf.mxu0
  %v533 = vadd.f32 0.0, %v532
  %534 = vmatmul.bf16.gmra.mxu0 %v386
  %v535 = vpop.f32.mrf.mxu0
  %v536 = vadd.f32 0.0, %v535
  %v537 = vpop.f32.mrf.mxu0
  %v538 = vadd.f32 0.0, %v537
  %539 = vmatmul.bf16.gmra.mxu0 %v387
  %v540 = vpop.f32.mrf.mxu0
  %v541 = vadd.f32 0.0, %v540
  %v542 = vpop.f32.mrf.mxu0
  %v543 = vadd.f32 0.0, %v542
  %544 = vmatmul.bf16.gmra.mxu0 %v388
  %v545 = vpop.f32.mrf.mxu0
  %v546 = vadd.f32 0.0, %v545
  %v547 = vpop.f32.mrf.mxu0
  %v548 = vadd.f32 0.0, %v547
  %549 = vmatmul.bf16.gmra.mxu0 %v389
  %v550 = vpop.f32.mrf.mxu0
  %v551 = vadd.f32 0.0, %v550
  %v552 = vpop.f32.mrf.mxu0
  %v553 = vadd.f32 0.0, %v552
  %554 = vmatmul.bf16.gmra.mxu0 %v390
  %v555 = vpop.f32.mrf.mxu0
  %v556 = vadd.f32 0.0, %v555
  %v557 = vpop.f32.mrf.mxu0
  %v558 = vadd.f32 0.0, %v557
  %559 = vmatmul.bf16.gmra.mxu0 %v391
  %v560 = vpop.f32.mrf.mxu0
  %v561 = vadd.f32 0.0, %v560
  %v562 = vpop.f32.mrf.mxu0
  %v563 = vadd.f32 0.0, %v562
  %564 = vmatmul.bf16.gmra.mxu0 %v392
  %v565 = vpop.f32.mrf.mxu0
  %v566 = vadd.f32 0.0, %v565
  %v567 = vpop.f32.mrf.mxu0
  %v568 = vadd.f32 0.0, %v567
  %569 = vmatmul.bf16.gmra.mxu0 %v393
  %v570 = vpop.f32.mrf.mxu0
  %v571 = vadd.f32 0.0, %v570
  %v572 = vpop.f32.mrf.mxu0
  %v573 = vadd.f32 0.0, %v572
  %574 = vmatmul.bf16.gmra.mxu0 %v394
  %v575 = vpop.f32.mrf.mxu0
  %v576 = vadd.f32 0.0, %v575
  %v577 = vpop.f32.mrf.mxu0
  %v578 = vadd.f32 0.0, %v577
  %579 = vmatmul.bf16.gmra.mxu0 %v395
  %v580 = vpop.f32.mrf.mxu0
  %v581 = vadd.f32 0.0, %v580
  %v582 = vpop.f32.mrf.mxu0
  %v583 = vadd.f32 0.0, %v582
  %584 = vmatmul.bf16.gmra.mxu0 %v396
  %v585 = vpop.f32.mrf.mxu0
  %v586 = vadd.f32 0.0, %v585
  %v587 = vpop.f32.mrf.mxu0
  %v588 = vadd.f32 0.0, %v587
  %589 = vmatmul.bf16.gmra.mxu0 %v397
  %v590 = vpop.f32.mrf.mxu0
  %v591 = vadd.f32 0.0, %v590
  %v592 = vpop.f32.mrf.mxu0
  %v593 = vadd.f32 0.0, %v592
  %594 = vmatmul.bf16.gmra.mxu0 %v398
  %v595 = vpop.f32.mrf.mxu0
  %v596 = vadd.f32 0.0, %v595
  %v597 = vpop.f32.mrf.mxu0
  %v598 = vadd.f32 0.0, %v597
  %599 = vmatmul.bf16.gmra.mxu0 %v399
  %v600 = vpop.f32.mrf.mxu0
  %v601 = vadd.f32 0.0, %v600
  %v602 = vpop.f32.mrf.mxu0
  %v603 = vadd.f32 0.0, %v602
  %604 = vmatmul.bf16.gmra.mxu0 %v400
  %v605 = vpop.f32.mrf.mxu0
  %v606 = vadd.f32 0.0, %v605
  %v607 = vpop.f32.mrf.mxu0
  %v608 = vadd.f32 0.0, %v607
  %609 = vmatmul.bf16.gmra.mxu0 %v401
  %v610 = vpop.f32.mrf.mxu0
  %v611 = vadd.f32 0.0, %v610
  %v612 = vpop.f32.mrf.mxu0
  %v613 = vadd.f32 0.0, %v612
  %614 = vmatmul.bf16.gmra.mxu0 %v402
  %v615 = vpop.f32.mrf.mxu0
  %v616 = vadd.f32 0.0, %v615
  %v617 = vpop.f32.mrf.mxu0
  %v618 = vadd.f32 0.0, %v617
  %619 = vmatmul.bf16.gmra.mxu0 %v403
  %v620 = vpop.f32.mrf.mxu0
  %v621 = vadd.f32 0.0, %v620
  %v622 = vpop.f32.mrf.mxu0
  %v623 = vadd.f32 0.0, %v622
  %624 = vmatmul.bf16.gmra.mxu0 %v404
  %v625 = vpop.f32.mrf.mxu0
  %v626 = vadd.f32 0.0, %v625
  %v627 = vpop.f32.mrf.mxu0
  %v628 = vadd.f32 0.0, %v627
  %629 = vmatmul.bf16.gmra.mxu0 %v405
  %v630 = vpop.f32.mrf.mxu0
  %v631 = vadd.f32 0.0, %v630
  %v632 = vpop.f32.mrf.mxu0
  %v633 = vadd.f32 0.0, %v632
  %634 = vmatmul.bf16.gmra.mxu0 %v406
  %v635 = vpop.f32.mrf.mxu0
  %v636 = vadd.f32 0.0, %v635
  %v637 = vpop.f32.mrf.mxu0
  %v638 = vadd.f32 0.0, %v637
  %639 = vdwg.mxu0
  %v640 = vpack.c.bf16 %v481, %v481
  %v641 = vpack.c.bf16 %v483, %v483
  %v642 = vpack.c.bf16 %v486, %v486
  %v643 = vpack.c.bf16 %v488, %v488
  %v644 = vpack.c.bf16 %v491, %v491
  %v645 = vpack.c.bf16 %v493, %v493
  %v646 = vpack.c.bf16 %v496, %v496
  %v647 = vpack.c.bf16 %v498, %v498
  %v648 = vpack.c.bf16 %v501, %v501
  %v649 = vpack.c.bf16 %v503, %v503
  %v650 = vpack.c.bf16 %v506, %v506
  %v651 = vpack.c.bf16 %v508, %v508
  %v652 = vpack.c.bf16 %v511, %v511
  %v653 = vpack.c.bf16 %v513, %v513
  %v654 = vpack.c.bf16 %v516, %v516
  %v655 = vpack.c.bf16 %v518, %v518
  %v656 = vpack.c.bf16 %v521, %v521
  %v657 = vpack.c.bf16 %v523, %v523
  %v658 = vpack.c.bf16 %v526, %v526
  %v659 = vpack.c.bf16 %v528, %v528
  %v660 = vpack.c.bf16 %v531, %v531
  %v661 = vpack.c.bf16 %v533, %v533
  %v662 = vpack.c.bf16 %v536, %v536
  %v663 = vpack.c.bf16 %v538, %v538
  %v664 = vpack.c.bf16 %v541, %v541
  %v665 = vpack.c.bf16 %v543, %v543
  %v666 = vpack.c.bf16 %v546, %v546
  %v667 = vpack.c.bf16 %v548, %v548
  %v668 = vpack.c.bf16 %v551, %v551
  %v669 = vpack.c.bf16 %v553, %v553
  %v670 = vpack.c.bf16 %v556, %v556
  %v671 = vpack.c.bf16 %v558, %v558
  %v672 = vpack.c.bf16 %v561, %v561
  %v673 = vpack.c.bf16 %v563, %v563
  %v674 = vpack.c.bf16 %v566, %v566
  %v675 = vpack.c.bf16 %v568, %v568
  %v676 = vpack.c.bf16 %v571, %v571
  %v677 = vpack.c.bf16 %v573, %v573
  %v678 = vpack.c.bf16 %v576, %v576
  %v679 = vpack.c.bf16 %v578, %v578
  %v680 = vpack.c.bf16 %v581, %v581
  %v681 = vpack.c.bf16 %v583, %v583
  %v682 = vpack.c.bf16 %v586, %v586
  %v683 = vpack.c.bf16 %v588, %v588
  %v684 = vpack.c.bf16 %v591, %v591
  %v685 = vpack.c.bf16 %v593, %v593
  %v686 = vpack.c.bf16 %v596, %v596
  %v687 = vpack.c.bf16 %v598, %v598
  %v688 = vpack.c.bf16 %v601, %v601
  %v689 = vpack.c.bf16 %v603, %v603
  %v690 = vpack.c.bf16 %v606, %v606
  %v691 = vpack.c.bf16 %v608, %v608
  %v692 = vpack.c.bf16 %v611, %v611
  %v693 = vpack.c.bf16 %v613, %v613
  %v694 = vpack.c.bf16 %v616, %v616
  %v695 = vpack.c.bf16 %v618, %v618
  %v696 = vpack.c.bf16 %v621, %v621
  %v697 = vpack.c.bf16 %v623, %v623
  %v698 = vpack.c.bf16 %v626, %v626
  %v699 = vpack.c.bf16 %v628, %v628
  %v700 = vpack.c.bf16 %v631, %v631
  %v701 = vpack.c.bf16 %v633, %v633
  %v702 = vpack.c.bf16 %v636, %v636
  %v703 = vpack.c.bf16 %v638, %v638
  %704 = vst [vmem:[%s6] sm:$0xf] %v640
  %705 = vst [vmem:[%s6 + $0x4] sm:$0xf] %v641
  %706 = vst [vmem:[%s6 + $0x8] sm:$0xf] %v642
  %707 = vst [vmem:[%s6 + $0xc] sm:$0xf] %v643
  %708 = vst [vmem:[%s6 + $0x10] sm:$0xf] %v644
  %709 = vst [vmem:[%s6 + $0x14] sm:$0xf] %v645
  %710 = vst [vmem:[%s6 + $0x18] sm:$0xf] %v646
  %711 = vst [vmem:[%s6 + $0x1c] sm:$0xf] %v647
  %712 = vst [vmem:[%s6 + $0x20] sm:$0xf] %v648
  %713 = vst [vmem:[%s6 + $0x24] sm:$0xf] %v649
  %714 = vst [vmem:[%s6 + $0x28] sm:$0xf] %v650
  %715 = vst [vmem:[%s6 + $0x2c] sm:$0xf] %v651
  %716 = vst [vmem:[%s6 + $0x30] sm:$0xf] %v652
  %717 = vst [vmem:[%s6 + $0x34] sm:$0xf] %v653
  %718 = vst [vmem:[%s6 + $0x38] sm:$0xf] %v654
  %719 = vst [vmem:[%s6 + $0x3c] sm:$0xf] %v655
  %720 = vst [vmem:[%s6 + $0x40] sm:$0xf] %v656
  %721 = vst [vmem:[%s6 + $0x44] sm:$0xf] %v657
  %722 = vst [vmem:[%s6 + $0x48] sm:$0xf] %v658
  %723 = vst [vmem:[%s6 + $0x4c] sm:$0xf] %v659
  %724 = vst [vmem:[%s6 + $0x50] sm:$0xf] %v660
  %725 = vst [vmem:[%s6 + $0x54] sm:$0xf] %v661
  %726 = vst [vmem:[%s6 + $0x58] sm:$0xf] %v662
  %727 = vst [vmem:[%s6 + $0x5c] sm:$0xf] %v663
  %728 = vst [vmem:[%s6 + $0x60] sm:$0xf] %v664
  %729 = vst [vmem:[%s6 + $0x64] sm:$0xf] %v665
  %730 = vst [vmem:[%s6 + $0x68] sm:$0xf] %v666
  %731 = vst [vmem:[%s6 + $0x6c] sm:$0xf] %v667
  %732 = vst [vmem:[%s6 + $0x70] sm:$0xf] %v668
  %733 = vst [vmem:[%s6 + $0x74] sm:$0xf] %v669
  %734 = vst [vmem:[%s6 + $0x78] sm:$0xf] %v670
  %735 = vst [vmem:[%s6 + $0x7c] sm:$0xf] %v671
  %736 = vst [vmem:[%s6 + $0x80] sm:$0xf] %v672
  %737 = vst [vmem:[%s6 + $0x84] sm:$0xf] %v673
  %738 = vst [vmem:[%s6 + $0x88] sm:$0xf] %v674
  %739 = vst [vmem:[%s6 + $0x8c] sm:$0xf] %v675
  %740 = vst [vmem:[%s6 + $0x90] sm:$0xf] %v676
  %741 = vst [vmem:[%s6 + $0x94] sm:$0xf] %v677
  %742 = vst [vmem:[%s6 + $0x98] sm:$0xf] %v678
  %743 = vst [vmem:[%s6 + $0x9c] sm:$0xf] %v679
  %744 = vst [vmem:[%s6 + $0xa0] sm:$0xf] %v680
  %745 = vst [vmem:[%s6 + $0xa4] sm:$0xf] %v681
  %746 = vst [vmem:[%s6 + $0xa8] sm:$0xf] %v682
  %747 = vst [vmem:[%s6 + $0xac] sm:$0xf] %v683
  %748 = vst [vmem:[%s6 + $0xb0] sm:$0xf] %v684
  %749 = vst [vmem:[%s6 + $0xb4] sm:$0xf] %v685
  %750 = vst [vmem:[%s6 + $0xb8] sm:$0xf] %v686
  %751 = vst [vmem:[%s6 + $0xbc] sm:$0xf] %v687
  %752 = vst [vmem:[%s6 + $0xc0] sm:$0xf] %v688
  %753 = vst [vmem:[%s6 + $0xc4] sm:$0xf] %v689
  %754 = vst [vmem:[%s6 + $0xc8] sm:$0xf] %v690
  %755 = vst [vmem:[%s6 + $0xcc] sm:$0xf] %v691
  %756 = vst [vmem:[%s6 + $0xd0] sm:$0xf] %v692
  %757 = vst [vmem:[%s6 + $0xd4] sm:$0xf] %v693
  %758 = vst [vmem:[%s6 + $0xd8] sm:$0xf] %v694
  %759 = vst [vmem:[%s6 + $0xdc] sm:$0xf] %v695
  %760 = vst [vmem:[%s6 + $0xe0] sm:$0xf] %v696
  %761 = vst [vmem:[%s6 + $0xe4] sm:$0xf] %v697
  %762 = vst [vmem:[%s6 + $0xe8] sm:$0xf] %v698
  %763 = vst [vmem:[%s6 + $0xec] sm:$0xf] %v699
  %764 = vst [vmem:[%s6 + $0xf0] sm:$0xf] %v700
  %765 = vst [vmem:[%s6 + $0xf4] sm:$0xf] %v701
  %766 = vst [vmem:[%s6 + $0xf8] sm:$0xf] %v702
  %767 = vst [vmem:[%s6 + $0xfc] sm:$0xf] %v703
  %v768 = vunpack.c.l.bf16 %v640
  %v769 = vunpack.c.l.bf16 %v641
  %v770 = vunpack.c.l.bf16 %v642
  %v771 = vunpack.c.l.bf16 %v643
  %v772 = vunpack.c.l.bf16 %v644
  %v773 = vunpack.c.l.bf16 %v645
  %v774 = vunpack.c.l.bf16 %v646
  %v775 = vunpack.c.l.bf16 %v647
  %v776 = vunpack.c.l.bf16 %v648
  %v777 = vunpack.c.l.bf16 %v649
  %v778 = vunpack.c.l.bf16 %v650
  %v779 = vunpack.c.l.bf16 %v651
  %v780 = vunpack.c.l.bf16 %v652
  %v781 = vunpack.c.l.bf16 %v653
  %v782 = vunpack.c.l.bf16 %v654
  %v783 = vunpack.c.l.bf16 %v655
  %v784 = vunpack.c.l.bf16 %v656
  %v785 = vunpack.c.l.bf16 %v657
  %v786 = vunpack.c.l.bf16 %v658
  %v787 = vunpack.c.l.bf16 %v659
  %v788 = vunpack.c.l.bf16 %v660
  %v789 = vunpack.c.l.bf16 %v661
  %v790 = vunpack.c.l.bf16 %v662
  %v791 = vunpack.c.l.bf16 %v663
  %v792 = vunpack.c.l.bf16 %v664
  %v793 = vunpack.c.l.bf16 %v665
  %v794 = vunpack.c.l.bf16 %v666
  %v795 = vunpack.c.l.bf16 %v667
  %v796 = vunpack.c.l.bf16 %v668
  %v797 = vunpack.c.l.bf16 %v669
  %v798 = vunpack.c.l.bf16 %v670
  %v799 = vunpack.c.l.bf16 %v671
  %v800 = vunpack.c.l.bf16 %v672
  %v801 = vunpack.c.l.bf16 %v673
  %v802 = vunpack.c.l.bf16 %v674
  %v803 = vunpack.c.l.bf16 %v675
  %v804 = vunpack.c.l.bf16 %v676
  %v805 = vunpack.c.l.bf16 %v677
  %v806 = vunpack.c.l.bf16 %v678
  %v807 = vunpack.c.l.bf16 %v679
  %v808 = vunpack.c.l.bf16 %v680
  %v809 = vunpack.c.l.bf16 %v681
  %v810 = vunpack.c.l.bf16 %v682
  %v811 = vunpack.c.l.bf16 %v683
  %v812 = vunpack.c.l.bf16 %v684
  %v813 = vunpack.c.l.bf16 %v685
  %v814 = vunpack.c.l.bf16 %v686
  %v815 = vunpack.c.l.bf16 %v687
  %v816 = vunpack.c.l.bf16 %v688
  %v817 = vunpack.c.l.bf16 %v689
  %v818 = vunpack.c.l.bf16 %v690
  %v819 = vunpack.c.l.bf16 %v691
  %v820 = vunpack.c.l.bf16 %v692
  %v821 = vunpack.c.l.bf16 %v693
  %v822 = vunpack.c.l.bf16 %v694
  %v823 = vunpack.c.l.bf16 %v695
  %v824 = vunpack.c.l.bf16 %v696
  %v825 = vunpack.c.l.bf16 %v697
  %v826 = vunpack.c.l.bf16 %v698
  %v827 = vunpack.c.l.bf16 %v699
  %v828 = vunpack.c.l.bf16 %v700
  %v829 = vunpack.c.l.bf16 %v701
  %v830 = vunpack.c.l.bf16 %v702
  %v831 = vunpack.c.l.bf16 %v703
  %v832 = vadd.f32 %v768, %v769
  %v833 = vadd.f32 %v832, %v770
  %v834 = vadd.f32 %v833, %v771
  %v835 = vadd.f32 %v834, %v772
  %v836 = vadd.f32 %v835, %v773
  %v837 = vadd.f32 %v836, %v774
  %v838 = vadd.f32 %v837, %v775
  %v839 = vadd.f32 %v838, %v776
  %v840 = vadd.f32 %v839, %v777
  %v841 = vadd.f32 %v840, %v778
  %v842 = vadd.f32 %v841, %v779
  %v843 = vadd.f32 %v842, %v780
  %v844 = vadd.f32 %v843, %v781
  %v845 = vadd.f32 %v844, %v782
  %v846 = vadd.f32 %v845, %v783
  %v847 = vadd.f32 %v846, %v784
  %v848 = vadd.f32 %v847, %v785
  %v849 = vadd.f32 %v848, %v786
  %v850 = vadd.f32 %v849, %v787
  %v851 = vadd.f32 %v850, %v788
  %v852 = vadd.f32 %v851, %v789
  %v853 = vadd.f32 %v852, %v790
  %v854 = vadd.f32 %v853, %v791
  %v855 = vadd.f32 %v854, %v792
  %v856 = vadd.f32 %v855, %v793
  %v857 = vadd.f32 %v856, %v794
  %v858 = vadd.f32 %v857, %v795
  %v859 = vadd.f32 %v858, %v796
  %v860 = vadd.f32 %v859, %v797
  %v861 = vadd.f32 %v860, %v798
  %v862 = vadd.f32 %v861, %v799
  %v863 = vadd.f32 %v862, %v800
  %v864 = vadd.f32 %v863, %v801
  %v865 = vadd.f32 %v864, %v802
  %v866 = vadd.f32 %v865, %v803
  %v867 = vadd.f32 %v866, %v804
  %v868 = vadd.f32 %v867, %v805
  %v869 = vadd.f32 %v868, %v806
  %v870 = vadd.f32 %v869, %v807
  %v871 = vadd.f32 %v870, %v808
  %v872 = vadd.f32 %v871, %v809
  %v873 = vadd.f32 %v872, %v810
  %v874 = vadd.f32 %v873, %v811
  %v875 = vadd.f32 %v874, %v812
  %v876 = vadd.f32 %v875, %v813
  %v877 = vadd.f32 %v876, %v814
  %v878 = vadd.f32 %v877, %v815
  %v879 = vadd.f32 %v878, %v816
  %v880 = vadd.f32 %v879, %v817
  %v881 = vadd.f32 %v880, %v818
  %v882 = vadd.f32 %v881, %v819
  %v883 = vadd.f32 %v882, %v820
  %v884 = vadd.f32 %v883, %v821
  %v885 = vadd.f32 %v884, %v822
  %v886 = vadd.f32 %v885, %v823
  %v887 = vadd.f32 %v886, %v824
  %v888 = vadd.f32 %v887, %v825
  %v889 = vadd.f32 %v888, %v826
  %v890 = vadd.f32 %v889, %v827
  %v891 = vadd.f32 %v890, %v828
  %v892 = vadd.f32 %v891, %v829
  %v893 = vadd.f32 %v892, %v830
  %v894 = vadd.f32 %v893, %v831
  %v895 = vrot.slane %v894, 4
  %v896 = vadd.f32 %v894, %v895
  %v897 = vrot.slane %v896, 2
  %v898 = vadd.f32 %v896, %v897
  %v899 = vrot.slane %v898, 1
  %v900 = vadd.f32 %v898, %v899
  %901 = vst [vmem:[%s7] sm:$0x1] %v900
  %v902 = vmul.f32 %v768, %v768
  %v903 = vmul.f32 %v769, %v769
  %v904 = vmul.f32 %v770, %v770
  %v905 = vmul.f32 %v771, %v771
  %v906 = vmul.f32 %v772, %v772
  %v907 = vmul.f32 %v773, %v773
  %v908 = vmul.f32 %v774, %v774
  %v909 = vmul.f32 %v775, %v775
  %v910 = vmul.f32 %v776, %v776
  %v911 = vmul.f32 %v777, %v777
  %v912 = vmul.f32 %v778, %v778
  %v913 = vmul.f32 %v779, %v779
  %v914 = vmul.f32 %v780, %v780
  %v915 = vmul.f32 %v781, %v781
  %v916 = vmul.f32 %v782, %v782
  %v917 = vmul.f32 %v783, %v783
  %v918 = vmul.f32 %v784, %v784
  %v919 = vmul.f32 %v785, %v785
  %v920 = vmul.f32 %v786, %v786
  %v921 = vmul.f32 %v787, %v787
  %v922 = vmul.f32 %v788, %v788
  %v923 = vmul.f32 %v789, %v789
  %v924 = vmul.f32 %v790, %v790
  %v925 = vmul.f32 %v791, %v791
  %v926 = vmul.f32 %v792, %v792
  %v927 = vmul.f32 %v793, %v793
  %v928 = vmul.f32 %v794, %v794
  %v929 = vmul.f32 %v795, %v795
  %v930 = vmul.f32 %v796, %v796
  %v931 = vmul.f32 %v797, %v797
  %v932 = vmul.f32 %v798, %v798
  %v933 = vmul.f32 %v799, %v799
  %v934 = vmul.f32 %v800, %v800
  %v935 = vmul.f32 %v801, %v801
  %v936 = vmul.f32 %v802, %v802
  %v937 = vmul.f32 %v803, %v803
  %v938 = vmul.f32 %v804, %v804
  %v939 = vmul.f32 %v805, %v805
  %v940 = vmul.f32 %v806, %v806
  %v941 = vmul.f32 %v807, %v807
  %v942 = vmul.f32 %v808, %v808
  %v943 = vmul.f32 %v809, %v809
  %v944 = vmul.f32 %v810, %v810
  %v945 = vmul.f32 %v811, %v811
  %v946 = vmul.f32 %v812, %v812
  %v947 = vmul.f32 %v813, %v813
  %v948 = vmul.f32 %v814, %v814
  %v949 = vmul.f32 %v815, %v815
  %v950 = vmul.f32 %v816, %v816
  %v951 = vmul.f32 %v817, %v817
  %v952 = vmul.f32 %v818, %v818
  %v953 = vmul.f32 %v819, %v819
  %v954 = vmul.f32 %v820, %v820
  %v955 = vmul.f32 %v821, %v821
  %v956 = vmul.f32 %v822, %v822
  %v957 = vmul.f32 %v823, %v823
  %v958 = vmul.f32 %v824, %v824
  %v959 = vmul.f32 %v825, %v825
  %v960 = vmul.f32 %v826, %v826
  %v961 = vmul.f32 %v827, %v827
  %v962 = vmul.f32 %v828, %v828
  %v963 = vmul.f32 %v829, %v829
  %v964 = vmul.f32 %v830, %v830
  %v965 = vmul.f32 %v831, %v831
  %v966 = vadd.f32 %v902, %v903
  %v967 = vadd.f32 %v966, %v904
  %v968 = vadd.f32 %v967, %v905
  %v969 = vadd.f32 %v968, %v906
  %v970 = vadd.f32 %v969, %v907
  %v971 = vadd.f32 %v970, %v908
  %v972 = vadd.f32 %v971, %v909
  %v973 = vadd.f32 %v972, %v910
  %v974 = vadd.f32 %v973, %v911
  %v975 = vadd.f32 %v974, %v912
  %v976 = vadd.f32 %v975, %v913
  %v977 = vadd.f32 %v976, %v914
  %v978 = vadd.f32 %v977, %v915
  %v979 = vadd.f32 %v978, %v916
  %v980 = vadd.f32 %v979, %v917
  %v981 = vadd.f32 %v980, %v918
  %v982 = vadd.f32 %v981, %v919
  %v983 = vadd.f32 %v982, %v920
  %v984 = vadd.f32 %v983, %v921
  %v985 = vadd.f32 %v984, %v922
  %v986 = vadd.f32 %v985, %v923
  %v987 = vadd.f32 %v986, %v924
  %v988 = vadd.f32 %v987, %v925
  %v989 = vadd.f32 %v988, %v926
  %v990 = vadd.f32 %v989, %v927
  %v991 = vadd.f32 %v990, %v928
  %v992 = vadd.f32 %v991, %v929
  %v993 = vadd.f32 %v992, %v930
  %v994 = vadd.f32 %v993, %v931
  %v995 = vadd.f32 %v994, %v932
  %v996 = vadd.f32 %v995, %v933
  %v997 = vadd.f32 %v996, %v934
  %v998 = vadd.f32 %v997, %v935
  %v999 = vadd.f32 %v998, %v936
  %v1000 = vadd.f32 %v999, %v937
  %v1001 = vadd.f32 %v1000, %v938
  %v1002 = vadd.f32 %v1001, %v939
  %v1003 = vadd.f32 %v1002, %v940
  %v1004 = vadd.f32 %v1003, %v941
  %v1005 = vadd.f32 %v1004, %v942
  %v1006 = vadd.f32 %v1005, %v943
  %v1007 = vadd.f32 %v1006, %v944
  %v1008 = vadd.f32 %v1007, %v945
  %v1009 = vadd.f32 %v1008, %v946
  %v1010 = vadd.f32 %v1009, %v947
  %v1011 = vadd.f32 %v1010, %v948
  %v1012 = vadd.f32 %v1011, %v949
  %v1013 = vadd.f32 %v1012, %v950
  %v1014 = vadd.f32 %v1013, %v951
  %v1015 = vadd.f32 %v1014, %v952
  %v1016 = vadd.f32 %v1015, %v953
  %v1017 = vadd.f32 %v1016, %v954
  %v1018 = vadd.f32 %v1017, %v955
  %v1019 = vadd.f32 %v1018, %v956
  %v1020 = vadd.f32 %v1019, %v957
  %v1021 = vadd.f32 %v1020, %v958
  %v1022 = vadd.f32 %v1021, %v959
  %v1023 = vadd.f32 %v1022, %v960
  %v1024 = vadd.f32 %v1023, %v961
  %v1025 = vadd.f32 %v1024, %v962
  %v1026 = vadd.f32 %v1025, %v963
  %v1027 = vadd.f32 %v1026, %v964
  %v1028 = vadd.f32 %v1027, %v965
  %v1029 = vrot.slane %v1028, 4
  %v1030 = vadd.f32 %v1028, %v1029
  %v1031 = vrot.slane %v1030, 2
  %v1032 = vadd.f32 %v1030, %v1031
  %v1033 = vrot.slane %v1032, 1
  %v1034 = vadd.f32 %v1032, %v1033
  %1035 = vst [vmem:[%s8] sm:$0x1] %v1034
  // Predicated region
  $region26: #{block_forward.6} parent=0 // pred_check
    _
  $region27: #{block_forward.6} parent=0 // pred_check_branch
    %1037 = sbr.rel (0) target = $region29
  $region28: #{block_forward.6} parent=0 // pred_region
    _
  $region29: #{block_forward.6} parent=0 // pred_fallthru
    _
  // Predicated region
  $region30: #{block_forward.6} parent=0 // pred_check
    _
  $region31: #{block_forward.6} parent=0 // pred_check_branch
    %1039 = sbr.rel (0) target = $region33
  $region32: #{block_forward.6} parent=0 // pred_region
    _
  $region33: #{block_forward.6} parent=0 // pred_fallthru
    _
  // Predicated region
  $region34: #{block_forward.6} parent=0 // pred_check
    _
  $region35: #{block_forward.6} parent=0 // pred_check_branch
    %1041 = sbr.rel (0) target = $region37
  $region36: #{block_forward.6} parent=0 // pred_region
    _
  $region37: #{block_forward.6} parent=0 // pred_fallthru
    _
  // Predicated region
  $region38: #{block_forward.6} parent=0 // pred_check
    _
  $region39: #{block_forward.6} parent=0 // pred_check_branch
    %1043 = sbr.rel (0) target = $region41
  $region40: #{block_forward.6} parent=0 // pred_region
    _
  $region41: #{block_forward.6} parent=0 // pred_fallthru
    _
  // Predicated region
  $region42: #{block_forward.6} parent=0 // pred_check
    _
  $region43: #{block_forward.6} parent=0 // pred_check_branch
    %1045 = sbr.rel (0) target = $region45
  $region44: #{block_forward.6} parent=0 // pred_region
    _
  $region45: #{block_forward.6} parent=0 // pred_fallthru
    _
  // Predicated region
  $region46: #{block_forward.6} parent=0 // pred_check
    _
  $region47: #{block_forward.6} parent=0 // pred_check_branch
    %1047 = sbr.rel (0) target = $region49
  $region48: #{block_forward.6} parent=0 // pred_region
    _
  $region49: #{block_forward.6} parent=0 // pred_fallthru
    _

// kernel: block_forward.5
$region0: #{block_forward.5}
  #allocation0 [shape = 'u32[]', space=smem, size = 0x4, offset = 0x4, fixed_abs, tag = 'smem constant byte address 0x4 - core index']
  #allocation1 [shape = 'u32[72,128]{1,0:T(1,128)}', space=vmem, size = 0x9000, scoped, tag = 'internal scratch']
  #allocation2 [shape = 'f32[18,25,128]{2,1,0:T(8,128)}', space=vmem, size = 0x48000, scoped, tag = 'scratch operand']
  %s0 = inlined_call_operand.vmem [shape: bf16[2,16,16,128], index: 0, kind: input, shape index: {}]
  %s1 = inlined_call_operand.vmem [shape: f32[1,128], index: 1, kind: input, shape index: {}]
  %s2 = inlined_call_operand.vmem [shape: f32[1,128], index: 2, kind: input, shape index: {}]
  %s3 = inlined_call_operand.vmem [shape: f32[1,128], index: 3, kind: input, shape index: {}]
  %s4 = inlined_call_operand.vmem [shape: f32[1,128], index: 4, kind: input, shape index: {}]
  %s5 = inlined_call_operand.vmem [shape: f32[9,128], index: 5, kind: input, shape index: {}]
  %s6 = inlined_call_operand.vmem [shape: bf16[2,16,16,128], index: 6, kind: output, shape index: {0}]
  %s7 = inlined_call_operand.vmem [shape: f32[2,1,128], index: 7, kind: output, shape index: {1}]
  %s8 = inlined_call_operand.vmem [shape: f32[2,1,128], index: 8, kind: output, shape index: {2}]
  %9 = xla_tuple %s6, %s7, %s8
  %s10 = sld [smem:[#allocation0]]
  $region73: #{block_forward.5} parent=0
    _
  %s12 = ssub.s32 1, %s10
  %s13 = scalar_select 0, %s12, %s10
  loop: start=0, step=1, limit=4
  $region2: #{block_forward.5} parent=0 // loop_pre_header
    _
  $region3: #{block_forward.5} parent=0 // loop_header
    %s15 = sphi 0, %s19
    %p16 = scmp.ge.s32.totalorder %s15, 4
    %s25 = sphi 0, %s27
    %s28 = sphi 0, %s25
    %s29 = sphi 0, %s28
    %s45 = sphi 0, %s29
    %s49 = sphi 0, %s49
    %s51 = sphi 0, %s49
    %s52 = sphi 0, %s51
    %s66 = sphi 0, %s52
    %s70 = sphi 0, %s70
    %s72 = sphi 0, %s70
    %s73 = sphi 0, %s72
    %s87 = sphi 0, %s73
    %s91 = sphi 0, %s91
    %s93 = sphi 0, %s91
    %s94 = sphi 0, %s93
    %s108 = sphi 0, %s94
    %s112 = sphi 0, %s112
    %s114 = sphi 0, %s112
    %s115 = sphi 0, %s114
    %s129 = sphi 0, %s115
    %s133 = sphi 0, %s133
    %s135 = sphi 0, %s133
    %s136 = sphi 0, %s135
    %s150 = sphi 0, %s136
    %s156 = sphi 0, %s158
    %s159 = sphi 0, %s156
    %s160 = sphi 0, %s159
    %s176 = sphi 0, %s160
    %s182 = sphi 0, %s184
    %s185 = sphi 0, %s182
    %s186 = sphi 0, %s185
    %s202 = sphi 0, %s186
    %s208 = sphi 0, %s210
    %s211 = sphi 0, %s208
    %s212 = sphi 0, %s211
    %s228 = sphi 0, %s212
  $region4: #{block_forward.5} parent=0 // loop_header_branch
    %18 = sbr.rel (%p16) target = $region8
  $region5: #{block_forward.5} parent=0 // loop_body
    %s20 = ssub.s32 %s15, 1
    %s21 = ssub.s32 %s15, 2
    %s22 = sadd.s32 %s15, 1
    %s23 = ssub.s32 %s15, %s22
    %p24 = scmp.eq.s32.totalorder %s23, 0
    %s26 = sadd.s32 %s25, 1
    %s27 = scalar_select %p24, %s25, %s26
    %p30 = pneg %p24
    %p31 = scmp.eq.s32.totalorder %s15, 1
    %p32 = por %p30, %p31
    %p33 = scmp.ne.s32.totalorder %s25, %s28
    %p34 = scmp.eq.s32.totalorder %s15, 0
    %p35 = por %p33, %p34
    %p36 = scmp.ne.s32.totalorder %s25, %s28
    %p37 = scmp.eq.s32.totalorder %s20, 1
    %p38 = por %p36, %p37
    %p39 = scmp.ne.s32.totalorder %s28, %s29
    %p40 = scmp.eq.s32.totalorder %s20, 0
    %p41 = por %p39, %p40
    %p42 = scmp.ne.s32.totalorder %s28, %s29
    %p43 = scmp.eq.s32.totalorder %s21, 1
    %p44 = por %p42, %p43
    %p46 = scmp.ne.s32.totalorder %s29, %s45
    %p47 = scmp.eq.s32.totalorder %s21, 0
    %p48 = por %p46, %p47
    %s50 = sadd.s32 %s49, 1
    %p53 = scmp.eq.s32.totalorder %s15, 1
    %p54 = scmp.ne.s32.totalorder %s49, %s51
    %p55 = scmp.eq.s32.totalorder %s15, 0
    %p56 = por %p54, %p55
    %p57 = scmp.ne.s32.totalorder %s49, %s51
    %p58 = scmp.eq.s32.totalorder %s20, 1
    %p59 = por %p57, %p58
    %p60 = scmp.ne.s32.totalorder %s51, %s52
    %p61 = scmp.eq.s32.totalorder %s20, 0
    %p62 = por %p60, %p61
    %p63 = scmp.ne.s32.totalorder %s51, %s52
    %p64 = scmp.eq.s32.totalorder %s21, 1
    %p65 = por %p63, %p64
    %p67 = scmp.ne.s32.totalorder %s52, %s66
    %p68 = scmp.eq.s32.totalorder %s21, 0
    %p69 = por %p67, %p68
    %s71 = sadd.s32 %s70, 1
    %p74 = scmp.eq.s32.totalorder %s15, 1
    %p75 = scmp.ne.s32.totalorder %s70, %s72
    %p76 = scmp.eq.s32.totalorder %s15, 0
    %p77 = por %p75, %p76
    %p78 = scmp.ne.s32.totalorder %s70, %s72
    %p79 = scmp.eq.s32.totalorder %s20, 1
    %p80 = por %p78, %p79
    %p81 = scmp.ne.s32.totalorder %s72, %s73
    %p82 = scmp.eq.s32.totalorder %s20, 0
    %p83 = por %p81, %p82
    %p84 = scmp.ne.s32.totalorder %s72, %s73
    %p85 = scmp.eq.s32.totalorder %s21, 1
    %p86 = por %p84, %p85
    %p88 = scmp.ne.s32.totalorder %s73, %s87
    %p89 = scmp.eq.s32.totalorder %s21, 0
    %p90 = por %p88, %p89
    %s92 = sadd.s32 %s91, 1
    %p95 = scmp.eq.s32.totalorder %s15, 1
    %p96 = scmp.ne.s32.totalorder %s91, %s93
    %p97 = scmp.eq.s32.totalorder %s15, 0
    %p98 = por %p96, %p97
    %p99 = scmp.ne.s32.totalorder %s91, %s93
    %p100 = scmp.eq.s32.totalorder %s20, 1
    %p101 = por %p99, %p100
    %p102 = scmp.ne.s32.totalorder %s93, %s94
    %p103 = scmp.eq.s32.totalorder %s20, 0
    %p104 = por %p102, %p103
    %p105 = scmp.ne.s32.totalorder %s93, %s94
    %p106 = scmp.eq.s32.totalorder %s21, 1
    %p107 = por %p105, %p106
    %p109 = scmp.ne.s32.totalorder %s94, %s108
    %p110 = scmp.eq.s32.totalorder %s21, 0
    %p111 = por %p109, %p110
    %s113 = sadd.s32 %s112, 1
    %p116 = scmp.eq.s32.totalorder %s15, 1
    %p117 = scmp.ne.s32.totalorder %s112, %s114
    %p118 = scmp.eq.s32.totalorder %s15, 0
    %p119 = por %p117, %p118
    %p120 = scmp.ne.s32.totalorder %s112, %s114
    %p121 = scmp.eq.s32.totalorder %s20, 1
    %p122 = por %p120, %p121
    %p123 = scmp.ne.s32.totalorder %s114, %s115
    %p124 = scmp.eq.s32.totalorder %s20, 0
    %p125 = por %p123, %p124
    %p126 = scmp.ne.s32.totalorder %s114, %s115
    %p127 = scmp.eq.s32.totalorder %s21, 1
    %p128 = por %p126, %p127
    %p130 = scmp.ne.s32.totalorder %s115, %s129
    %p131 = scmp.eq.s32.totalorder %s21, 0
    %p132 = por %p130, %p131
    %s134 = sadd.s32 %s133, 1
    %p137 = scmp.eq.s32.totalorder %s15, 1
    %p138 = scmp.ne.s32.totalorder %s133, %s135
    %p139 = scmp.eq.s32.totalorder %s15, 0
    %p140 = por %p138, %p139
    %p141 = scmp.ne.s32.totalorder %s133, %s135
    %p142 = scmp.eq.s32.totalorder %s20, 1
    %p143 = por %p141, %p142
    %p144 = scmp.ne.s32.totalorder %s135, %s136
    %p145 = scmp.eq.s32.totalorder %s20, 0
    %p146 = por %p144, %p145
    %p147 = scmp.ne.s32.totalorder %s135, %s136
    %p148 = scmp.eq.s32.totalorder %s21, 1
    %p149 = por %p147, %p148
    %p151 = scmp.ne.s32.totalorder %s136, %s150
    %p152 = scmp.eq.s32.totalorder %s21, 0
    %p153 = por %p151, %p152
    %s154 = ssub.s32 %s15, %s22
    %p155 = scmp.eq.s32.totalorder %s154, 0
    %s157 = sadd.s32 %s156, 1
    %s158 = scalar_select %p155, %s156, %s157
    %p161 = pneg %p155
    %p162 = scmp.eq.s32.totalorder %s15, 1
    %p163 = por %p161, %p162
    %p164 = scmp.ne.s32.totalorder %s156, %s159
    %p165 = scmp.eq.s32.totalorder %s15, 0
    %p166 = por %p164, %p165
    %p167 = scmp.ne.s32.totalorder %s156, %s159
    %p168 = scmp.eq.s32.totalorder %s20, 1
    %p169 = por %p167, %p168
    %p170 = scmp.ne.s32.totalorder %s159, %s160
    %p171 = scmp.eq.s32.totalorder %s20, 0
    %p172 = por %p170, %p171
    %p173 = scmp.ne.s32.totalorder %s159, %s160
    %p174 = scmp.eq.s32.totalorder %s21, 1
    %p175 = por %p173, %p174
    %p177 = scmp.ne.s32.totalorder %s160, %s176
    %p178 = scmp.eq.s32.totalorder %s21, 0
    %p179 = por %p177, %p178
    %s180 = ssub.s32 %s15, %s22
    %p181 = scmp.eq.s32.totalorder %s180, 0
    %s183 = sadd.s32 %s182, 1
    %s184 = scalar_select %p181, %s182, %s183
    %p187 = pneg %p181
    %p188 = scmp.eq.s32.totalorder %s15, 1
    %p189 = por %p187, %p188
    %p190 = scmp.ne.s32.totalorder %s182, %s185
    %p191 = scmp.eq.s32.totalorder %s15, 0
    %p192 = por %p190, %p191
    %p193 = scmp.ne.s32.totalorder %s182, %s185
    %p194 = scmp.eq.s32.totalorder %s20, 1
    %p195 = por %p193, %p194
    %p196 = scmp.ne.s32.totalorder %s185, %s186
    %p197 = scmp.eq.s32.totalorder %s20, 0
    %p198 = por %p196, %p197
    %p199 = scmp.ne.s32.totalorder %s185, %s186
    %p200 = scmp.eq.s32.totalorder %s21, 1
    %p201 = por %p199, %p200
    %p203 = scmp.ne.s32.totalorder %s186, %s202
    %p204 = scmp.eq.s32.totalorder %s21, 0
    %p205 = por %p203, %p204
    %s206 = ssub.s32 %s15, %s22
    %p207 = scmp.eq.s32.totalorder %s206, 0
    %s209 = sadd.s32 %s208, 1
    %s210 = scalar_select %p207, %s208, %s209
    %p213 = pneg %p207
    %p214 = scmp.eq.s32.totalorder %s15, 1
    %p215 = por %p213, %p214
    %p216 = scmp.ne.s32.totalorder %s208, %s211
    %p217 = scmp.eq.s32.totalorder %s15, 0
    %p218 = por %p216, %p217
    %p219 = scmp.ne.s32.totalorder %s208, %s211
    %p220 = scmp.eq.s32.totalorder %s20, 1
    %p221 = por %p219, %p220
    %p222 = scmp.ne.s32.totalorder %s211, %s212
    %p223 = scmp.eq.s32.totalorder %s20, 0
    %p224 = por %p222, %p223
    %p225 = scmp.ne.s32.totalorder %s211, %s212
    %p226 = scmp.eq.s32.totalorder %s21, 1
    %p227 = por %p225, %p226
    %p229 = scmp.ne.s32.totalorder %s212, %s228
    %p230 = scmp.eq.s32.totalorder %s21, 0
    %p231 = por %p229, %p230
    %p232 = scmp.le.s32.totalorder 1, %s15
    %p233 = scmp.lt.s32.totalorder %s15, 3
    %p234 = pnand %p232, %p233
    %p235 = pneg %p234
    // Predicated region
    $region9: #{block_forward.5} parent=5 // pred_check
      _
    $region10: #{block_forward.5} parent=5 // pred_check_branch
      %237 = sbr.rel (%p234) target = $region12
    $region11: #{block_forward.5} parent=5 // pred_region
      %s238 = ssub.s32 %s15, 1
      // Predicated region
      $region13: #{block_forward.5} parent=11 // pred_check
        %p239 = pneg %p62
      $region14: #{block_forward.5} parent=11 // pred_check_branch
        %241 = sbr.rel (%p239) target = $region16
      $region15: #{block_forward.5} parent=11 // pred_region
        _
      $region16: #{block_forward.5} parent=11 // pred_fallthru
        _
      // Predicated region
      $region17: #{block_forward.5} parent=11 // pred_check
        %p242 = pneg %p83
      $region18: #{block_forward.5} parent=11 // pred_check_branch
        %244 = sbr.rel (%p242) target = $region20
      $region19: #{block_forward.5} parent=11 // pred_region
        _
      $region20: #{block_forward.5} parent=11 // pred_fallthru
        _
      // Predicated region
      $region21: #{block_forward.5} parent=11 // pred_check
        %p245 = pneg %p104
      $region22: #{block_forward.5} parent=11 // pred_check_branch
        %247 = sbr.rel (%p245) target = $region24
      $region23: #{block_forward.5} parent=11 // pred_region
        _
      $region24: #{block_forward.5} parent=11 // pred_fallthru
        _
      // Predicated region
      $region25: #{block_forward.5} parent=11 // pred_check
        %p248 = pneg %p125
      $region26: #{block_forward.5} parent=11 // pred_check_branch
        %250 = sbr.rel (%p248) target = $region28
      $region27: #{block_forward.5} parent=11 // pred_region
        _
      $region28: #{block_forward.5} parent=11 // pred_fallthru
        _
      // Predicated region
      $region29: #{block_forward.5} parent=11 // pred_check
        %p251 = pneg %p146
      $region30: #{block_forward.5} parent=11 // pred_check_branch
        %253 = sbr.rel (%p251) target = $region32
      $region31: #{block_forward.5} parent=11 // pred_region
        _
      $region32: #{block_forward.5} parent=11 // pred_fallthru
        _
    $region12: #{block_forward.5} parent=5 // pred_fallthru
      _
    %p254 = scmp.lt.s32.totalorder %s15, 2
    // Predicated region
    $region33: #{block_forward.5} parent=5 // pred_check
      %p255 = pneg %p254
    $region34: #{block_forward.5} parent=5 // pred_check_branch
      %257 = sbr.rel (%p255) target = $region36
    $region35: #{block_forward.5} parent=5 // pred_region
      // Predicated region
      $region37: #{block_forward.5} parent=35 // pred_check
        %p258 = pneg %p35
      $region38: #{block_forward.5} parent=35 // pred_check_branch
        %260 = sbr.rel (%p258) target = $region40
      $region39: #{block_forward.5} parent=35 // pred_region
        %p261 = scmp.lt.s32.totalorder %s15, 1
        %s262 = scalar_select %p261, %s15, 1
        %s263 = smul.addr %s262, 32
        %s264 = smul.addr %s263, 4
        %s265 = scalar_lea.vmem %s0, %s264
      $region40: #{block_forward.5} parent=35 // pred_fallthru
        _
    $region36: #{block_forward.5} parent=5 // pred_fallthru
      _
    %p266 = scmp.le.s32.totalorder 1, %s15
    %p267 = scmp.lt.s32.totalorder %s15, 3
    %p268 = pnand %p266, %p267
    %p269 = pneg %p268
    // Predicated region
    $region41: #{block_forward.5} parent=5 // pred_check
      _
    $region42: #{block_forward.5} parent=5 // pred_check_branch
      %271 = sbr.rel (%p268) target = $region44
    $region43: #{block_forward.5} parent=5 // pred_region
      %s272 = ssub.s32 %s15, 1
      %p273 = scmp.lt.s32.totalorder %s20, 1
      %s274 = scalar_select %p273, %s20, 1
      %s275 = smul.addr %s274, 32
      %s276 = smul.addr %s275, 4
      %s277 = scalar_lea.vmem %s0, %s276
      %p278 = pneg %p41
      %p279 = pneg %p38
      %p280 = pneg %p62
      %p281 = pneg %p59
      %p282 = pneg %p83
      %p283 = pneg %p80
      %p284 = pneg %p104
      %p285 = pneg %p101
      %p286 = pneg %p125
      %p287 = pneg %p122
      %p288 = pneg %p146
      %p289 = pneg %p143
      %p290 = pneg %p172
      %p291 = pneg %p169
      %p292 = scmp.lt.s32.totalorder %s20, 1
      %s293 = scalar_select %p292, %s20, 1
      %s294 = smul.addr %s293, 32
      %s295 = smul.addr %s294, 4
      %s296 = scalar_lea.vmem %s6, %s295
      %p297 = pneg %p198
      %p298 = pneg %p195
      %p299 = scmp.lt.s32.totalorder %s20, 1
      %s300 = scalar_select %p299, %s20, 1
      %s301 = scalar_lea.vmem %s7, %s300
      %p302 = pneg %p224
      %p303 = pneg %p221
      %p304 = scmp.lt.s32.totalorder %s20, 1
      %s305 = scalar_select %p304, %s20, 1
      %s306 = scalar_lea.vmem %s8, %s305
      %p307 = scmp.lt.s32.totalorder %s20, 1
      %s308 = scalar_select %p307, %s20, 1
      %s309 = smul.addr %s308, 32
      %s310 = smul.addr %s309, 4
      %s311 = scalar_lea.vmem %s0, %s310
      %p312 = scmp.lt.s32.totalorder %s20, 1
      %s313 = scalar_select %p312, %s20, 1
      %s314 = smul.addr %s313, 32
      %s315 = smul.addr %s314, 4
      %s316 = scalar_lea.vmem %s6, %s315
      %p317 = scmp.lt.s32.totalorder %s20, 1
      %s318 = scalar_select %p317, %s20, 1
      %s319 = scalar_lea.vmem %s7, %s318
      %p320 = scmp.lt.s32.totalorder %s20, 1
      %s321 = scalar_select %p320, %s20, 1
      %s322 = scalar_lea.vmem %s8, %s321
      %v323 = vld [vmem:[%s1] sm:$0x1]
      %v324 = vmul.f32 %v323, 0.001953125
      %v325 = vld [vmem:[%s2] sm:$0x1]
      %v326 = vmul.f32 %v325, 0.001953125
      %v327 = vmul.f32 %v324, %v324
      %v328 = vsub.f32 %v326, %v327
      %v329 = vmax.f32 %v328, 0.0
      %v330 = vadd.f32 %v329, 1e-05
      %v331 = vrsqrt.pop %v330
      %v332 = vmul.f32 %v331, %v330
      %v333 = vmul.f32 %v332, %v331
      %v334 = vmul.f32 0.5, %v333
      %v335 = vsub.f32 1.5, %v334
      %v336 = vmul.f32 %v331, %v335
      %vm337 = vweird.f32 %v330
      %vm338 = vweird.f32 %v331
      %vm339 = vmor %vm337, %vm338
      %v340 = vsel %vm339, %v331, %v336
      %v341 = vld [vmem:[%s3] sm:$0x1]
      %v342 = vmul.f32 %v341, %v340
      %v343 = vld [vmem:[%s4] sm:$0x1]
      %v344 = vmul.f32 %v324, %v342
      %v345 = vsub.f32 %v343, %v344
      %v346 = vld [vmem:[%s311] sm:$0xf]
      %v347 = vld [vmem:[%s311 + $0x4] sm:$0xf]
      %v348 = vld [vmem:[%s311 + $0x8] sm:$0xf]
      %v349 = vld [vmem:[%s311 + $0xc] sm:$0xf]
      %v350 = vld [vmem:[%s311 + $0x10] sm:$0xf]
      %v351 = vld [vmem:[%s311 + $0x14] sm:$0xf]
      %v352 = vld [vmem:[%s311 + $0x18] sm:$0xf]
      %v353 = vld [vmem:[%s311 + $0x1c] sm:$0xf]
      %v354 = vld [vmem:[%s311 + $0x20] sm:$0xf]
      %v355 = vld [vmem:[%s311 + $0x24] sm:$0xf]
      %v356 = vld [vmem:[%s311 + $0x28] sm:$0xf]
      %v357 = vld [vmem:[%s311 + $0x2c] sm:$0xf]
      %v358 = vld [vmem:[%s311 + $0x30] sm:$0xf]
      %v359 = vld [vmem:[%s311 + $0x34] sm:$0xf]
      %v360 = vld [vmem:[%s311 + $0x38] sm:$0xf]
      %v361 = vld [vmem:[%s311 + $0x3c] sm:$0xf]
      %v362 = vld [vmem:[%s311 + $0x40] sm:$0xf]
      %v363 = vld [vmem:[%s311 + $0x44] sm:$0xf]
      %v364 = vld [vmem:[%s311 + $0x48] sm:$0xf]
      %v365 = vld [vmem:[%s311 + $0x4c] sm:$0xf]
      %v366 = vld [vmem:[%s311 + $0x50] sm:$0xf]
      %v367 = vld [vmem:[%s311 + $0x54] sm:$0xf]
      %v368 = vld [vmem:[%s311 + $0x58] sm:$0xf]
      %v369 = vld [vmem:[%s311 + $0x5c] sm:$0xf]
      %v370 = vld [vmem:[%s311 + $0x60] sm:$0xf]
      %v371 = vld [vmem:[%s311 + $0x64] sm:$0xf]
      %v372 = vld [vmem:[%s311 + $0x68] sm:$0xf]
      %v373 = vld [vmem:[%s311 + $0x6c] sm:$0xf]
      %v374 = vld [vmem:[%s311 + $0x70] sm:$0xf]
      %v375 = vld [vmem:[%s311 + $0x74] sm:$0xf]
      %v376 = vld [vmem:[%s311 + $0x78] sm:$0xf]
      %v377 = vld [vmem:[%s311 + $0x7c] sm:$0xf]
      %v378 = vunpack.c.l.bf16 %v346
      %v379 = vunpack.c.l.bf16 %v347
      %v380 = vunpack.c.l.bf16 %v348
      %v381 = vunpack.c.l.bf16 %v349
      %v382 = vunpack.c.l.bf16 %v350
      %v383 = vunpack.c.l.bf16 %v351
      %v384 = vunpack.c.l.bf16 %v352
      %v385 = vunpack.c.l.bf16 %v353
      %v386 = vunpack.c.l.bf16 %v354
      %v387 = vunpack.c.l.bf16 %v355
      %v388 = vunpack.c.l.bf16 %v356
      %v389 = vunpack.c.l.bf16 %v357
      %v390 = vunpack.c.l.bf16 %v358
      %v391 = vunpack.c.l.bf16 %v359
      %v392 = vunpack.c.l.bf16 %v360
      %v393 = vunpack.c.l.bf16 %v361
      %v394 = vunpack.c.l.bf16 %v362
      %v395 = vunpack.c.l.bf16 %v363
      %v396 = vunpack.c.l.bf16 %v364
      %v397 = vunpack.c.l.bf16 %v365
      %v398 = vunpack.c.l.bf16 %v366
      %v399 = vunpack.c.l.bf16 %v367
      %v400 = vunpack.c.l.bf16 %v368
      %v401 = vunpack.c.l.bf16 %v369
      %v402 = vunpack.c.l.bf16 %v370
      %v403 = vunpack.c.l.bf16 %v371
      %v404 = vunpack.c.l.bf16 %v372
      %v405 = vunpack.c.l.bf16 %v373
      %v406 = vunpack.c.l.bf16 %v374
      %v407 = vunpack.c.l.bf16 %v375
      %v408 = vunpack.c.l.bf16 %v376
      %v409 = vunpack.c.l.bf16 %v377
      %v411 = vperm.slane %v342, 0
      %v413 = vmul.f32 %v378, %v411
      %v414 = vmul.f32 %v379, %v411
      %v415 = vmul.f32 %v380, %v411
      %v416 = vmul.f32 %v381, %v411
      %v417 = vmul.f32 %v382, %v411
      %v418 = vmul.f32 %v383, %v411
      %v419 = vmul.f32 %v384, %v411
      %v420 = vmul.f32 %v385, %v411
      %v421 = vmul.f32 %v386, %v411
      %v422 = vmul.f32 %v387, %v411
      %v423 = vmul.f32 %v388, %v411
      %v424 = vmul.f32 %v389, %v411
      %v425 = vmul.f32 %v390, %v411
      %v426 = vmul.f32 %v391, %v411
      %v427 = vmul.f32 %v392, %v411
      %v428 = vmul.f32 %v393, %v411
      %v429 = vmul.f32 %v394, %v411
      %v430 = vmul.f32 %v395, %v411
      %v431 = vmul.f32 %v396, %v411
      %v432 = vmul.f32 %v397, %v411
      %v433 = vmul.f32 %v398, %v411
      %v434 = vmul.f32 %v399, %v411
      %v435 = vmul.f32 %v400, %v411
      %v436 = vmul.f32 %v401, %v411
      %v437 = vmul.f32 %v402, %v411
      %v438 = vmul.f32 %v403, %v411
      %v439 = vmul.f32 %v404, %v411
      %v440 = vmul.f32 %v405, %v411
      %v441 = vmul.f32 %v406, %v411
      %v442 = vmul.f32 %v407, %v411
      %v443 = vmul.f32 %v408, %v411
      %v444 = vmul.f32 %v409, %v411
      %v446 = vperm.slane %v345, 0
      %v448 = vadd.f32 %v413, %v446
      %v449 = vadd.f32 %v414, %v446
      %v450 = vadd.f32 %v415, %v446
      %v451 = vadd.f32 %v416, %v446
      %v452 = vadd.f32 %v417, %v446
      %v453 = vadd.f32 %v418, %v446
      %v454 = vadd.f32 %v419, %v446
      %v455 = vadd.f32 %v420, %v446
      %v456 = vadd.f32 %v421, %v446
      %v457 = vadd.f32 %v422, %v446
      %v458 = vadd.f32 %v423, %v446
      %v459 = vadd.f32 %v424, %v446
      %v460 = vadd.f32 %v425, %v446
      %v461 = vadd.f32 %v426, %v446
      %v462 = vadd.f32 %v427, %v446
      %v463 = vadd.f32 %v428, %v446
      %v464 = vadd.f32 %v429, %v446
      %v465 = vadd.f32 %v430, %v446
      %v466 = vadd.f32 %v431, %v446
      %v467 = vadd.f32 %v432, %v446
      %v468 = vadd.f32 %v433, %v446
      %v469 = vadd.f32 %v434, %v446
      %v470 = vadd.f32 %v435, %v446
      %v471 = vadd.f32 %v436, %v446
      %v472 = vadd.f32 %v437, %v446
      %v473 = vadd.f32 %v438, %v446
      %v474 = vadd.f32 %v439, %v446
      %v475 = vadd.f32 %v440, %v446
      %v476 = vadd.f32 %v441, %v446
      %v477 = vadd.f32 %v442, %v446
      %v478 = vadd.f32 %v443, %v446
      %v479 = vadd.f32 %v444, %v446
      %v480 = vmax.f32 %v448, 0.0
      %v481 = vmax.f32 %v449, 0.0
      %v482 = vmax.f32 %v450, 0.0
      %v483 = vmax.f32 %v451, 0.0
      %v484 = vmax.f32 %v452, 0.0
      %v485 = vmax.f32 %v453, 0.0
      %v486 = vmax.f32 %v454, 0.0
      %v487 = vmax.f32 %v455, 0.0
      %v488 = vmax.f32 %v456, 0.0
      %v489 = vmax.f32 %v457, 0.0
      %v490 = vmax.f32 %v458, 0.0
      %v491 = vmax.f32 %v459, 0.0
      %v492 = vmax.f32 %v460, 0.0
      %v493 = vmax.f32 %v461, 0.0
      %v494 = vmax.f32 %v462, 0.0
      %v495 = vmax.f32 %v463, 0.0
      %v496 = vmax.f32 %v464, 0.0
      %v497 = vmax.f32 %v465, 0.0
      %v498 = vmax.f32 %v466, 0.0
      %v499 = vmax.f32 %v467, 0.0
      %v500 = vmax.f32 %v468, 0.0
      %v501 = vmax.f32 %v469, 0.0
      %v502 = vmax.f32 %v470, 0.0
      %v503 = vmax.f32 %v471, 0.0
      %v504 = vmax.f32 %v472, 0.0
      %v505 = vmax.f32 %v473, 0.0
      %v506 = vmax.f32 %v474, 0.0
      %v507 = vmax.f32 %v475, 0.0
      %v508 = vmax.f32 %v476, 0.0
      %v509 = vmax.f32 %v477, 0.0
      %v510 = vmax.f32 %v478, 0.0
      %v511 = vmax.f32 %v479, 0.0
      %512 = vst [vmem:[#allocation2] sm:$0xff] 0.0
      %513 = vst [vmem:[#allocation2 + $0x8] sm:$0xff] 0.0
      %514 = vst [vmem:[#allocation2 + $0x10] sm:$0xff] 0.0
      %515 = vst [vmem:[#allocation2 + $0x18] sm:$0x1] 0.0
      %516 = vst [vmem:[#allocation2 + $0x20] sm:$0xff] 0.0
      %517 = vst [vmem:[#allocation2 + $0x28] sm:$0xff] 0.0
      %518 = vst [vmem:[#allocation2 + $0x30] sm:$0xff] 0.0
      %519 = vst [vmem:[#allocation2 + $0x38] sm:$0x1] 0.0
      %520 = vst [vmem:[#allocation2 + $0x40] sm:$0xff] 0.0
      %521 = vst [vmem:[#allocation2 + $0x48] sm:$0xff] 0.0
      %522 = vst [vmem:[#allocation2 + $0x50] sm:$0xff] 0.0
      %523 = vst [vmem:[#allocation2 + $0x58] sm:$0x1] 0.0
      %524 = vst [vmem:[#allocation2 + $0x60] sm:$0xff] 0.0
      %525 = vst [vmem:[#allocation2 + $0x68] sm:$0xff] 0.0
      %526 = vst [vmem:[#allocation2 + $0x70] sm:$0xff] 0.0
      %527 = vst [vmem:[#allocation2 + $0x78] sm:$0x1] 0.0
      %528 = vst [vmem:[#allocation2 + $0x80] sm:$0xff] 0.0
      %529 = vst [vmem:[#allocation2 + $0x88] sm:$0xff] 0.0
      %530 = vst [vmem:[#allocation2 + $0x90] sm:$0xff] 0.0
      %531 = vst [vmem:[#allocation2 + $0x98] sm:$0x1] 0.0
      %532 = vst [vmem:[#allocation2 + $0xa0] sm:$0xff] 0.0
      %533 = vst [vmem:[#allocation2 + $0xa8] sm:$0xff] 0.0
      %534 = vst [vmem:[#allocation2 + $0xb0] sm:$0xff] 0.0
      %535 = vst [vmem:[#allocation2 + $0xb8] sm:$0x1] 0.0
      %536 = vst [vmem:[#allocation2 + $0xc0] sm:$0xff] 0.0
      %537 = vst [vmem:[#allocation2 + $0xc8] sm:$0xff] 0.0
      %538 = vst [vmem:[#allocation2 + $0xd0] sm:$0xff] 0.0
      %539 = vst [vmem:[#allocation2 + $0xd8] sm:$0x1] 0.0
      %540 = vst [vmem:[#allocation2 + $0xe0] sm:$0xff] 0.0
      %541 = vst [vmem:[#allocation2 + $0xe8] sm:$0xff] 0.0
      %542 = vst [vmem:[#allocation2 + $0xf0] sm:$0xff] 0.0
      %543 = vst [vmem:[#allocation2 + $0xf8] sm:$0x1] 0.0
      %544 = vst [vmem:[#allocation2 + $0x100] sm:$0xff] 0.0
      %545 = vst [vmem:[#allocation2 + $0x108] sm:$0xff] 0.0
      %546 = vst [vmem:[#allocation2 + $0x110] sm:$0xff] 0.0
      %547 = vst [vmem:[#allocation2 + $0x118] sm:$0x1] 0.0
      %548 = vst [vmem:[#allocation2 + $0x120] sm:$0xff] 0.0
      %549 = vst [vmem:[#allocation2 + $0x128] sm:$0xff] 0.0
      %550 = vst [vmem:[#allocation2 + $0x130] sm:$0xff] 0.0
      %551 = vst [vmem:[#allocation2 + $0x138] sm:$0x1] 0.0
      %552 = vst [vmem:[#allocation2 + $0x140] sm:$0xff] 0.0
      %553 = vst [vmem:[#allocation2 + $0x148] sm:$0xff] 0.0
      %554 = vst [vmem:[#allocation2 + $0x150] sm:$0xff] 0.0
      %555 = vst [vmem:[#allocation2 + $0x158] sm:$0x1] 0.0
      %556 = vst [vmem:[#allocation2 + $0x160] sm:$0xff] 0.0
      %557 = vst [vmem:[#allocation2 + $0x168] sm:$0xff] 0.0
      %558 = vst [vmem:[#allocation2 + $0x170] sm:$0xff] 0.0
      %559 = vst [vmem:[#allocation2 + $0x178] sm:$0x1] 0.0
      %560 = vst [vmem:[#allocation2 + $0x180] sm:$0xff] 0.0
      %561 = vst [vmem:[#allocation2 + $0x188] sm:$0xff] 0.0
      %562 = vst [vmem:[#allocation2 + $0x190] sm:$0xff] 0.0
      %563 = vst [vmem:[#allocation2 + $0x198] sm:$0x1] 0.0
      %564 = vst [vmem:[#allocation2 + $0x1a0] sm:$0xff] 0.0
      %565 = vst [vmem:[#allocation2 + $0x1a8] sm:$0xff] 0.0
      %566 = vst [vmem:[#allocation2 + $0x1b0] sm:$0xff] 0.0
      %567 = vst [vmem:[#allocation2 + $0x1b8] sm:$0x1] 0.0
      %568 = vst [vmem:[#allocation2 + $0x1c0] sm:$0xff] 0.0
      %569 = vst [vmem:[#allocation2 + $0x1c8] sm:$0xff] 0.0
      %570 = vst [vmem:[#allocation2 + $0x1d0] sm:$0xff] 0.0
      %571 = vst [vmem:[#allocation2 + $0x1d8] sm:$0x1] 0.0
      %572 = vst [vmem:[#allocation2 + $0x1e0] sm:$0xff] 0.0
      %573 = vst [vmem:[#allocation2 + $0x1e8] sm:$0xff] 0.0
      %574 = vst [vmem:[#allocation2 + $0x1f0] sm:$0xff] 0.0
      %575 = vst [vmem:[#allocation2 + $0x1f8] sm:$0x1] 0.0
      %576 = vst [vmem:[#allocation2 + $0x200] sm:$0xff] 0.0
      %577 = vst [vmem:[#allocation2 + $0x208] sm:$0xff] 0.0
      %578 = vst [vmem:[#allocation2 + $0x210] sm:$0xff] 0.0
      %579 = vst [vmem:[#allocation2 + $0x218] sm:$0x1] 0.0
      %580 = vst [vmem:[#allocation2 + $0x220] sm:$0xff] 0.0
      %581 = vst [vmem:[#allocation2 + $0x228] sm:$0xff] 0.0
      %582 = vst [vmem:[#allocation2 + $0x230] sm:$0xff] 0.0
      %583 = vst [vmem:[#allocation2 + $0x238] sm:$0x1] 0.0
      %s584 = scalar_lea.vmem [#allocation2], 32
      %585 = vst [vmem:[%s584 + $0x8] sm:$0xff] %v480
      %586 = vst [vmem:[%s584 + $0x10] sm:$0xff] %v481
      %587 = vst [vmem:[%s584 + $0x28] sm:$0xff] %v482
      %588 = vst [vmem:[%s584 + $0x30] sm:$0xff] %v483
      %589 = vst [vmem:[%s584 + $0x48] sm:$0xff] %v484
      %590 = vst [vmem:[%s584 + $0x50] sm:$0xff] %v485
      %591 = vst [vmem:[%s584 + $0x68] sm:$0xff] %v486
      %592 = vst [vmem:[%s584 + $0x70] sm:$0xff] %v487
      %593 = vst [vmem:[%s584 + $0x88] sm:$0xff] %v488
      %594 = vst [vmem:[%s584 + $0x90] sm:$0xff] %v489
      %595 = vst [vmem:[%s584 + $0xa8] sm:$0xff] %v490
      %596 = vst [vmem:[%s584 + $0xb0] sm:$0xff] %v491
      %597 = vst [vmem:[%s584 + $0xc8] sm:$0xff] %v492
      %598 = vst [vmem:[%s584 + $0xd0] sm:$0xff] %v493
      %599 = vst [vmem:[%s584 + $0xe8] sm:$0xff] %v494
      %600 = vst [vmem:[%s584 + $0xf0] sm:$0xff] %v495
      %601 = vst [vmem:[%s584 + $0x108] sm:$0xff] %v496
      %602 = vst [vmem:[%s584 + $0x110] sm:$0xff] %v497
      %603 = vst [vmem:[%s584 + $0x128] sm:$0xff] %v498
      %604 = vst [vmem:[%s584 + $0x130] sm:$0xff] %v499
      %605 = vst [vmem:[%s584 + $0x148] sm:$0xff] %v500
      %606 = vst [vmem:[%s584 + $0x150] sm:$0xff] %v501
      %607 = vst [vmem:[%s584 + $0x168] sm:$0xff] %v502
      %608 = vst [vmem:[%s584 + $0x170] sm:$0xff] %v503
      %609 = vst [vmem:[%s584 + $0x188] sm:$0xff] %v504
      %610 = vst [vmem:[%s584 + $0x190] sm:$0xff] %v505
      %611 = vst [vmem:[%s584 + $0x1a8] sm:$0xff] %v506
      %612 = vst [vmem:[%s584 + $0x1b0] sm:$0xff] %v507
      %613 = vst [vmem:[%s584 + $0x1c8] sm:$0xff] %v508
      %614 = vst [vmem:[%s584 + $0x1d0] sm:$0xff] %v509
      %615 = vst [vmem:[%s584 + $0x1e8] sm:$0xff] %v510
      %616 = vst [vmem:[%s584 + $0x1f0] sm:$0xff] %v511
      %v617 = vld [vmem:[#allocation2] sm:$0xff]
      %v618 = vld [vmem:[#allocation2 + $0x8] sm:$0xff]
      %v619 = vld [vmem:[#allocation2 + $0x10] sm:$0xff]
      %v620 = vld [vmem:[#allocation2 + $0x18] sm:$0x1]
      %v621 = vld [vmem:[#allocation2 + $0x20] sm:$0xff]
      %v622 = vld [vmem:[#allocation2 + $0x28] sm:$0xff]
      %v623 = vld [vmem:[#allocation2 + $0x30] sm:$0xff]
      %v624 = vld [vmem:[#allocation2 + $0x38] sm:$0x1]
      %v625 = vld [vmem:[#allocation2 + $0x40] sm:$0xff]
      %v626 = vld [vmem:[#allocation2 + $0x48] sm:$0xff]
      %v627 = vld [vmem:[#allocation2 + $0x50] sm:$0xff]
      %v628 = vld [vmem:[#allocation2 + $0x58] sm:$0x1]
      %v629 = vld [vmem:[#allocation2 + $0x60] sm:$0xff]
      %v630 = vld [vmem:[#allocation2 + $0x68] sm:$0xff]
      %v631 = vld [vmem:[#allocation2 + $0x70] sm:$0xff]
      %v632 = vld [vmem:[#allocation2 + $0x78] sm:$0x1]
      %v633 = vld [vmem:[#allocation2 + $0x80] sm:$0xff]
      %v634 = vld [vmem:[#allocation2 + $0x88] sm:$0xff]
      %v635 = vld [vmem:[#allocation2 + $0x90] sm:$0xff]
      %v636 = vld [vmem:[#allocation2 + $0x98] sm:$0x1]
      %v637 = vld [vmem:[#allocation2 + $0xa0] sm:$0xff]
      %v638 = vld [vmem:[#allocation2 + $0xa8] sm:$0xff]
      %v639 = vld [vmem:[#allocation2 + $0xb0] sm:$0xff]
      %v640 = vld [vmem:[#allocation2 + $0xb8] sm:$0x1]
      %v641 = vld [vmem:[#allocation2 + $0xc0] sm:$0xff]
      %v642 = vld [vmem:[#allocation2 + $0xc8] sm:$0xff]
      %v643 = vld [vmem:[#allocation2 + $0xd0] sm:$0xff]
      %v644 = vld [vmem:[#allocation2 + $0xd8] sm:$0x1]
      %v645 = vld [vmem:[#allocation2 + $0xe0] sm:$0xff]
      %v646 = vld [vmem:[#allocation2 + $0xe8] sm:$0xff]
      %v647 = vld [vmem:[#allocation2 + $0xf0] sm:$0xff]
      %v648 = vld [vmem:[#allocation2 + $0xf8] sm:$0x1]
      %v649 = vld [vmem:[#allocation2 + $0x100] sm:$0xff]
      %v650 = vld [vmem:[#allocation2 + $0x108] sm:$0xff]
      %v651 = vld [vmem:[#allocation2 + $0x110] sm:$0xff]
      %v652 = vld [vmem:[#allocation2 + $0x118] sm:$0x1]
      %v653 = vld [vmem:[#allocation2 + $0x120] sm:$0xff]
      %v654 = vld [vmem:[#allocation2 + $0x128] sm:$0xff]
      %v655 = vld [vmem:[#allocation2 + $0x130] sm:$0xff]
      %v656 = vld [vmem:[#allocation2 + $0x138] sm:$0x1]
      %v657 = vld [vmem:[#allocation2 + $0x140] sm:$0xff]
      %v658 = vld [vmem:[#allocation2 + $0x148] sm:$0xff]
      %v659 = vld [vmem:[#allocation2 + $0x150] sm:$0xff]
      %v660 = vld [vmem:[#allocation2 + $0x158] sm:$0x1]
      %v661 = vld [vmem:[#allocation2 + $0x160] sm:$0xff]
      %v662 = vld [vmem:[#allocation2 + $0x168] sm:$0xff]
      %v663 = vld [vmem:[#allocation2 + $0x170] sm:$0xff]
      %v664 = vld [vmem:[#allocation2 + $0x178] sm:$0x1]
      %v665 = vld [vmem:[#allocation2 + $0x180] sm:$0xff]
      %v666 = vld [vmem:[#allocation2 + $0x188] sm:$0xff]
      %v667 = vld [vmem:[#allocation2 + $0x190] sm:$0xff]
      %v668 = vld [vmem:[#allocation2 + $0x198] sm:$0x1]
      %v669 = vld [vmem:[#allocation2 + $0x1a0] sm:$0xff]
      %v670 = vld [vmem:[#allocation2 + $0x1a8] sm:$0xff]
      %v671 = vld [vmem:[#allocation2 + $0x1b0] sm:$0xff]
      %v672 = vld [vmem:[#allocation2 + $0x1b8] sm:$0x1]
      %v673 = vld [vmem:[#allocation2 + $0x1c0] sm:$0xff]
      %v674 = vld [vmem:[#allocation2 + $0x1c8] sm:$0xff]
      %v675 = vld [vmem:[#allocation2 + $0x1d0] sm:$0xff]
      %v676 = vld [vmem:[#allocation2 + $0x1d8] sm:$0x1]
      %v677 = vld [vmem:[#allocation2 + $0x1e0] sm:$0xff]
      %v678 = vld [vmem:[#allocation2 + $0x1e8] sm:$0xff]
      %v679 = vld [vmem:[#allocation2 + $0x1f0] sm:$0xff]
      %v680 = vld [vmem:[#allocation2 + $0x1f8] sm:$0x1]
      %v681 = vld [vmem:[#allocation2 + $0x200] sm:$0xff]
      %v682 = vld [vmem:[#allocation2 + $0x208] sm:$0xff]
      %v683 = vld [vmem:[#allocation2 + $0x210] sm:$0xff]
      %v684 = vld [vmem:[#allocation2 + $0x218] sm:$0x1]
      %v685 = vld [vmem:[#allocation2 + $0x220] sm:$0xff]
      %v686 = vld [vmem:[#allocation2 + $0x228] sm:$0xff]
      %v687 = vld [vmem:[#allocation2 + $0x230] sm:$0xff]
      %v688 = vld [vmem:[#allocation2 + $0x238] sm:$0x1]
      %v689 = vld [vmem:[%s5] sm:$0xff]
      %v690 = vld [vmem:[%s5 + $0x8] sm:$0x1]
      %v691 = vperm.slane %v689, 0
      %v692 = vmul.f32 %v617, %v691
      %v693 = vmul.f32 %v618, %v691
      %v694 = vmul.f32 %v619, %v691
      %v695 = vmul.f32 %v621, %v691
      %v696 = vmul.f32 %v622, %v691
      %v697 = vmul.f32 %v623, %v691
      %v698 = vmul.f32 %v625, %v691
      %v699 = vmul.f32 %v626, %v691
      %v700 = vmul.f32 %v627, %v691
      %v701 = vmul.f32 %v629, %v691
      %v702 = vmul.f32 %v630, %v691
      %v703 = vmul.f32 %v631, %v691
      %v704 = vmul.f32 %v633, %v691
      %v705 = vmul.f32 %v634, %v691
      %v706 = vmul.f32 %v635, %v691
      %v707 = vmul.f32 %v637, %v691
      %v708 = vmul.f32 %v638, %v691
      %v709 = vmul.f32 %v639, %v691
      %v710 = vmul.f32 %v641, %v691
      %v711 = vmul.f32 %v642, %v691
      %v712 = vmul.f32 %v643, %v691
      %v713 = vmul.f32 %v645, %v691
      %v714 = vmul.f32 %v646, %v691
      %v715 = vmul.f32 %v647, %v691
      %v716 = vmul.f32 %v649, %v691
      %v717 = vmul.f32 %v650, %v691
      %v718 = vmul.f32 %v651, %v691
      %v719 = vmul.f32 %v653, %v691
      %v720 = vmul.f32 %v654, %v691
      %v721 = vmul.f32 %v655, %v691
      %v722 = vmul.f32 %v657, %v691
      %v723 = vmul.f32 %v658, %v691
      %v724 = vmul.f32 %v659, %v691
      %v725 = vmul.f32 %v661, %v691
      %v726 = vmul.f32 %v662, %v691
      %v727 = vmul.f32 %v663, %v691
      %v728 = vmul.f32 %v665, %v691
      %v729 = vmul.f32 %v666, %v691
      %v730 = vmul.f32 %v667, %v691
      %v731 = vmul.f32 %v669, %v691
      %v732 = vmul.f32 %v670, %v691
      %v733 = vmul.f32 %v671, %v691
      %v734 = vmul.f32 %v673, %v691
      %v735 = vmul.f32 %v674, %v691
      %v736 = vmul.f32 %v675, %v691
      %v737 = vmul.f32 %v677, %v691
      %v738 = vmul.f32 %v678, %v691
      %v739 = vmul.f32 %v679, %v691
      %v740 = vadd.f32 %v692, 0.0
      %v741 = vadd.f32 %v693, 0.0
      %v742 = vadd.f32 %v694, 0.0
      %v743 = vadd.f32 %v695, 0.0
      %v744 = vadd.f32 %v696, 0.0
      %v745 = vadd.f32 %v697, 0.0
      %v746 = vadd.f32 %v698, 0.0
      %v747 = vadd.f32 %v699, 0.0
      %v748 = vadd.f32 %v700, 0.0
      %v749 = vadd.f32 %v701, 0.0
      %v750 = vadd.f32 %v702, 0.0
      %v751 = vadd.f32 %v703, 0.0
      %v752 = vadd.f32 %v704, 0.0
      %v753 = vadd.f32 %v705, 0.0
      %v754 = vadd.f32 %v706, 0.0
      %v755 = vadd.f32 %v707, 0.0
      %v756 = vadd.f32 %v708, 0.0
      %v757 = vadd.f32 %v709, 0.0
      %v758 = vadd.f32 %v710, 0.0
      %v759 = vadd.f32 %v711, 0.0
      %v760 = vadd.f32 %v712, 0.0
      %v761 = vadd.f32 %v713, 0.0
      %v762 = vadd.f32 %v714, 0.0
      %v763 = vadd.f32 %v715, 0.0
      %v764 = vadd.f32 %v716, 0.0
      %v765 = vadd.f32 %v717, 0.0
      %v766 = vadd.f32 %v718, 0.0
      %v767 = vadd.f32 %v719, 0.0
      %v768 = vadd.f32 %v720, 0.0
      %v769 = vadd.f32 %v721, 0.0
      %v770 = vadd.f32 %v722, 0.0
      %v771 = vadd.f32 %v723, 0.0
      %v772 = vadd.f32 %v724, 0.0
      %v773 = vadd.f32 %v725, 0.0
      %v774 = vadd.f32 %v726, 0.0
      %v775 = vadd.f32 %v727, 0.0
      %v776 = vadd.f32 %v728, 0.0
      %v777 = vadd.f32 %v729, 0.0
      %v778 = vadd.f32 %v730, 0.0
      %v779 = vadd.f32 %v731, 0.0
      %v780 = vadd.f32 %v732, 0.0
      %v781 = vadd.f32 %v733, 0.0
      %v782 = vadd.f32 %v734, 0.0
      %v783 = vadd.f32 %v735, 0.0
      %v784 = vadd.f32 %v736, 0.0
      %v785 = vadd.f32 %v737, 0.0
      %v786 = vadd.f32 %v738, 0.0
      %v787 = vadd.f32 %v739, 0.0
      %v788 = vperm.slane %v689, 1
      %v789 = vmul.f32 %v618, %v788
      %v790 = vmul.f32 %v619, %v788
      %v791 = vmul.f32 %v622, %v788
      %v792 = vmul.f32 %v623, %v788
      %v793 = vmul.f32 %v626, %v788
      %v794 = vmul.f32 %v627, %v788
      %v795 = vmul.f32 %v630, %v788
      %v796 = vmul.f32 %v631, %v788
      %v797 = vmul.f32 %v634, %v788
      %v798 = vmul.f32 %v635, %v788
      %v799 = vmul.f32 %v638, %v788
      %v800 = vmul.f32 %v639, %v788
      %v801 = vmul.f32 %v642, %v788
      %v802 = vmul.f32 %v643, %v788
      %v803 = vmul.f32 %v646, %v788
      %v804 = vmul.f32 %v647, %v788
      %v805 = vmul.f32 %v650, %v788
      %v806 = vmul.f32 %v651, %v788
      %v807 = vmul.f32 %v654, %v788
      %v808 = vmul.f32 %v655, %v788
      %v809 = vmul.f32 %v658, %v788
      %v810 = vmul.f32 %v659, %v788
      %v811 = vmul.f32 %v662, %v788
      %v812 = vmul.f32 %v663, %v788
      %v813 = vmul.f32 %v666, %v788
      %v814 = vmul.f32 %v667, %v788
      %v815 = vmul.f32 %v670, %v788
      %v816 = vmul.f32 %v671, %v788
      %v817 = vmul.f32 %v674, %v788
      %v818 = vmul.f32 %v675, %v788
      %v819 = vmul.f32 %v678, %v788
      %v820 = vmul.f32 %v679, %v788
      %vm853 = vcmask 1046528
      %v854 = vrot.slane %v789, 1
      %v855 = vrot.slane %v790, 1
      %v856 = vsel %vm853, %v854, %v855
      %v857 = vrot.slane %v791, 1
      %v858 = vrot.slane %v792, 1
      %v859 = vsel %vm853, %v857, %v858
      %v860 = vrot.slane %v793, 1
      %v861 = vrot.slane %v794, 1
      %v862 = vsel %vm853, %v860, %v861
      %v863 = vrot.slane %v795, 1
      %v864 = vrot.slane %v796, 1
      %v865 = vsel %vm853, %v863, %v864
      %v866 = vrot.slane %v797, 1
      %v867 = vrot.slane %v798, 1
      %v868 = vsel %vm853, %v866, %v867
      %v869 = vrot.slane %v799, 1
      %v870 = vrot.slane %v800, 1
      %v871 = vsel %vm853, %v869, %v870
      %v872 = vrot.slane %v801, 1
      %v873 = vrot.slane %v802, 1
      %v874 = vsel %vm853, %v872, %v873
      %v875 = vrot.slane %v803, 1
      %v876 = vrot.slane %v804, 1
      %v877 = vsel %vm853, %v875, %v876
      %v878 = vrot.slane %v805, 1
      %v879 = vrot.slane %v806, 1
      %v880 = vsel %vm853, %v878, %v879
      %v881 = vrot.slane %v807, 1
      %v882 = vrot.slane %v808, 1
      %v883 = vsel %vm853, %v881, %v882
      %v884 = vrot.slane %v809, 1
      %v885 = vrot.slane %v810, 1
      %v886 = vsel %vm853, %v884, %v885
      %v887 = vrot.slane %v811, 1
      %v888 = vrot.slane %v812, 1
      %v889 = vsel %vm853, %v887, %v888
      %v890 = vrot.slane %v813, 1
      %v891 = vrot.slane %v814, 1
      %v892 = vsel %vm853, %v890, %v891
      %v893 = vrot.slane %v815, 1
      %v894 = vrot.slane %v816, 1
      %v895 = vsel %vm853, %v893, %v894
      %v896 = vrot.slane %v817, 1
      %v897 = vrot.slane %v818, 1
      %v898 = vsel %vm853, %v896, %v897
      %v899 = vrot.slane %v819, 1
      %v900 = vrot.slane %v820, 1
      %v901 = vsel %vm853, %v899, %v900
      %v950 = vadd.f32 %v740, %v854
      %v951 = vadd.f32 %v741, %v856
      %v952 = vadd.f32 %v742, %v855
      %v953 = vadd.f32 %v743, %v857
      %v954 = vadd.f32 %v744, %v859
      %v955 = vadd.f32 %v745, %v858
      %v956 = vadd.f32 %v746, %v860
      %v957 = vadd.f32 %v747, %v862
      %v958 = vadd.f32 %v748, %v861
      %v959 = vadd.f32 %v749, %v863
      %v960 = vadd.f32 %v750, %v865
      %v961 = vadd.f32 %v751, %v864
      %v962 = vadd.f32 %v752, %v866
      %v963 = vadd.f32 %v753, %v868
      %v964 = vadd.f32 %v754, %v867
      %v965 = vadd.f32 %v755, %v869
      %v966 = vadd.f32 %v756, %v871
      %v967 = vadd.f32 %v757, %v870
      %v968 = vadd.f32 %v758, %v872
      %v969 = vadd.f32 %v759, %v874
      %v970 = vadd.f32 %v760, %v873
      %v971 = vadd.f32 %v761, %v875
      %v972 = vadd.f32 %v762, %v877
      %v973 = vadd.f32 %v763, %v876
      %v974 = vadd.f32 %v764, %v878
      %v975 = vadd.f32 %v765, %v880
      %v976 = vadd.f32 %v766, %v879
      %v977 = vadd.f32 %v767, %v881
      %v978 = vadd.f32 %v768, %v883
      %v979 = vadd.f32 %v769, %v882
      %v980 = vadd.f32 %v770, %v884
      %v981 = vadd.f32 %v771, %v886
      %v982 = vadd.f32 %v772, %v885
      %v983 = vadd.f32 %v773, %v887
      %v984 = vadd.f32 %v774, %v889
      %v985 = vadd.f32 %v775, %v888
      %v986 = vadd.f32 %v776, %v890
      %v987 = vadd.f32 %v777, %v892
      %v988 = vadd.f32 %v778, %v891
      %v989 = vadd.f32 %v779, %v893
      %v990 = vadd.f32 %v780, %v895
      %v991 = vadd.f32 %v781, %v894
      %v992 = vadd.f32 %v782, %v896
      %v993 = vadd.f32 %v783, %v898
      %v994 = vadd.f32 %v784, %v897
      %v995 = vadd.f32 %v785, %v899
      %v996 = vadd.f32 %v786, %v901
      %v997 = vadd.f32 %v787, %v900
      %v998 = vperm.slane %v689, 2
      %v999 = vmul.f32 %v618, %v998
      %v1000 = vmul.f32 %v619, %v998
      %v1001 = vmul.f32 %v620, %v998
      %v1002 = vmul.f32 %v622, %v998
      %v1003 = vmul.f32 %v623, %v998
      %v1004 = vmul.f32 %v624, %v998
      %v1005 = vmul.f32 %v626, %v998
      %v1006 = vmul.f32 %v627, %v998
      %v1007 = vmul.f32 %v628, %v998
      %v1008 = vmul.f32 %v630, %v998
      %v1009 = vmul.f32 %v631, %v998
      %v1010 = vmul.f32 %v632, %v998
      %v1011 = vmul.f32 %v634, %v998
      %v1012 = vmul.f32 %v635, %v998
      %v1013 = vmul.f32 %v636, %v998
      %v1014 = vmul.f32 %v638, %v998
      %v1015 = vmul.f32 %v639, %v998
      %v1016 = vmul.f32 %v640, %v998
      %v1017 = vmul.f32 %v642, %v998
      %v1018 = vmul.f32 %v643, %v998
      %v1019 = vmul.f32 %v644, %v998
      %v1020 = vmul.f32 %v646, %v998
      %v1021 = vmul.f32 %v647, %v998
      %v1022 = vmul.f32 %v648, %v998
      %v1023 = vmul.f32 %v650, %v998
      %v1024 = vmul.f32 %v651, %v998
      %v1025 = vmul.f32 %v652, %v998
      %v1026 = vmul.f32 %v654, %v998
      %v1027 = vmul.f32 %v655, %v998
      %v1028 = vmul.f32 %v656, %v998
      %v1029 = vmul.f32 %v658, %v998
      %v1030 = vmul.f32 %v659, %v998
      %v1031 = vmul.f32 %v660, %v998
      %v1032 = vmul.f32 %v662, %v998
      %v1033 = vmul.f32 %v663, %v998
      %v1034 = vmul.f32 %v664, %v998
      %v1035 = vmul.f32 %v666, %v998
      %v1036 = vmul.f32 %v667, %v998
      %v1037 = vmul.f32 %v668, %v998
      %v1038 = vmul.f32 %v670, %v998
      %v1039 = vmul.f32 %v671, %v998
      %v1040 = vmul.f32 %v672, %v998
      %v1041 = vmul.f32 %v674, %v998
      %v1042 = vmul.f32 %v675, %v998
      %v1043 = vmul.f32 %v676, %v998
      %v1044 = vmul.f32 %v678, %v998
      %v1045 = vmul.f32 %v679, %v998
      %v1046 = vmul.f32 %v680, %v998
      %vm1095 = vcmask 1045504
      %v1096 = vrot.slane %v999, 2
      %v1097 = vrot.slane %v1000, 2
      %v1098 = vsel %vm1095, %v1096, %v1097
      %v1099 = vrot.slane %v1001, 2
      %v1100 = vsel %vm1095, %v1097, %v1099
      %v1101 = vrot.slane %v1002, 2
      %v1102 = vrot.slane %v1003, 2
      %v1103 = vsel %vm1095, %v1101, %v1102
      %v1104 = vrot.slane %v1004, 2
      %v1105 = vsel %vm1095, %v1102, %v1104
      %v1106 = vrot.slane %v1005, 2
      %v1107 = vrot.slane %v1006, 2
      %v1108 = vsel %vm1095, %v1106, %v1107
      %v1109 = vrot.slane %v1007, 2
      %v1110 = vsel %vm1095, %v1107, %v1109
      %v1111 = vrot.slane %v1008, 2
      %v1112 = vrot.slane %v1009, 2
      %v1113 = vsel %vm1095, %v1111, %v1112
      %v1114 = vrot.slane %v1010, 2
      %v1115 = vsel %vm1095, %v1112, %v1114
      %v1116 = vrot.slane %v1011, 2
      %v1117 = vrot.slane %v1012, 2
      %v1118 = vsel %vm1095, %v1116, %v1117
      %v1119 = vrot.slane %v1013, 2
      %v1120 = vsel %vm1095, %v1117, %v1119
      %v1121 = vrot.slane %v1014, 2
      %v1122 = vrot.slane %v1015, 2
      %v1123 = vsel %vm1095, %v1121, %v1122
      %v1124 = vrot.slane %v1016, 2
      %v1125 = vsel %vm1095, %v1122, %v1124
      %v1126 = vrot.slane %v1017, 2
      %v1127 = vrot.slane %v1018, 2
      %v1128 = vsel %vm1095, %v1126, %v1127
      %v1129 = vrot.slane %v1019, 2
      %v1130 = vsel %vm1095, %v1127, %v1129
      %v1131 = vrot.slane %v1020, 2
      %v1132 = vrot.slane %v1021, 2
      %v1133 = vsel %vm1095, %v1131, %v1132
      %v1134 = vrot.slane %v1022, 2
      %v1135 = vsel %vm1095, %v1132, %v1134
      %v1136 = vrot.slane %v1023, 2
      %v1137 = vrot.slane %v1024, 2
      %v1138 = vsel %vm1095, %v1136, %v1137
      %v1139 = vrot.slane %v1025, 2
      %v1140 = vsel %vm1095, %v1137, %v1139
      %v1141 = vrot.slane %v1026, 2
      %v1142 = vrot.slane %v1027, 2
      %v1143 = vsel %vm1095, %v1141, %v1142
      %v1144 = vrot.slane %v1028, 2
      %v1145 = vsel %vm1095, %v1142, %v1144
      %v1146 = vrot.slane %v1029, 2
      %v1147 = vrot.slane %v1030, 2
      %v1148 = vsel %vm1095, %v1146, %v1147
      %v1149 = vrot.slane %v1031, 2
      %v1150 = vsel %vm1095, %v1147, %v1149
      %v1151 = vrot.slane %v1032, 2
      %v1152 = vrot.slane %v1033, 2
      %v1153 = vsel %vm1095, %v1151, %v1152
      %v1154 = vrot.slane %v1034, 2
      %v1155 = vsel %vm1095, %v1152, %v1154
      %v1156 = vrot.slane %v1035, 2
      %v1157 = vrot.slane %v1036, 2
      %v1158 = vsel %vm1095, %v1156, %v1157
      %v1159 = vrot.slane %v1037, 2
      %v1160 = vsel %vm1095, %v1157, %v1159
      %v1161 = vrot.slane %v1038, 2
      %v1162 = vrot.slane %v1039, 2
      %v1163 = vsel %vm1095, %v1161, %v1162
      %v1164 = vrot.slane %v1040, 2
      %v1165 = vsel %vm1095, %v1162, %v1164
      %v1166 = vrot.slane %v1041, 2
      %v1167 = vrot.slane %v1042, 2
      %v1168 = vsel %vm1095, %v1166, %v1167
      %v1169 = vrot.slane %v1043, 2
      %v1170 = vsel %vm1095, %v1167, %v1169
      %v1171 = vrot.slane %v1044, 2
      %v1172 = vrot.slane %v1045, 2
      %v1173 = vsel %vm1095, %v1171, %v1172
      %v1174 = vrot.slane %v1046, 2
      %v1175 = vsel %vm1095, %v1172, %v1174
      %v1224 = vadd.f32 %v950, %v1096
      %v1225 = vadd.f32 %v951, %v1098
      %v1226 = vadd.f32 %v952, %v1100
      %v1227 = vadd.f32 %v953, %v1101
      %v1228 = vadd.f32 %v954, %v1103
      %v1229 = vadd.f32 %v955, %v1105
      %v1230 = vadd.f32 %v956, %v1106
      %v1231 = vadd.f32 %v957, %v1108
      %v1232 = vadd.f32 %v958, %v1110
      %v1233 = vadd.f32 %v959, %v1111
      %v1234 = vadd.f32 %v960, %v1113
      %v1235 = vadd.f32 %v961, %v1115
      %v1236 = vadd.f32 %v962, %v1116
      %v1237 = vadd.f32 %v963, %v1118
      %v1238 = vadd.f32 %v964, %v1120
      %v1239 = vadd.f32 %v965, %v1121
      %v1240 = vadd.f32 %v966, %v1123
      %v1241 = vadd.f32 %v967, %v1125
      %v1242 = vadd.f32 %v968, %v1126
      %v1243 = vadd.f32 %v969, %v1128
      %v1244 = vadd.f32 %v970, %v1130
      %v1245 = vadd.f32 %v971, %v1131
      %v1246 = vadd.f32 %v972, %v1133
      %v1247 = vadd.f32 %v973, %v1135
      %v1248 = vadd.f32 %v974, %v1136
      %v1249 = vadd.f32 %v975, %v1138
      %v1250 = vadd.f32 %v976, %v1140
      %v1251 = vadd.f32 %v977, %v1141
      %v1252 = vadd.f32 %v978, %v1143
      %v1253 = vadd.f32 %v979, %v1145
      %v1254 = vadd.f32 %v980, %v1146
      %v1255 = vadd.f32 %v981, %v1148
      %v1256 = vadd.f32 %v982, %v1150
      %v1257 = vadd.f32 %v983, %v1151
      %v1258 = vadd.f32 %v984, %v1153
      %v1259 = vadd.f32 %v985, %v1155
      %v1260 = vadd.f32 %v986, %v1156
      %v1261 = vadd.f32 %v987, %v1158
      %v1262 = vadd.f32 %v988, %v1160
      %v1263 = vadd.f32 %v989, %v1161
      %v1264 = vadd.f32 %v990, %v1163
      %v1265 = vadd.f32 %v991, %v1165
      %v1266 = vadd.f32 %v992, %v1166
      %v1267 = vadd.f32 %v993, %v1168
      %v1268 = vadd.f32 %v994, %v1170
      %v1269 = vadd.f32 %v995, %v1171
      %v1270 = vadd.f32 %v996, %v1173
      %v1271 = vadd.f32 %v997, %v1175
      %v1272 = vperm.slane %v689, 3
      %v1273 = vmul.f32 %v621, %v1272
      %v1274 = vmul.f32 %v622, %v1272
      %v1275 = vmul.f32 %v623, %v1272
      %v1276 = vmul.f32 %v625, %v1272
      %v1277 = vmul.f32 %v626, %v1272
      %v1278 = vmul.f32 %v627, %v1272
      %v1279 = vmul.f32 %v629, %v1272
      %v1280 = vmul.f32 %v630, %v1272
      %v1281 = vmul.f32 %v631, %v1272
      %v1282 = vmul.f32 %v633, %v1272
      %v1283 = vmul.f32 %v634, %v1272
      %v1284 = vmul.f32 %v635, %v1272
      %v1285 = vmul.f32 %v637, %v1272
      %v1286 = vmul.f32 %v638, %v1272
      %v1287 = vmul.f32 %v639, %v1272
      %v1288 = vmul.f32 %v641, %v1272
      %v1289 = vmul.f32 %v642, %v1272
      %v1290 = vmul.f32 %v643, %v1272
      %v1291 = vmul.f32 %v645, %v1272
      %v1292 = vmul.f32 %v646, %v1272
      %v1293 = vmul.f32 %v647, %v1272
      %v1294 = vmul.f32 %v649, %v1272
      %v1295 = vmul.f32 %v650, %v1272
      %v1296 = vmul.f32 %v651, %v1272
      %v1297 = vmul.f32 %v653, %v1272
      %v1298 = vmul.f32 %v654, %v1272
      %v1299 = vmul.f32 %v655, %v1272
      %v1300 = vmul.f32 %v657, %v1272
      %v1301 = vmul.f32 %v658, %v1272
      %v1302 = vmul.f32 %v659, %v1272
      %v1303 = vmul.f32 %v661, %v1272
      %v1304 = vmul.f32 %v662, %v1272
      %v1305 = vmul.f32 %v663, %v1272
      %v1306 = vmul.f32 %v665, %v1272
      %v1307 = vmul.f32 %v666, %v1272
      %v1308 = vmul.f32 %v667, %v1272
      %v1309 = vmul.f32 %v669, %v1272
      %v1310 = vmul.f32 %v670, %v1272
      %v1311 = vmul.f32 %v671, %v1272
      %v1312 = vmul.f32 %v673, %v1272
      %v1313 = vmul.f32 %v674, %v1272
      %v1314 = vmul.f32 %v675, %v1272
      %v1315 = vmul.f32 %v677, %v1272
      %v1316 = vmul.f32 %v678, %v1272
      %v1317 = vmul.f32 %v679, %v1272
      %v1318 = vmul.f32 %v681, %v1272
      %v1319 = vmul.f32 %v682, %v1272
      %v1320 = vmul.f32 %v683, %v1272
      %v1321 = vadd.f32 %v1224, %v1273
      %v1322 = vadd.f32 %v1225, %v1274
      %v1323 = vadd.f32 %v1226, %v1275
      %v1324 = vadd.f32 %v1227, %v1276
      %v1325 = vadd.f32 %v1228, %v1277
      %v1326 = vadd.f32 %v1229, %v1278
      %v1327 = vadd.f32 %v1230, %v1279
      %v1328 = vadd.f32 %v1231, %v1280
      %v1329 = vadd.f32 %v1232, %v1281
      %v1330 = vadd.f32 %v1233, %v1282
      %v1331 = vadd.f32 %v1234, %v1283
      %v1332 = vadd.f32 %v1235, %v1284
      %v1333 = vadd.f32 %v1236, %v1285
      %v1334 = vadd.f32 %v1237, %v1286
      %v1335 = vadd.f32 %v1238, %v1287
      %v1336 = vadd.f32 %v1239, %v1288
      %v1337 = vadd.f32 %v1240, %v1289
      %v1338 = vadd.f32 %v1241, %v1290
      %v1339 = vadd.f32 %v1242, %v1291
      %v1340 = vadd.f32 %v1243, %v1292
      %v1341 = vadd.f32 %v1244, %v1293
      %v1342 = vadd.f32 %v1245, %v1294
      %v1343 = vadd.f32 %v1246, %v1295
      %v1344 = vadd.f32 %v1247, %v1296
      %v1345 = vadd.f32 %v1248, %v1297
      %v1346 = vadd.f32 %v1249, %v1298
      %v1347 = vadd.f32 %v1250, %v1299
      %v1348 = vadd.f32 %v1251, %v1300
      %v1349 = vadd.f32 %v1252, %v1301
      %v1350 = vadd.f32 %v1253, %v1302
      %v1351 = vadd.f32 %v1254, %v1303
      %v1352 = vadd.f32 %v1255, %v1304
      %v1353 = vadd.f32 %v1256, %v1305
      %v1354 = vadd.f32 %v1257, %v1306
      %v1355 = vadd.f32 %v1258, %v1307
      %v1356 = vadd.f32 %v1259, %v1308
      %v1357 = vadd.f32 %v1260, %v1309
      %v1358 = vadd.f32 %v1261, %v1310
      %v1359 = vadd.f32 %v1262, %v1311
      %v1360 = vadd.f32 %v1263, %v1312
      %v1361 = vadd.f32 %v1264, %v1313
      %v1362 = vadd.f32 %v1265, %v1314
      %v1363 = vadd.f32 %v1266, %v1315
      %v1364 = vadd.f32 %v1267, %v1316
      %v1365 = vadd.f32 %v1268, %v1317
      %v1366 = vadd.f32 %v1269, %v1318
      %v1367 = vadd.f32 %v1270, %v1319
      %v1368 = vadd.f32 %v1271, %v1320
      %v1369 = vperm.slane %v689, 4
      %v1370 = vmul.f32 %v622, %v1369
      %v1371 = vmul.f32 %v623, %v1369
      %v1372 = vmul.f32 %v626, %v1369
      %v1373 = vmul.f32 %v627, %v1369
      %v1374 = vmul.f32 %v630, %v1369
      %v1375 = vmul.f32 %v631, %v1369
      %v1376 = vmul.f32 %v634, %v1369
      %v1377 = vmul.f32 %v635, %v1369
      %v1378 = vmul.f32 %v638, %v1369
      %v1379 = vmul.f32 %v639, %v1369
      %v1380 = vmul.f32 %v642, %v1369
      %v1381 = vmul.f32 %v643, %v1369
      %v1382 = vmul.f32 %v646, %v1369
      %v1383 = vmul.f32 %v647, %v1369
      %v1384 = vmul.f32 %v650, %v1369
      %v1385 = vmul.f32 %v651, %v1369
      %v1386 = vmul.f32 %v654, %v1369
      %v1387 = vmul.f32 %v655, %v1369
      %v1388 = vmul.f32 %v658, %v1369
      %v1389 = vmul.f32 %v659, %v1369
      %v1390 = vmul.f32 %v662, %v1369
      %v1391 = vmul.f32 %v663, %v1369
      %v1392 = vmul.f32 %v666, %v1369
      %v1393 = vmul.f32 %v667, %v1369
      %v1394 = vmul.f32 %v670, %v1369
      %v1395 = vmul.f32 %v671, %v1369
      %v1396 = vmul.f32 %v674, %v1369
      %v1397 = vmul.f32 %v675, %v1369
      %v1398 = vmul.f32 %v678, %v1369
      %v1399 = vmul.f32 %v679, %v1369
      %v1400 = vmul.f32 %v682, %v1369
      %v1401 = vmul.f32 %v683, %v1369
      %v1434 = vrot.slane %v1370, 1
      %v1435 = vrot.slane %v1371, 1
      %v1436 = vsel %vm853, %v1434, %v1435
      %v1437 = vrot.slane %v1372, 1
      %v1438 = vrot.slane %v1373, 1
      %v1439 = vsel %vm853, %v1437, %v1438
      %v1440 = vrot.slane %v1374, 1
      %v1441 = vrot.slane %v1375, 1
      %v1442 = vsel %vm853, %v1440, %v1441
      %v1443 = vrot.slane %v1376, 1
      %v1444 = vrot.slane %v1377, 1
      %v1445 = vsel %vm853, %v1443, %v1444
      %v1446 = vrot.slane %v1378, 1
      %v1447 = vrot.slane %v1379, 1
      %v1448 = vsel %vm853, %v1446, %v1447
      %v1449 = vrot.slane %v1380, 1
      %v1450 = vrot.slane %v1381, 1
      %v1451 = vsel %vm853, %v1449, %v1450
      %v1452 = vrot.slane %v1382, 1
      %v1453 = vrot.slane %v1383, 1
      %v1454 = vsel %vm853, %v1452, %v1453
      %v1455 = vrot.slane %v1384, 1
      %v1456 = vrot.slane %v1385, 1
      %v1457 = vsel %vm853, %v1455, %v1456
      %v1458 = vrot.slane %v1386, 1
      %v1459 = vrot.slane %v1387, 1
      %v1460 = vsel %vm853, %v1458, %v1459
      %v1461 = vrot.slane %v1388, 1
      %v1462 = vrot.slane %v1389, 1
      %v1463 = vsel %vm853, %v1461, %v1462
      %v1464 = vrot.slane %v1390, 1
      %v1465 = vrot.slane %v1391, 1
      %v1466 = vsel %vm853, %v1464, %v1465
      %v1467 = vrot.slane %v1392, 1
      %v1468 = vrot.slane %v1393, 1
      %v1469 = vsel %vm853, %v1467, %v1468
      %v1470 = vrot.slane %v1394, 1
      %v1471 = vrot.slane %v1395, 1
      %v1472 = vsel %vm853, %v1470, %v1471
      %v1473 = vrot.slane %v1396, 1
      %v1474 = vrot.slane %v1397, 1
      %v1475 = vsel %vm853, %v1473, %v1474
      %v1476 = vrot.slane %v1398, 1
      %v1477 = vrot.slane %v1399, 1
      %v1478 = vsel %vm853, %v1476, %v1477
      %v1479 = vrot.slane %v1400, 1
      %v1480 = vrot.slane %v1401, 1
      %v1481 = vsel %vm853, %v1479, %v1480
      %v1530 = vadd.f32 %v1321, %v1434
      %v1531 = vadd.f32 %v1322, %v1436
      %v1532 = vadd.f32 %v1323, %v1435
      %v1533 = vadd.f32 %v1324, %v1437
      %v1534 = vadd.f32 %v1325, %v1439
      %v1535 = vadd.f32 %v1326, %v1438
      %v1536 = vadd.f32 %v1327, %v1440
      %v1537 = vadd.f32 %v1328, %v1442
      %v1538 = vadd.f32 %v1329, %v1441
      %v1539 = vadd.f32 %v1330, %v1443
      %v1540 = vadd.f32 %v1331, %v1445
      %v1541 = vadd.f32 %v1332, %v1444
      %v1542 = vadd.f32 %v1333, %v1446
      %v1543 = vadd.f32 %v1334, %v1448
      %v1544 = vadd.f32 %v1335, %v1447
      %v1545 = vadd.f32 %v1336, %v1449
      %v1546 = vadd.f32 %v1337, %v1451
      %v1547 = vadd.f32 %v1338, %v1450
      %v1548 = vadd.f32 %v1339, %v1452
      %v1549 = vadd.f32 %v1340, %v1454
      %v1550 = vadd.f32 %v1341, %v1453
      %v1551 = vadd.f32 %v1342, %v1455
      %v1552 = vadd.f32 %v1343, %v1457
      %v1553 = vadd.f32 %v1344, %v1456
      %v1554 = vadd.f32 %v1345, %v1458
      %v1555 = vadd.f32 %v1346, %v1460
      %v1556 = vadd.f32 %v1347, %v1459
      %v1557 = vadd.f32 %v1348, %v1461
      %v1558 = vadd.f32 %v1349, %v1463
      %v1559 = vadd.f32 %v1350, %v1462
      %v1560 = vadd.f32 %v1351, %v1464
      %v1561 = vadd.f32 %v1352, %v1466
      %v1562 = vadd.f32 %v1353, %v1465
      %v1563 = vadd.f32 %v1354, %v1467
      %v1564 = vadd.f32 %v1355, %v1469
      %v1565 = vadd.f32 %v1356, %v1468
      %v1566 = vadd.f32 %v1357, %v1470
      %v1567 = vadd.f32 %v1358, %v1472
      %v1568 = vadd.f32 %v1359, %v1471
      %v1569 = vadd.f32 %v1360, %v1473
      %v1570 = vadd.f32 %v1361, %v1475
      %v1571 = vadd.f32 %v1362, %v1474
      %v1572 = vadd.f32 %v1363, %v1476
      %v1573 = vadd.f32 %v1364, %v1478
      %v1574 = vadd.f32 %v1365, %v1477
      %v1575 = vadd.f32 %v1366, %v1479
      %v1576 = vadd.f32 %v1367, %v1481
      %v1577 = vadd.f32 %v1368, %v1480
      %v1578 = vperm.slane %v689, 5
      %v1579 = vmul.f32 %v622, %v1578
      %v1580 = vmul.f32 %v623, %v1578
      %v1581 = vmul.f32 %v624, %v1578
      %v1582 = vmul.f32 %v626, %v1578
      %v1583 = vmul.f32 %v627, %v1578
      %v1584 = vmul.f32 %v628, %v1578
      %v1585 = vmul.f32 %v630, %v1578
      %v1586 = vmul.f32 %v631, %v1578
      %v1587 = vmul.f32 %v632, %v1578
      %v1588 = vmul.f32 %v634, %v1578
      %v1589 = vmul.f32 %v635, %v1578
      %v1590 = vmul.f32 %v636, %v1578
      %v1591 = vmul.f32 %v638, %v1578
      %v1592 = vmul.f32 %v639, %v1578
      %v1593 = vmul.f32 %v640, %v1578
      %v1594 = vmul.f32 %v642, %v1578
      %v1595 = vmul.f32 %v643, %v1578
      %v1596 = vmul.f32 %v644, %v1578
      %v1597 = vmul.f32 %v646, %v1578
      %v1598 = vmul.f32 %v647, %v1578
      %v1599 = vmul.f32 %v648, %v1578
      %v1600 = vmul.f32 %v650, %v1578
      %v1601 = vmul.f32 %v651, %v1578
      %v1602 = vmul.f32 %v652, %v1578
      %v1603 = vmul.f32 %v654, %v1578
      %v1604 = vmul.f32 %v655, %v1578
      %v1605 = vmul.f32 %v656, %v1578
      %v1606 = vmul.f32 %v658, %v1578
      %v1607 = vmul.f32 %v659, %v1578
      %v1608 = vmul.f32 %v660, %v1578
      %v1609 = vmul.f32 %v662, %v1578
      %v1610 = vmul.f32 %v663, %v1578
      %v1611 = vmul.f32 %v664, %v1578
      %v1612 = vmul.f32 %v666, %v1578
      %v1613 = vmul.f32 %v667, %v1578
      %v1614 = vmul.f32 %v668, %v1578
      %v1615 = vmul.f32 %v670, %v1578
      %v1616 = vmul.f32 %v671, %v1578
      %v1617 = vmul.f32 %v672, %v1578
      %v1618 = vmul.f32 %v674, %v1578
      %v1619 = vmul.f32 %v675, %v1578
      %v1620 = vmul.f32 %v676, %v1578
      %v1621 = vmul.f32 %v678, %v1578
      %v1622 = vmul.f32 %v679, %v1578
      %v1623 = vmul.f32 %v680, %v1578
      %v1624 = vmul.f32 %v682, %v1578
      %v1625 = vmul.f32 %v683, %v1578
      %v1626 = vmul.f32 %v684, %v1578
      %v1675 = vrot.slane %v1579, 2
      %v1676 = vrot.slane %v1580, 2
      %v1677 = vsel %vm1095, %v1675, %v1676
      %v1678 = vrot.slane %v1581, 2
      %v1679 = vsel %vm1095, %v1676, %v1678
      %v1680 = vrot.slane %v1582, 2
      %v1681 = vrot.slane %v1583, 2
      %v1682 = vsel %vm1095, %v1680, %v1681
      %v1683 = vrot.slane %v1584, 2
      %v1684 = vsel %vm1095, %v1681, %v1683
      %v1685 = vrot.slane %v1585, 2
      %v1686 = vrot.slane %v1586, 2
      %v1687 = vsel %vm1095, %v1685, %v1686
      %v1688 = vrot.slane %v1587, 2
      %v1689 = vsel %vm1095, %v1686, %v1688
      %v1690 = vrot.slane %v1588, 2
      %v1691 = vrot.slane %v1589, 2
      %v1692 = vsel %vm1095, %v1690, %v1691
      %v1693 = vrot.slane %v1590, 2
      %v1694 = vsel %vm1095, %v1691, %v1693
      %v1695 = vrot.slane %v1591, 2
      %v1696 = vrot.slane %v1592, 2
      %v1697 = vsel %vm1095, %v1695, %v1696
      %v1698 = vrot.slane %v1593, 2
      %v1699 = vsel %vm1095, %v1696, %v1698
      %v1700 = vrot.slane %v1594, 2
      %v1701 = vrot.slane %v1595, 2
      %v1702 = vsel %vm1095, %v1700, %v1701
      %v1703 = vrot.slane %v1596, 2
      %v1704 = vsel %vm1095, %v1701, %v1703
      %v1705 = vrot.slane %v1597, 2
      %v1706 = vrot.slane %v1598, 2
      %v1707 = vsel %vm1095, %v1705, %v1706
      %v1708 = vrot.slane %v1599, 2
      %v1709 = vsel %vm1095, %v1706, %v1708
      %v1710 = vrot.slane %v1600, 2
      %v1711 = vrot.slane %v1601, 2
      %v1712 = vsel %vm1095, %v1710, %v1711
      %v1713 = vrot.slane %v1602, 2
      %v1714 = vsel %vm1095, %v1711, %v1713
      %v1715 = vrot.slane %v1603, 2
      %v1716 = vrot.slane %v1604, 2
      %v1717 = vsel %vm1095, %v1715, %v1716
      %v1718 = vrot.slane %v1605, 2
      %v1719 = vsel %vm1095, %v1716, %v1718
      %v1720 = vrot.slane %v1606, 2
      %v1721 = vrot.slane %v1607, 2
      %v1722 = vsel %vm1095, %v1720, %v1721
      %v1723 = vrot.slane %v1608, 2
      %v1724 = vsel %vm1095, %v1721, %v1723
      %v1725 = vrot.slane %v1609, 2
      %v1726 = vrot.slane %v1610, 2
      %v1727 = vsel %vm1095, %v1725, %v1726
      %v1728 = vrot.slane %v1611, 2
      %v1729 = vsel %vm1095, %v1726, %v1728
      %v1730 = vrot.slane %v1612, 2
      %v1731 = vrot.slane %v1613, 2
      %v1732 = vsel %vm1095, %v1730, %v1731
      %v1733 = vrot.slane %v1614, 2
      %v1734 = vsel %vm1095, %v1731, %v1733
      %v1735 = vrot.slane %v1615, 2
      %v1736 = vrot.slane %v1616, 2
      %v1737 = vsel %vm1095, %v1735, %v1736
      %v1738 = vrot.slane %v1617, 2
      %v1739 = vsel %vm1095, %v1736, %v1738
      %v1740 = vrot.slane %v1618, 2
      %v1741 = vrot.slane %v1619, 2
      %v1742 = vsel %vm1095, %v1740, %v1741
      %v1743 = vrot.slane %v1620, 2
      %v1744 = vsel %vm1095, %v1741, %v1743
      %v1745 = vrot.slane %v1621, 2
      %v1746 = vrot.slane %v1622, 2
      %v1747 = vsel %vm1095, %v1745, %v1746
      %v1748 = vrot.slane %v1623, 2
      %v1749 = vsel %vm1095, %v1746, %v1748
      %v1750 = vrot.slane %v1624, 2
      %v1751 = vrot.slane %v1625, 2
      %v1752 = vsel %vm1095, %v1750, %v1751
      %v1753 = vrot.slane %v1626, 2
      %v1754 = vsel %vm1095, %v1751, %v1753
      %v1803 = vadd.f32 %v1530, %v1675
      %v1804 = vadd.f32 %v1531, %v1677
      %v1805 = vadd.f32 %v1532, %v1679
      %v1806 = vadd.f32 %v1533, %v1680
      %v1807 = vadd.f32 %v1534, %v1682
      %v1808 = vadd.f32 %v1535, %v1684
      %v1809 = vadd.f32 %v1536, %v1685
      %v1810 = vadd.f32 %v1537, %v1687
      %v1811 = vadd.f32 %v1538, %v1689
      %v1812 = vadd.f32 %v1539, %v1690
      %v1813 = vadd.f32 %v1540, %v1692
      %v1814 = vadd.f32 %v1541, %v1694
      %v1815 = vadd.f32 %v1542, %v1695
      %v1816 = vadd.f32 %v1543, %v1697
      %v1817 = vadd.f32 %v1544, %v1699
      %v1818 = vadd.f32 %v1545, %v1700
      %v1819 = vadd.f32 %v1546, %v1702
      %v1820 = vadd.f32 %v1547, %v1704
      %v1821 = vadd.f32 %v1548, %v1705
      %v1822 = vadd.f32 %v1549, %v1707
      %v1823 = vadd.f32 %v1550, %v1709
      %v1824 = vadd.f32 %v1551, %v1710
      %v1825 = vadd.f32 %v1552, %v1712
      %v1826 = vadd.f32 %v1553, %v1714
      %v1827 = vadd.f32 %v1554, %v1715
      %v1828 = vadd.f32 %v1555, %v1717
      %v1829 = vadd.f32 %v1556, %v1719
      %v1830 = vadd.f32 %v1557, %v1720
      %v1831 = vadd.f32 %v1558, %v1722
      %v1832 = vadd.f32 %v1559, %v1724
      %v1833 = vadd.f32 %v1560, %v1725
      %v1834 = vadd.f32 %v1561, %v1727
      %v1835 = vadd.f32 %v1562, %v1729
      %v1836 = vadd.f32 %v1563, %v1730
      %v1837 = vadd.f32 %v1564, %v1732
      %v1838 = vadd.f32 %v1565, %v1734
      %v1839 = vadd.f32 %v1566, %v1735
      %v1840 = vadd.f32 %v1567, %v1737
      %v1841 = vadd.f32 %v1568, %v1739
      %v1842 = vadd.f32 %v1569, %v1740
      %v1843 = vadd.f32 %v1570, %v1742
      %v1844 = vadd.f32 %v1571, %v1744
      %v1845 = vadd.f32 %v1572, %v1745
      %v1846 = vadd.f32 %v1573, %v1747
      %v1847 = vadd.f32 %v1574, %v1749
      %v1848 = vadd.f32 %v1575, %v1750
      %v1849 = vadd.f32 %v1576, %v1752
      %v1850 = vadd.f32 %v1577, %v1754
      %v1851 = vperm.slane %v689, 6
      %v1852 = vmul.f32 %v625, %v1851
      %v1853 = vmul.f32 %v626, %v1851
      %v1854 = vmul.f32 %v627, %v1851
      %v1855 = vmul.f32 %v629, %v1851
      %v1856 = vmul.f32 %v630, %v1851
      %v1857 = vmul.f32 %v631, %v1851
      %v1858 = vmul.f32 %v633, %v1851
      %v1859 = vmul.f32 %v634, %v1851
      %v1860 = vmul.f32 %v635, %v1851
      %v1861 = vmul.f32 %v637, %v1851
      %v1862 = vmul.f32 %v638, %v1851
      %v1863 = vmul.f32 %v639, %v1851
      %v1864 = vmul.f32 %v641, %v1851
      %v1865 = vmul.f32 %v642, %v1851
      %v1866 = vmul.f32 %v643, %v1851
      %v1867 = vmul.f32 %v645, %v1851
      %v1868 = vmul.f32 %v646, %v1851
      %v1869 = vmul.f32 %v647, %v1851
      %v1870 = vmul.f32 %v649, %v1851
      %v1871 = vmul.f32 %v650, %v1851
      %v1872 = vmul.f32 %v651, %v1851
      %v1873 = vmul.f32 %v653, %v1851
      %v1874 = vmul.f32 %v654, %v1851
      %v1875 = vmul.f32 %v655, %v1851
      %v1876 = vmul.f32 %v657, %v1851
      %v1877 = vmul.f32 %v658, %v1851
      %v1878 = vmul.f32 %v659, %v1851
      %v1879 = vmul.f32 %v661, %v1851
      %v1880 = vmul.f32 %v662, %v1851
      %v1881 = vmul.f32 %v663, %v1851
      %v1882 = vmul.f32 %v665, %v1851
      %v1883 = vmul.f32 %v666, %v1851
      %v1884 = vmul.f32 %v667, %v1851
      %v1885 = vmul.f32 %v669, %v1851
      %v1886 = vmul.f32 %v670, %v1851
      %v1887 = vmul.f32 %v671, %v1851
      %v1888 = vmul.f32 %v673, %v1851
      %v1889 = vmul.f32 %v674, %v1851
      %v1890 = vmul.f32 %v675, %v1851
      %v1891 = vmul.f32 %v677, %v1851
      %v1892 = vmul.f32 %v678, %v1851
      %v1893 = vmul.f32 %v679, %v1851
      %v1894 = vmul.f32 %v681, %v1851
      %v1895 = vmul.f32 %v682, %v1851
      %v1896 = vmul.f32 %v683, %v1851
      %v1897 = vmul.f32 %v685, %v1851
      %v1898 = vmul.f32 %v686, %v1851
      %v1899 = vmul.f32 %v687, %v1851
      %v1900 = vadd.f32 %v1803, %v1852
      %v1901 = vadd.f32 %v1804, %v1853
      %v1902 = vadd.f32 %v1805, %v1854
      %v1903 = vadd.f32 %v1806, %v1855
      %v1904 = vadd.f32 %v1807, %v1856
      %v1905 = vadd.f32 %v1808, %v1857
      %v1906 = vadd.f32 %v1809, %v1858
      %v1907 = vadd.f32 %v1810, %v1859
      %v1908 = vadd.f32 %v1811, %v1860
      %v1909 = vadd.f32 %v1812, %v1861
      %v1910 = vadd.f32 %v1813, %v1862
      %v1911 = vadd.f32 %v1814, %v1863
      %v1912 = vadd.f32 %v1815, %v1864
      %v1913 = vadd.f32 %v1816, %v1865
      %v1914 = vadd.f32 %v1817, %v1866
      %v1915 = vadd.f32 %v1818, %v1867
      %v1916 = vadd.f32 %v1819, %v1868
      %v1917 = vadd.f32 %v1820, %v1869
      %v1918 = vadd.f32 %v1821, %v1870
      %v1919 = vadd.f32 %v1822, %v1871
      %v1920 = vadd.f32 %v1823, %v1872
      %v1921 = vadd.f32 %v1824, %v1873
      %v1922 = vadd.f32 %v1825, %v1874
      %v1923 = vadd.f32 %v1826, %v1875
      %v1924 = vadd.f32 %v1827, %v1876
      %v1925 = vadd.f32 %v1828, %v1877
      %v1926 = vadd.f32 %v1829, %v1878
      %v1927 = vadd.f32 %v1830, %v1879
      %v1928 = vadd.f32 %v1831, %v1880
      %v1929 = vadd.f32 %v1832, %v1881
      %v1930 = vadd.f32 %v1833, %v1882
      %v1931 = vadd.f32 %v1834, %v1883
      %v1932 = vadd.f32 %v1835, %v1884
      %v1933 = vadd.f32 %v1836, %v1885
      %v1934 = vadd.f32 %v1837, %v1886
      %v1935 = vadd.f32 %v1838, %v1887
      %v1936 = vadd.f32 %v1839, %v1888
      %v1937 = vadd.f32 %v1840, %v1889
      %v1938 = vadd.f32 %v1841, %v1890
      %v1939 = vadd.f32 %v1842, %v1891
      %v1940 = vadd.f32 %v1843, %v1892
      %v1941 = vadd.f32 %v1844, %v1893
      %v1942 = vadd.f32 %v1845, %v1894
      %v1943 = vadd.f32 %v1846, %v1895
      %v1944 = vadd.f32 %v1847, %v1896
      %v1945 = vadd.f32 %v1848, %v1897
      %v1946 = vadd.f32 %v1849, %v1898
      %v1947 = vadd.f32 %v1850, %v1899
      %v1948 = vperm.slane %v689, 7
      %v1949 = vmul.f32 %v626, %v1948
      %v1950 = vmul.f32 %v627, %v1948
      %v1951 = vmul.f32 %v630, %v1948
      %v1952 = vmul.f32 %v631, %v1948
      %v1953 = vmul.f32 %v634, %v1948
      %v1954 = vmul.f32 %v635, %v1948
      %v1955 = vmul.f32 %v638, %v1948
      %v1956 = vmul.f32 %v639, %v1948
      %v1957 = vmul.f32 %v642, %v1948
      %v1958 = vmul.f32 %v643, %v1948
      %v1959 = vmul.f32 %v646, %v1948
      %v1960 = vmul.f32 %v647, %v1948
      %v1961 = vmul.f32 %v650, %v1948
      %v1962 = vmul.f32 %v651, %v1948
      %v1963 = vmul.f32 %v654, %v1948
      %v1964 = vmul.f32 %v655, %v1948
      %v1965 = vmul.f32 %v658, %v1948
      %v1966 = vmul.f32 %v659, %v1948
      %v1967 = vmul.f32 %v662, %v1948
      %v1968 = vmul.f32 %v663, %v1948
      %v1969 = vmul.f32 %v666, %v1948
      %v1970 = vmul.f32 %v667, %v1948
      %v1971 = vmul.f32 %v670, %v1948
      %v1972 = vmul.f32 %v671, %v1948
      %v1973 = vmul.f32 %v674, %v1948
      %v1974 = vmul.f32 %v675, %v1948
      %v1975 = vmul.f32 %v678, %v1948
      %v1976 = vmul.f32 %v679, %v1948
      %v1977 = vmul.f32 %v682, %v1948
      %v1978 = vmul.f32 %v683, %v1948
      %v1979 = vmul.f32 %v686, %v1948
      %v1980 = vmul.f32 %v687, %v1948
      %v2013 = vrot.slane %v1949, 1
      %v2014 = vrot.slane %v1950, 1
      %v2015 = vsel %vm853, %v2013, %v2014
      %v2016 = vrot.slane %v1951, 1
      %v2017 = vrot.slane %v1952, 1
      %v2018 = vsel %vm853, %v2016, %v2017
      %v2019 = vrot.slane %v1953, 1
      %v2020 = vrot.slane %v1954, 1
      %v2021 = vsel %vm853, %v2019, %v2020
      %v2022 = vrot.slane %v1955, 1
      %v2023 = vrot.slane %v1956, 1
      %v2024 = vsel %vm853, %v2022, %v2023
      %v2025 = vrot.slane %v1957, 1
      %v2026 = vrot.slane %v1958, 1
      %v2027 = vsel %vm853, %v2025, %v2026
      %v2028 = vrot.slane %v1959, 1
      %v2029 = vrot.slane %v1960, 1
      %v2030 = vsel %vm853, %v2028, %v2029
      %v2031 = vrot.slane %v1961, 1
      %v2032 = vrot.slane %v1962, 1
      %v2033 = vsel %vm853, %v2031, %v2032
      %v2034 = vrot.slane %v1963, 1
      %v2035 = vrot.slane %v1964, 1
      %v2036 = vsel %vm853, %v2034, %v2035
      %v2037 = vrot.slane %v1965, 1
      %v2038 = vrot.slane %v1966, 1
      %v2039 = vsel %vm853, %v2037, %v2038
      %v2040 = vrot.slane %v1967, 1
      %v2041 = vrot.slane %v1968, 1
      %v2042 = vsel %vm853, %v2040, %v2041
      %v2043 = vrot.slane %v1969, 1
      %v2044 = vrot.slane %v1970, 1
      %v2045 = vsel %vm853, %v2043, %v2044
      %v2046 = vrot.slane %v1971, 1
      %v2047 = vrot.slane %v1972, 1
      %v2048 = vsel %vm853, %v2046, %v2047
      %v2049 = vrot.slane %v1973, 1
      %v2050 = vrot.slane %v1974, 1
      %v2051 = vsel %vm853, %v2049, %v2050
      %v2052 = vrot.slane %v1975, 1
      %v2053 = vrot.slane %v1976, 1
      %v2054 = vsel %vm853, %v2052, %v2053
      %v2055 = vrot.slane %v1977, 1
      %v2056 = vrot.slane %v1978, 1
      %v2057 = vsel %vm853, %v2055, %v2056
      %v2058 = vrot.slane %v1979, 1
      %v2059 = vrot.slane %v1980, 1
      %v2060 = vsel %vm853, %v2058, %v2059
      %v2109 = vadd.f32 %v1900, %v2013
      %v2110 = vadd.f32 %v1901, %v2015
      %v2111 = vadd.f32 %v1902, %v2014
      %v2112 = vadd.f32 %v1903, %v2016
      %v2113 = vadd.f32 %v1904, %v2018
      %v2114 = vadd.f32 %v1905, %v2017
      %v2115 = vadd.f32 %v1906, %v2019
      %v2116 = vadd.f32 %v1907, %v2021
      %v2117 = vadd.f32 %v1908, %v2020
      %v2118 = vadd.f32 %v1909, %v2022
      %v2119 = vadd.f32 %v1910, %v2024
      %v2120 = vadd.f32 %v1911, %v2023
      %v2121 = vadd.f32 %v1912, %v2025
      %v2122 = vadd.f32 %v1913, %v2027
      %v2123 = vadd.f32 %v1914, %v2026
      %v2124 = vadd.f32 %v1915, %v2028
      %v2125 = vadd.f32 %v1916, %v2030
      %v2126 = vadd.f32 %v1917, %v2029
      %v2127 = vadd.f32 %v1918, %v2031
      %v2128 = vadd.f32 %v1919, %v2033
      %v2129 = vadd.f32 %v1920, %v2032
      %v2130 = vadd.f32 %v1921, %v2034
      %v2131 = vadd.f32 %v1922, %v2036
      %v2132 = vadd.f32 %v1923, %v2035
      %v2133 = vadd.f32 %v1924, %v2037
      %v2134 = vadd.f32 %v1925, %v2039
      %v2135 = vadd.f32 %v1926, %v2038
      %v2136 = vadd.f32 %v1927, %v2040
      %v2137 = vadd.f32 %v1928, %v2042
      %v2138 = vadd.f32 %v1929, %v2041
      %v2139 = vadd.f32 %v1930, %v2043
      %v2140 = vadd.f32 %v1931, %v2045
      %v2141 = vadd.f32 %v1932, %v2044
      %v2142 = vadd.f32 %v1933, %v2046
      %v2143 = vadd.f32 %v1934, %v2048
      %v2144 = vadd.f32 %v1935, %v2047
      %v2145 = vadd.f32 %v1936, %v2049
      %v2146 = vadd.f32 %v1937, %v2051
      %v2147 = vadd.f32 %v1938, %v2050
      %v2148 = vadd.f32 %v1939, %v2052
      %v2149 = vadd.f32 %v1940, %v2054
      %v2150 = vadd.f32 %v1941, %v2053
      %v2151 = vadd.f32 %v1942, %v2055
      %v2152 = vadd.f32 %v1943, %v2057
      %v2153 = vadd.f32 %v1944, %v2056
      %v2154 = vadd.f32 %v1945, %v2058
      %v2155 = vadd.f32 %v1946, %v2060
      %v2156 = vadd.f32 %v1947, %v2059
      %v2157 = vperm.slane %v690, 0
      %v2158 = vmul.f32 %v626, %v2157
      %v2159 = vmul.f32 %v627, %v2157
      %v2160 = vmul.f32 %v628, %v2157
      %v2161 = vmul.f32 %v630, %v2157
      %v2162 = vmul.f32 %v631, %v2157
      %v2163 = vmul.f32 %v632, %v2157
      %v2164 = vmul.f32 %v634, %v2157
      %v2165 = vmul.f32 %v635, %v2157
      %v2166 = vmul.f32 %v636, %v2157
      %v2167 = vmul.f32 %v638, %v2157
      %v2168 = vmul.f32 %v639, %v2157
      %v2169 = vmul.f32 %v640, %v2157
      %v2170 = vmul.f32 %v642, %v2157
      %v2171 = vmul.f32 %v643, %v2157
      %v2172 = vmul.f32 %v644, %v2157
      %v2173 = vmul.f32 %v646, %v2157
      %v2174 = vmul.f32 %v647, %v2157
      %v2175 = vmul.f32 %v648, %v2157
      %v2176 = vmul.f32 %v650, %v2157
      %v2177 = vmul.f32 %v651, %v2157
      %v2178 = vmul.f32 %v652, %v2157
      %v2179 = vmul.f32 %v654, %v2157
      %v2180 = vmul.f32 %v655, %v2157
      %v2181 = vmul.f32 %v656, %v2157
      %v2182 = vmul.f32 %v658, %v2157
      %v2183 = vmul.f32 %v659, %v2157
      %v2184 = vmul.f32 %v660, %v2157
      %v2185 = vmul.f32 %v662, %v2157
      %v2186 = vmul.f32 %v663, %v2157
      %v2187 = vmul.f32 %v664, %v2157
      %v2188 = vmul.f32 %v666, %v2157
      %v2189 = vmul.f32 %v667, %v2157
      %v2190 = vmul.f32 %v668, %v2157
      %v2191 = vmul.f32 %v670, %v2157
      %v2192 = vmul.f32 %v671, %v2157
      %v2193 = vmul.f32 %v672, %v2157
      %v2194 = vmul.f32 %v674, %v2157
      %v2195 = vmul.f32 %v675, %v2157
      %v2196 = vmul.f32 %v676, %v2157
      %v2197 = vmul.f32 %v678, %v2157
      %v2198 = vmul.f32 %v679, %v2157
      %v2199 = vmul.f32 %v680, %v2157
      %v2200 = vmul.f32 %v682, %v2157
      %v2201 = vmul.f32 %v683, %v2157
      %v2202 = vmul.f32 %v684, %v2157
      %v2203 = vmul.f32 %v686, %v2157
      %v2204 = vmul.f32 %v687, %v2157
      %v2205 = vmul.f32 %v688, %v2157
      %v2254 = vrot.slane %v2158, 2
      %v2255 = vrot.slane %v2159, 2
      %v2256 = vsel %vm1095, %v2254, %v2255
      %v2257 = vrot.slane %v2160, 2
      %v2258 = vsel %vm1095, %v2255, %v2257
      %v2259 = vrot.slane %v2161, 2
      %v2260 = vrot.slane %v2162, 2
      %v2261 = vsel %vm1095, %v2259, %v2260
      %v2262 = vrot.slane %v2163, 2
      %v2263 = vsel %vm1095, %v2260, %v2262
      %v2264 = vrot.slane %v2164, 2
      %v2265 = vrot.slane %v2165, 2
      %v2266 = vsel %vm1095, %v2264, %v2265
      %v2267 = vrot.slane %v2166, 2
      %v2268 = vsel %vm1095, %v2265, %v2267
      %v2269 = vrot.slane %v2167, 2
      %v2270 = vrot.slane %v2168, 2
      %v2271 = vsel %vm1095, %v2269, %v2270
      %v2272 = vrot.slane %v2169, 2
      %v2273 = vsel %vm1095, %v2270, %v2272
      %v2274 = vrot.slane %v2170, 2
      %v2275 = vrot.slane %v2171, 2
      %v2276 = vsel %vm1095, %v2274, %v2275
      %v2277 = vrot.slane %v2172, 2
      %v2278 = vsel %vm1095, %v2275, %v2277
      %v2279 = vrot.slane %v2173, 2
      %v2280 = vrot.slane %v2174, 2
      %v2281 = vsel %vm1095, %v2279, %v2280
      %v2282 = vrot.slane %v2175, 2
      %v2283 = vsel %vm1095, %v2280, %v2282
      %v2284 = vrot.slane %v2176, 2
      %v2285 = vrot.slane %v2177, 2
      %v2286 = vsel %vm1095, %v2284, %v2285
      %v2287 = vrot.slane %v2178, 2
      %v2288 = vsel %vm1095, %v2285, %v2287
      %v2289 = vrot.slane %v2179, 2
      %v2290 = vrot.slane %v2180, 2
      %v2291 = vsel %vm1095, %v2289, %v2290
      %v2292 = vrot.slane %v2181, 2
      %v2293 = vsel %vm1095, %v2290, %v2292
      %v2294 = vrot.slane %v2182, 2
      %v2295 = vrot.slane %v2183, 2
      %v2296 = vsel %vm1095, %v2294, %v2295
      %v2297 = vrot.slane %v2184, 2
      %v2298 = vsel %vm1095, %v2295, %v2297
      %v2299 = vrot.slane %v2185, 2
      %v2300 = vrot.slane %v2186, 2
      %v2301 = vsel %vm1095, %v2299, %v2300
      %v2302 = vrot.slane %v2187, 2
      %v2303 = vsel %vm1095, %v2300, %v2302
      %v2304 = vrot.slane %v2188, 2
      %v2305 = vrot.slane %v2189, 2
      %v2306 = vsel %vm1095, %v2304, %v2305
      %v2307 = vrot.slane %v2190, 2
      %v2308 = vsel %vm1095, %v2305, %v2307
      %v2309 = vrot.slane %v2191, 2
      %v2310 = vrot.slane %v2192, 2
      %v2311 = vsel %vm1095, %v2309, %v2310
      %v2312 = vrot.slane %v2193, 2
      %v2313 = vsel %vm1095, %v2310, %v2312
      %v2314 = vrot.slane %v2194, 2
      %v2315 = vrot.slane %v2195, 2
      %v2316 = vsel %vm1095, %v2314, %v2315
      %v2317 = vrot.slane %v2196, 2
      %v2318 = vsel %vm1095, %v2315, %v2317
      %v2319 = vrot.slane %v2197, 2
      %v2320 = vrot.slane %v2198, 2
      %v2321 = vsel %vm1095, %v2319, %v2320
      %v2322 = vrot.slane %v2199, 2
      %v2323 = vsel %vm1095, %v2320, %v2322
      %v2324 = vrot.slane %v2200, 2
      %v2325 = vrot.slane %v2201, 2
      %v2326 = vsel %vm1095, %v2324, %v2325
      %v2327 = vrot.slane %v2202, 2
      %v2328 = vsel %vm1095, %v2325, %v2327
      %v2329 = vrot.slane %v2203, 2
      %v2330 = vrot.slane %v2204, 2
      %v2331 = vsel %vm1095, %v2329, %v2330
      %v2332 = vrot.slane %v2205, 2
      %v2333 = vsel %vm1095, %v2330, %v2332
      %v2382 = vadd.f32 %v2109, %v2254
      %v2383 = vadd.f32 %v2110, %v2256
      %v2384 = vadd.f32 %v2111, %v2258
      %v2385 = vadd.f32 %v2112, %v2259
      %v2386 = vadd.f32 %v2113, %v2261
      %v2387 = vadd.f32 %v2114, %v2263
      %v2388 = vadd.f32 %v2115, %v2264
      %v2389 = vadd.f32 %v2116, %v2266
      %v2390 = vadd.f32 %v2117, %v2268
      %v2391 = vadd.f32 %v2118, %v2269
      %v2392 = vadd.f32 %v2119, %v2271
      %v2393 = vadd.f32 %v2120, %v2273
      %v2394 = vadd.f32 %v2121, %v2274
      %v2395 = vadd.f32 %v2122, %v2276
      %v2396 = vadd.f32 %v2123, %v2278
      %v2397 = vadd.f32 %v2124, %v2279
      %v2398 = vadd.f32 %v2125, %v2281
      %v2399 = vadd.f32 %v2126, %v2283
      %v2400 = vadd.f32 %v2127, %v2284
      %v2401 = vadd.f32 %v2128, %v2286
      %v2402 = vadd.f32 %v2129, %v2288
      %v2403 = vadd.f32 %v2130, %v2289
      %v2404 = vadd.f32 %v2131, %v2291
      %v2405 = vadd.f32 %v2132, %v2293
      %v2406 = vadd.f32 %v2133, %v2294
      %v2407 = vadd.f32 %v2134, %v2296
      %v2408 = vadd.f32 %v2135, %v2298
      %v2409 = vadd.f32 %v2136, %v2299
      %v2410 = vadd.f32 %v2137, %v2301
      %v2411 = vadd.f32 %v2138, %v2303
      %v2412 = vadd.f32 %v2139, %v2304
      %v2413 = vadd.f32 %v2140, %v2306
      %v2414 = vadd.f32 %v2141, %v2308
      %v2415 = vadd.f32 %v2142, %v2309
      %v2416 = vadd.f32 %v2143, %v2311
      %v2417 = vadd.f32 %v2144, %v2313
      %v2418 = vadd.f32 %v2145, %v2314
      %v2419 = vadd.f32 %v2146, %v2316
      %v2420 = vadd.f32 %v2147, %v2318
      %v2421 = vadd.f32 %v2148, %v2319
      %v2422 = vadd.f32 %v2149, %v2321
      %v2423 = vadd.f32 %v2150, %v2323
      %v2424 = vadd.f32 %v2151, %v2324
      %v2425 = vadd.f32 %v2152, %v2326
      %v2426 = vadd.f32 %v2153, %v2328
      %v2427 = vadd.f32 %v2154, %v2329
      %v2428 = vadd.f32 %v2155, %v2331
      %v2429 = vadd.f32 %v2156, %v2333
      %v2430 = vpack.c.bf16 %v2382, %v2382
      %v2431 = vpack.c.bf16 %v2383, %v2383
      %v2432 = vpack.c.bf16 %v2384, %v2384
      %v2433 = vpack.c.bf16 %v2385, %v2385
      %v2434 = vpack.c.bf16 %v2386, %v2386
      %v2435 = vpack.c.bf16 %v2387, %v2387
      %v2436 = vpack.c.bf16 %v2388, %v2388
      %v2437 = vpack.c.bf16 %v2389, %v2389
      %v2438 = vpack.c.bf16 %v2390, %v2390
      %v2439 = vpack.c.bf16 %v2391, %v2391
      %v2440 = vpack.c.bf16 %v2392, %v2392
      %v2441 = vpack.c.bf16 %v2393, %v2393
      %v2442 = vpack.c.bf16 %v2394, %v2394
      %v2443 = vpack.c.bf16 %v2395, %v2395
      %v2444 = vpack.c.bf16 %v2396, %v2396
      %v2445 = vpack.c.bf16 %v2397, %v2397
      %v2446 = vpack.c.bf16 %v2398, %v2398
      %v2447 = vpack.c.bf16 %v2399, %v2399
      %v2448 = vpack.c.bf16 %v2400, %v2400
      %v2449 = vpack.c.bf16 %v2401, %v2401
      %v2450 = vpack.c.bf16 %v2402, %v2402
      %v2451 = vpack.c.bf16 %v2403, %v2403
      %v2452 = vpack.c.bf16 %v2404, %v2404
      %v2453 = vpack.c.bf16 %v2405, %v2405
      %v2454 = vpack.c.bf16 %v2406, %v2406
      %v2455 = vpack.c.bf16 %v2407, %v2407
      %v2456 = vpack.c.bf16 %v2408, %v2408
      %v2457 = vpack.c.bf16 %v2409, %v2409
      %v2458 = vpack.c.bf16 %v2410, %v2410
      %v2459 = vpack.c.bf16 %v2411, %v2411
      %v2460 = vpack.c.bf16 %v2412, %v2412
      %v2461 = vpack.c.bf16 %v2413, %v2413
      %v2462 = vpack.c.bf16 %v2414, %v2414
      %v2463 = vpack.c.bf16 %v2415, %v2415
      %v2464 = vpack.c.bf16 %v2416, %v2416
      %v2465 = vpack.c.bf16 %v2417, %v2417
      %v2466 = vpack.c.bf16 %v2418, %v2418
      %v2467 = vpack.c.bf16 %v2419, %v2419
      %v2468 = vpack.c.bf16 %v2420, %v2420
      %v2469 = vpack.c.bf16 %v2421, %v2421
      %v2470 = vpack.c.bf16 %v2422, %v2422
      %v2471 = vpack.c.bf16 %v2423, %v2423
      %v2472 = vpack.c.bf16 %v2424, %v2424
      %v2473 = vpack.c.bf16 %v2425, %v2425
      %v2474 = vpack.c.bf16 %v2426, %v2426
      %v2475 = vpack.c.bf16 %v2427, %v2427
      %v2476 = vpack.c.bf16 %v2428, %v2428
      %v2477 = vpack.c.bf16 %v2429, %v2429
      %vm2478 = vsmask.f32 256
      %vm2479 = vsmask.f32 4368
      %vm2480 = vmor %vm2478, %vm2479
      %v2482 = vshrl.u32 %v2430, 16
      %v2484 = vrot.slane %v2482, 7
      %v2485 = vrot.slane %v2484, 4
      %v2487 = vshrl.u32 %v2431, 16
      %v2489 = vrot.slane %v2487, 7
      %v2490 = vshll.u32 %v2431, 16
      %v2492 = vor.u32 %v2489, %v2490
      %v2493 = vsel %vm2480, %v2485, %v2492
      %v2494 = vrot.slane %v2489, 4
      %v2496 = vshrl.u32 %v2432, 16
      %v2498 = vrot.slane %v2496, 7
      %v2499 = vshll.u32 %v2432, 16
      %v2501 = vor.u32 %v2498, %v2499
      %v2502 = vsel %vm2480, %v2494, %v2501
      %v2504 = vshrl.u32 %v2433, 16
      %v2506 = vrot.slane %v2504, 7
      %v2507 = vrot.slane %v2506, 4
      %v2509 = vshrl.u32 %v2434, 16
      %v2511 = vrot.slane %v2509, 7
      %v2512 = vshll.u32 %v2434, 16
      %v2514 = vor.u32 %v2511, %v2512
      %v2515 = vsel %vm2480, %v2507, %v2514
      %v2516 = vrot.slane %v2511, 4
      %v2518 = vshrl.u32 %v2435, 16
      %v2520 = vrot.slane %v2518, 7
      %v2521 = vshll.u32 %v2435, 16
      %v2523 = vor.u32 %v2520, %v2521
      %v2524 = vsel %vm2480, %v2516, %v2523
      %v2526 = vshrl.u32 %v2436, 16
      %v2528 = vrot.slane %v2526, 7
      %v2529 = vrot.slane %v2528, 4
      %v2531 = vshrl.u32 %v2437, 16
      %v2533 = vrot.slane %v2531, 7
      %v2534 = vshll.u32 %v2437, 16
      %v2536 = vor.u32 %v2533, %v2534
      %v2537 = vsel %vm2480, %v2529, %v2536
      %v2538 = vrot.slane %v2533, 4
      %v2540 = vshrl.u32 %v2438, 16
      %v2542 = vrot.slane %v2540, 7
      %v2543 = vshll.u32 %v2438, 16
      %v2545 = vor.u32 %v2542, %v2543
      %v2546 = vsel %vm2480, %v2538, %v2545
      %v2548 = vshrl.u32 %v2439, 16
      %v2550 = vrot.slane %v2548, 7
      %v2551 = vrot.slane %v2550, 4
      %v2553 = vshrl.u32 %v2440, 16
      %v2555 = vrot.slane %v2553, 7
      %v2556 = vshll.u32 %v2440, 16
      %v2558 = vor.u32 %v2555, %v2556
      %v2559 = vsel %vm2480, %v2551, %v2558
      %v2560 = vrot.slane %v2555, 4
      %v2562 = vshrl.u32 %v2441, 16
      %v2564 = vrot.slane %v2562, 7
      %v2565 = vshll.u32 %v2441, 16
      %v2567 = vor.u32 %v2564, %v2565
      %v2568 = vsel %vm2480, %v2560, %v2567
      %v2570 = vshrl.u32 %v2442, 16
      %v2572 = vrot.slane %v2570, 7
      %v2573 = vrot.slane %v2572, 4
      %v2575 = vshrl.u32 %v2443, 16
      %v2577 = vrot.slane %v2575, 7
      %v2578 = vshll.u32 %v2443, 16
      %v2580 = vor.u32 %v2577, %v2578
      %v2581 = vsel %vm2480, %v2573, %v2580
      %v2582 = vrot.slane %v2577, 4
      %v2584 = vshrl.u32 %v2444, 16
      %v2586 = vrot.slane %v2584, 7
      %v2587 = vshll.u32 %v2444, 16
      %v2589 = vor.u32 %v2586, %v2587
      %v2590 = vsel %vm2480, %v2582, %v2589
      %v2592 = vshrl.u32 %v2445, 16
      %v2594 = vrot.slane %v2592, 7
      %v2595 = vrot.slane %v2594, 4
      %v2597 = vshrl.u32 %v2446, 16
      %v2599 = vrot.slane %v2597, 7
      %v2600 = vshll.u32 %v2446, 16
      %v2602 = vor.u32 %v2599, %v2600
      %v2603 = vsel %vm2480, %v2595, %v2602
      %v2604 = vrot.slane %v2599, 4
      %v2606 = vshrl.u32 %v2447, 16
      %v2608 = vrot.slane %v2606, 7
      %v2609 = vshll.u32 %v2447, 16
      %v2611 = vor.u32 %v2608, %v2609
      %v2612 = vsel %vm2480, %v2604, %v2611
      %v2614 = vshrl.u32 %v2448, 16
      %v2616 = vrot.slane %v2614, 7
      %v2617 = vrot.slane %v2616, 4
      %v2619 = vshrl.u32 %v2449, 16
      %v2621 = vrot.slane %v2619, 7
      %v2622 = vshll.u32 %v2449, 16
      %v2624 = vor.u32 %v2621, %v2622
      %v2625 = vsel %vm2480, %v2617, %v2624
      %v2626 = vrot.slane %v2621, 4
      %v2628 = vshrl.u32 %v2450, 16
      %v2630 = vrot.slane %v2628, 7
      %v2631 = vshll.u32 %v2450, 16
      %v2633 = vor.u32 %v2630, %v2631
      %v2634 = vsel %vm2480, %v2626, %v2633
      %v2636 = vshrl.u32 %v2451, 16
      %v2638 = vrot.slane %v2636, 7
      %v2639 = vrot.slane %v2638, 4
      %v2641 = vshrl.u32 %v2452, 16
      %v2643 = vrot.slane %v2641, 7
      %v2644 = vshll.u32 %v2452, 16
      %v2646 = vor.u32 %v2643, %v2644
      %v2647 = vsel %vm2480, %v2639, %v2646
      %v2648 = vrot.slane %v2643, 4
      %v2650 = vshrl.u32 %v2453, 16
      %v2652 = vrot.slane %v2650, 7
      %v2653 = vshll.u32 %v2453, 16
      %v2655 = vor.u32 %v2652, %v2653
      %v2656 = vsel %vm2480, %v2648, %v2655
      %v2658 = vshrl.u32 %v2454, 16
      %v2660 = vrot.slane %v2658, 7
      %v2661 = vrot.slane %v2660, 4
      %v2663 = vshrl.u32 %v2455, 16
      %v2665 = vrot.slane %v2663, 7
      %v2666 = vshll.u32 %v2455, 16
      %v2668 = vor.u32 %v2665, %v2666
      %v2669 = vsel %vm2480, %v2661, %v2668
      %v2670 = vrot.slane %v2665, 4
      %v2672 = vshrl.u32 %v2456, 16
      %v2674 = vrot.slane %v2672, 7
      %v2675 = vshll.u32 %v2456, 16
      %v2677 = vor.u32 %v2674, %v2675
      %v2678 = vsel %vm2480, %v2670, %v2677
      %v2680 = vshrl.u32 %v2457, 16
      %v2682 = vrot.slane %v2680, 7
      %v2683 = vrot.slane %v2682, 4
      %v2685 = vshrl.u32 %v2458, 16
      %v2687 = vrot.slane %v2685, 7
      %v2688 = vshll.u32 %v2458, 16
      %v2690 = vor.u32 %v2687, %v2688
      %v2691 = vsel %vm2480, %v2683, %v2690
      %v2692 = vrot.slane %v2687, 4
      %v2694 = vshrl.u32 %v2459, 16
      %v2696 = vrot.slane %v2694, 7
      %v2697 = vshll.u32 %v2459, 16
      %v2699 = vor.u32 %v2696, %v2697
      %v2700 = vsel %vm2480, %v2692, %v2699
      %v2702 = vshrl.u32 %v2460, 16
      %v2704 = vrot.slane %v2702, 7
      %v2705 = vrot.slane %v2704, 4
      %v2707 = vshrl.u32 %v2461, 16
      %v2709 = vrot.slane %v2707, 7
      %v2710 = vshll.u32 %v2461, 16
      %v2712 = vor.u32 %v2709, %v2710
      %v2713 = vsel %vm2480, %v2705, %v2712
      %v2714 = vrot.slane %v2709, 4
      %v2716 = vshrl.u32 %v2462, 16
      %v2718 = vrot.slane %v2716, 7
      %v2719 = vshll.u32 %v2462, 16
      %v2721 = vor.u32 %v2718, %v2719
      %v2722 = vsel %vm2480, %v2714, %v2721
      %v2724 = vshrl.u32 %v2463, 16
      %v2726 = vrot.slane %v2724, 7
      %v2727 = vrot.slane %v2726, 4
      %v2729 = vshrl.u32 %v2464, 16
      %v2731 = vrot.slane %v2729, 7
      %v2732 = vshll.u32 %v2464, 16
      %v2734 = vor.u32 %v2731, %v2732
      %v2735 = vsel %vm2480, %v2727, %v2734
      %v2736 = vrot.slane %v2731, 4
      %v2738 = vshrl.u32 %v2465, 16
      %v2740 = vrot.slane %v2738, 7
      %v2741 = vshll.u32 %v2465, 16
      %v2743 = vor.u32 %v2740, %v2741
      %v2744 = vsel %vm2480, %v2736, %v2743
      %v2746 = vshrl.u32 %v2466, 16
      %v2748 = vrot.slane %v2746, 7
      %v2749 = vrot.slane %v2748, 4
      %v2751 = vshrl.u32 %v2467, 16
      %v2753 = vrot.slane %v2751, 7
      %v2754 = vshll.u32 %v2467, 16
      %v2756 = vor.u32 %v2753, %v2754
      %v2757 = vsel %vm2480, %v2749, %v2756
      %v2758 = vrot.slane %v2753, 4
      %v2760 = vshrl.u32 %v2468, 16
      %v2762 = vrot.slane %v2760, 7
      %v2763 = vshll.u32 %v2468, 16
      %v2765 = vor.u32 %v2762, %v2763
      %v2766 = vsel %vm2480, %v2758, %v2765
      %v2768 = vshrl.u32 %v2469, 16
      %v2770 = vrot.slane %v2768, 7
      %v2771 = vrot.slane %v2770, 4
      %v2773 = vshrl.u32 %v2470, 16
      %v2775 = vrot.slane %v2773, 7
      %v2776 = vshll.u32 %v2470, 16
      %v2778 = vor.u32 %v2775, %v2776
      %v2779 = vsel %vm2480, %v2771, %v2778
      %v2780 = vrot.slane %v2775, 4
      %v2782 = vshrl.u32 %v2471, 16
      %v2784 = vrot.slane %v2782, 7
      %v2785 = vshll.u32 %v2471, 16
      %v2787 = vor.u32 %v2784, %v2785
      %v2788 = vsel %vm2480, %v2780, %v2787
      %v2790 = vshrl.u32 %v2472, 16
      %v2792 = vrot.slane %v2790, 7
      %v2793 = vrot.slane %v2792, 4
      %v2795 = vshrl.u32 %v2473, 16
      %v2797 = vrot.slane %v2795, 7
      %v2798 = vshll.u32 %v2473, 16
      %v2800 = vor.u32 %v2797, %v2798
      %v2801 = vsel %vm2480, %v2793, %v2800
      %v2802 = vrot.slane %v2797, 4
      %v2804 = vshrl.u32 %v2474, 16
      %v2806 = vrot.slane %v2804, 7
      %v2807 = vshll.u32 %v2474, 16
      %v2809 = vor.u32 %v2806, %v2807
      %v2810 = vsel %vm2480, %v2802, %v2809
      %v2812 = vshrl.u32 %v2475, 16
      %v2814 = vrot.slane %v2812, 7
      %v2815 = vrot.slane %v2814, 4
      %v2817 = vshrl.u32 %v2476, 16
      %v2819 = vrot.slane %v2817, 7
      %v2820 = vshll.u32 %v2476, 16
      %v2822 = vor.u32 %v2819, %v2820
      %v2823 = vsel %vm2480, %v2815, %v2822
      %v2824 = vrot.slane %v2819, 4
      %v2826 = vshrl.u32 %v2477, 16
      %v2828 = vrot.slane %v2826, 7
      %v2829 = vshll.u32 %v2477, 16
      %v2831 = vor.u32 %v2828, %v2829
      %v2832 = vsel %vm2480, %v2824, %v2831
      %2865 = vst [vmem:[%s316] sm:$0xf] %v2493
      %2866 = vst [vmem:[%s316 + $0x4] sm:$0xf] %v2502
      %2867 = vst [vmem:[%s316 + $0x8] sm:$0xf] %v2515
      %2868 = vst [vmem:[%s316 + $0xc] sm:$0xf] %v2524
      %2869 = vst [vmem:[%s316 + $0x10] sm:$0xf] %v2537
      %2870 = vst [vmem:[%s316 + $0x14] sm:$0xf] %v2546
      %2871 = vst [vmem:[%s316 + $0x18] sm:$0xf] %v2559
      %2872 = vst [vmem:[%s316 + $0x1c] sm:$0xf] %v2568
      %2873 = vst [vmem:[%s316 + $0x20] sm:$0xf] %v2581
      %2874 = vst [vmem:[%s316 + $0x24] sm:$0xf] %v2590
      %2875 = vst [vmem:[%s316 + $0x28] sm:$0xf] %v2603
      %2876 = vst [vmem:[%s316 + $0x2c] sm:$0xf] %v2612
      %2877 = vst [vmem:[%s316 + $0x30] sm:$0xf] %v2625
      %2878 = vst [vmem:[%s316 + $0x34] sm:$0xf] %v2634
      %2879 = vst [vmem:[%s316 + $0x38] sm:$0xf] %v2647
      %2880 = vst [vmem:[%s316 + $0x3c] sm:$0xf] %v2656
      %2881 = vst [vmem:[%s316 + $0x40] sm:$0xf] %v2669
      %2882 = vst [vmem:[%s316 + $0x44] sm:$0xf] %v2678
      %2883 = vst [vmem:[%s316 + $0x48] sm:$0xf] %v2691
      %2884 = vst [vmem:[%s316 + $0x4c] sm:$0xf] %v2700
      %2885 = vst [vmem:[%s316 + $0x50] sm:$0xf] %v2713
      %2886 = vst [vmem:[%s316 + $0x54] sm:$0xf] %v2722
      %2887 = vst [vmem:[%s316 + $0x58] sm:$0xf] %v2735
      %2888 = vst [vmem:[%s316 + $0x5c] sm:$0xf] %v2744
      %2889 = vst [vmem:[%s316 + $0x60] sm:$0xf] %v2757
      %2890 = vst [vmem:[%s316 + $0x64] sm:$0xf] %v2766
      %2891 = vst [vmem:[%s316 + $0x68] sm:$0xf] %v2779
      %2892 = vst [vmem:[%s316 + $0x6c] sm:$0xf] %v2788
      %2893 = vst [vmem:[%s316 + $0x70] sm:$0xf] %v2801
      %2894 = vst [vmem:[%s316 + $0x74] sm:$0xf] %v2810
      %2895 = vst [vmem:[%s316 + $0x78] sm:$0xf] %v2823
      %2896 = vst [vmem:[%s316 + $0x7c] sm:$0xf] %v2832
      %v2897 = vunpack.c.l.bf16 %v2430
      %v2898 = vunpack.c.l.bf16 %v2431
      %v2899 = vunpack.c.l.bf16 %v2432
      %v2900 = vunpack.c.l.bf16 %v2433
      %v2901 = vunpack.c.l.bf16 %v2434
      %v2902 = vunpack.c.l.bf16 %v2435
      %v2903 = vunpack.c.l.bf16 %v2436
      %v2904 = vunpack.c.l.bf16 %v2437
      %v2905 = vunpack.c.l.bf16 %v2438
      %v2906 = vunpack.c.l.bf16 %v2439
      %v2907 = vunpack.c.l.bf16 %v2440
      %v2908 = vunpack.c.l.bf16 %v2441
      %v2909 = vunpack.c.l.bf16 %v2442
      %v2910 = vunpack.c.l.bf16 %v2443
      %v2911 = vunpack.c.l.bf16 %v2444
      %v2912 = vunpack.c.l.bf16 %v2445
      %v2913 = vunpack.c.l.bf16 %v2446
      %v2914 = vunpack.c.l.bf16 %v2447
      %v2915 = vunpack.c.l.bf16 %v2448
      %v2916 = vunpack.c.l.bf16 %v2449
      %v2917 = vunpack.c.l.bf16 %v2450
      %v2918 = vunpack.c.l.bf16 %v2451
      %v2919 = vunpack.c.l.bf16 %v2452
      %v2920 = vunpack.c.l.bf16 %v2453
      %v2921 = vunpack.c.l.bf16 %v2454
      %v2922 = vunpack.c.l.bf16 %v2455
      %v2923 = vunpack.c.l.bf16 %v2456
      %v2924 = vunpack.c.l.bf16 %v2457
      %v2925 = vunpack.c.l.bf16 %v2458
      %v2926 = vunpack.c.l.bf16 %v2459
      %v2927 = vunpack.c.l.bf16 %v2460
      %v2928 = vunpack.c.l.bf16 %v2461
      %v2929 = vunpack.c.l.bf16 %v2462
      %v2930 = vunpack.c.l.bf16 %v2463
      %v2931 = vunpack.c.l.bf16 %v2464
      %v2932 = vunpack.c.l.bf16 %v2465
      %v2933 = vunpack.c.l.bf16 %v2466
      %v2934 = vunpack.c.l.bf16 %v2467
      %v2935 = vunpack.c.l.bf16 %v2468
      %v2936 = vunpack.c.l.bf16 %v2469
      %v2937 = vunpack.c.l.bf16 %v2470
      %v2938 = vunpack.c.l.bf16 %v2471
      %v2939 = vunpack.c.l.bf16 %v2472
      %v2940 = vunpack.c.l.bf16 %v2473
      %v2941 = vunpack.c.l.bf16 %v2474
      %v2942 = vunpack.c.l.bf16 %v2475
      %v2943 = vunpack.c.l.bf16 %v2476
      %v2944 = vunpack.c.l.bf16 %v2477
      %vm2993 = vcmask 1040384
      %v2994 = vrot.slane %v2897, 7
      %v2995 = vrot.slane %v2898, 7
      %v2996 = vsel %vm2993, %v2994, %v2995
      %v2997 = vrot.slane %v2899, 7
      %v2998 = vsel %vm2993, %v2995, %v2997
      %v2999 = vrot.slane %v2900, 7
      %v3000 = vrot.slane %v2901, 7
      %v3001 = vsel %vm2993, %v2999, %v3000
      %v3002 = vrot.slane %v2902, 7
      %v3003 = vsel %vm2993, %v3000, %v3002
      %v3004 = vrot.slane %v2903, 7
      %v3005 = vrot.slane %v2904, 7
      %v3006 = vsel %vm2993, %v3004, %v3005
      %v3007 = vrot.slane %v2905, 7
      %v3008 = vsel %vm2993, %v3005, %v3007
      %v3009 = vrot.slane %v2906, 7
      %v3010 = vrot.slane %v2907, 7
      %v3011 = vsel %vm2993, %v3009, %v3010
      %v3012 = vrot.slane %v2908, 7
      %v3013 = vsel %vm2993, %v3010, %v3012
      %v3014 = vrot.slane %v2909, 7
      %v3015 = vrot.slane %v2910, 7
      %v3016 = vsel %vm2993, %v3014, %v3015
      %v3017 = vrot.slane %v2911, 7
      %v3018 = vsel %vm2993, %v3015, %v3017
      %v3019 = vrot.slane %v2912, 7
      %v3020 = vrot.slane %v2913, 7
      %v3021 = vsel %vm2993, %v3019, %v3020
      %v3022 = vrot.slane %v2914, 7
      %v3023 = vsel %vm2993, %v3020, %v3022
      %v3024 = vrot.slane %v2915, 7
      %v3025 = vrot.slane %v2916, 7
      %v3026 = vsel %vm2993, %v3024, %v3025
      %v3027 = vrot.slane %v2917, 7
      %v3028 = vsel %vm2993, %v3025, %v3027
      %v3029 = vrot.slane %v2918, 7
      %v3030 = vrot.slane %v2919, 7
      %v3031 = vsel %vm2993, %v3029, %v3030
      %v3032 = vrot.slane %v2920, 7
      %v3033 = vsel %vm2993, %v3030, %v3032
      %v3034 = vrot.slane %v2921, 7
      %v3035 = vrot.slane %v2922, 7
      %v3036 = vsel %vm2993, %v3034, %v3035
      %v3037 = vrot.slane %v2923, 7
      %v3038 = vsel %vm2993, %v3035, %v3037
      %v3039 = vrot.slane %v2924, 7
      %v3040 = vrot.slane %v2925, 7
      %v3041 = vsel %vm2993, %v3039, %v3040
      %v3042 = vrot.slane %v2926, 7
      %v3043 = vsel %vm2993, %v3040, %v3042
      %v3044 = vrot.slane %v2927, 7
      %v3045 = vrot.slane %v2928, 7
      %v3046 = vsel %vm2993, %v3044, %v3045
      %v3047 = vrot.slane %v2929, 7
      %v3048 = vsel %vm2993, %v3045, %v3047
      %v3049 = vrot.slane %v2930, 7
      %v3050 = vrot.slane %v2931, 7
      %v3051 = vsel %vm2993, %v3049, %v3050
      %v3052 = vrot.slane %v2932, 7
      %v3053 = vsel %vm2993, %v3050, %v3052
      %v3054 = vrot.slane %v2933, 7
      %v3055 = vrot.slane %v2934, 7
      %v3056 = vsel %vm2993, %v3054, %v3055
      %v3057 = vrot.slane %v2935, 7
      %v3058 = vsel %vm2993, %v3055, %v3057
      %v3059 = vrot.slane %v2936, 7
      %v3060 = vrot.slane %v2937, 7
      %v3061 = vsel %vm2993, %v3059, %v3060
      %v3062 = vrot.slane %v2938, 7
      %v3063 = vsel %vm2993, %v3060, %v3062
      %v3064 = vrot.slane %v2939, 7
      %v3065 = vrot.slane %v2940, 7
      %v3066 = vsel %vm2993, %v3064, %v3065
      %v3067 = vrot.slane %v2941, 7
      %v3068 = vsel %vm2993, %v3065, %v3067
      %v3069 = vrot.slane %v2942, 7
      %v3070 = vrot.slane %v2943, 7
      %v3071 = vsel %vm2993, %v3069, %v3070
      %v3072 = vrot.slane %v2944, 7
      %v3073 = vsel %vm2993, %v3070, %v3072
      %v3106 = vadd.f32 %v2996, %v2998
      %v3107 = vadd.f32 %v3106, %v3001
      %v3108 = vadd.f32 %v3107, %v3003
      %v3109 = vadd.f32 %v3108, %v3006
      %v3110 = vadd.f32 %v3109, %v3008
      %v3111 = vadd.f32 %v3110, %v3011
      %v3112 = vadd.f32 %v3111, %v3013
      %v3113 = vadd.f32 %v3112, %v3016
      %v3114 = vadd.f32 %v3113, %v3018
      %v3115 = vadd.f32 %v3114, %v3021
      %v3116 = vadd.f32 %v3115, %v3023
      %v3117 = vadd.f32 %v3116, %v3026
      %v3118 = vadd.f32 %v3117, %v3028
      %v3119 = vadd.f32 %v3118, %v3031
      %v3120 = vadd.f32 %v3119, %v3033
      %v3121 = vadd.f32 %v3120, %v3036
      %v3122 = vadd.f32 %v3121, %v3038
      %v3123 = vadd.f32 %v3122, %v3041
      %v3124 = vadd.f32 %v3123, %v3043
      %v3125 = vadd.f32 %v3124, %v3046
      %v3126 = vadd.f32 %v3125, %v3048
      %v3127 = vadd.f32 %v3126, %v3051
      %v3128 = vadd.f32 %v3127, %v3053
      %v3129 = vadd.f32 %v3128, %v3056
      %v3130 = vadd.f32 %v3129, %v3058
      %v3131 = vadd.f32 %v3130, %v3061
      %v3132 = vadd.f32 %v3131, %v3063
      %v3133 = vadd.f32 %v3132, %v3066
      %v3134 = vadd.f32 %v3133, %v3068
      %v3135 = vadd.f32 %v3134, %v3071
      %v3136 = vadd.f32 %v3135, %v3073
      %v3137 = vrot.slane %v3136, 4
      %v3138 = vadd.f32 %v3136, %v3137
      %v3139 = vrot.slane %v3138, 2
      %v3140 = vadd.f32 %v3138, %v3139
      %v3141 = vrot.slane %v3140, 1
      %v3142 = vadd.f32 %v3140, %v3141
      %3143 = vst [vmem:[%s319] sm:$0x1] %v3142
      %v3144 = vmul.f32 %v2996, %v2996
      %v3145 = vmul.f32 %v2998, %v2998
      %v3146 = vmul.f32 %v3001, %v3001
      %v3147 = vmul.f32 %v3003, %v3003
      %v3148 = vmul.f32 %v3006, %v3006
      %v3149 = vmul.f32 %v3008, %v3008
      %v3150 = vmul.f32 %v3011, %v3011
      %v3151 = vmul.f32 %v3013, %v3013
      %v3152 = vmul.f32 %v3016, %v3016
      %v3153 = vmul.f32 %v3018, %v3018
      %v3154 = vmul.f32 %v3021, %v3021
      %v3155 = vmul.f32 %v3023, %v3023
      %v3156 = vmul.f32 %v3026, %v3026
      %v3157 = vmul.f32 %v3028, %v3028
      %v3158 = vmul.f32 %v3031, %v3031
      %v3159 = vmul.f32 %v3033, %v3033
      %v3160 = vmul.f32 %v3036, %v3036
      %v3161 = vmul.f32 %v3038, %v3038
      %v3162 = vmul.f32 %v3041, %v3041
      %v3163 = vmul.f32 %v3043, %v3043
      %v3164 = vmul.f32 %v3046, %v3046
      %v3165 = vmul.f32 %v3048, %v3048
      %v3166 = vmul.f32 %v3051, %v3051
      %v3167 = vmul.f32 %v3053, %v3053
      %v3168 = vmul.f32 %v3056, %v3056
      %v3169 = vmul.f32 %v3058, %v3058
      %v3170 = vmul.f32 %v3061, %v3061
      %v3171 = vmul.f32 %v3063, %v3063
      %v3172 = vmul.f32 %v3066, %v3066
      %v3173 = vmul.f32 %v3068, %v3068
      %v3174 = vmul.f32 %v3071, %v3071
      %v3175 = vmul.f32 %v3073, %v3073
      %v3176 = vadd.f32 %v3144, %v3145
      %v3177 = vadd.f32 %v3176, %v3146
      %v3178 = vadd.f32 %v3177, %v3147
      %v3179 = vadd.f32 %v3178, %v3148
      %v3180 = vadd.f32 %v3179, %v3149
      %v3181 = vadd.f32 %v3180, %v3150
      %v3182 = vadd.f32 %v3181, %v3151
      %v3183 = vadd.f32 %v3182, %v3152
      %v3184 = vadd.f32 %v3183, %v3153
      %v3185 = vadd.f32 %v3184, %v3154
      %v3186 = vadd.f32 %v3185, %v3155
      %v3187 = vadd.f32 %v3186, %v3156
      %v3188 = vadd.f32 %v3187, %v3157
      %v3189 = vadd.f32 %v3188, %v3158
      %v3190 = vadd.f32 %v3189, %v3159
      %v3191 = vadd.f32 %v3190, %v3160
      %v3192 = vadd.f32 %v3191, %v3161
      %v3193 = vadd.f32 %v3192, %v3162
      %v3194 = vadd.f32 %v3193, %v3163
      %v3195 = vadd.f32 %v3194, %v3164
      %v3196 = vadd.f32 %v3195, %v3165
      %v3197 = vadd.f32 %v3196, %v3166
      %v3198 = vadd.f32 %v3197, %v3167
      %v3199 = vadd.f32 %v3198, %v3168
      %v3200 = vadd.f32 %v3199, %v3169
      %v3201 = vadd.f32 %v3200, %v3170
      %v3202 = vadd.f32 %v3201, %v3171
      %v3203 = vadd.f32 %v3202, %v3172
      %v3204 = vadd.f32 %v3203, %v3173
      %v3205 = vadd.f32 %v3204, %v3174
      %v3206 = vadd.f32 %v3205, %v3175
      %v3207 = vrot.slane %v3206, 4
      %v3208 = vadd.f32 %v3206, %v3207
      %v3209 = vrot.slane %v3208, 2
      %v3210 = vadd.f32 %v3208, %v3209
      %v3211 = vrot.slane %v3210, 1
      %v3212 = vadd.f32 %v3210, %v3211
      %3213 = vst [vmem:[%s322] sm:$0x1] %v3212
      %p3214 = scmp.lt.s32.totalorder %s20, 1
      %s3215 = scalar_select %p3214, %s20, 1
      %s3216 = smul.addr %s3215, 32
      %s3217 = smul.addr %s3216, 4
      %s3218 = scalar_lea.vmem %s6, %s3217
      %p3219 = scmp.lt.s32.totalorder %s20, 1
      %s3220 = scalar_select %p3219, %s20, 1
      %s3221 = scalar_lea.vmem %s7, %s3220
      %p3222 = scmp.lt.s32.totalorder %s20, 1
      %s3223 = scalar_select %p3222, %s20, 1
      %s3224 = scalar_lea.vmem %s8, %s3223
      // Predicated region
      $region45: #{block_forward.5} parent=43 // pred_check
        %p3225 = pneg %p169
      $region46: #{block_forward.5} parent=43 // pred_check_branch
        %3227 = sbr.rel (%p3225) target = $region48
      $region47: #{block_forward.5} parent=43 // pred_region
        _
      $region48: #{block_forward.5} parent=43 // pred_fallthru
        _
      // Predicated region
      $region49: #{block_forward.5} parent=43 // pred_check
        %p3228 = pneg %p195
      $region50: #{block_forward.5} parent=43 // pred_check_branch
        %3230 = sbr.rel (%p3228) target = $region52
      $region51: #{block_forward.5} parent=43 // pred_region
        _
      $region52: #{block_forward.5} parent=43 // pred_fallthru
        _
      // Predicated region
      $region53: #{block_forward.5} parent=43 // pred_check
        %p3231 = pneg %p221
      $region54: #{block_forward.5} parent=43 // pred_check_branch
        %3233 = sbr.rel (%p3231) target = $region56
      $region55: #{block_forward.5} parent=43 // pred_region
        _
      $region56: #{block_forward.5} parent=43 // pred_fallthru
        _
    $region44: #{block_forward.5} parent=5 // pred_fallthru
      _
    %p3234 = scmp.le.s32.totalorder 2, %s15
    // Predicated region
    $region57: #{block_forward.5} parent=5 // pred_check
      %p3235 = pneg %p3234
    $region58: #{block_forward.5} parent=5 // pred_check_branch
      %3237 = sbr.rel (%p3235) target = $region60
    $region59: #{block_forward.5} parent=5 // pred_region
      %s3238 = ssub.s32 %s15, 2
      // Predicated region
      $region61: #{block_forward.5} parent=59 // pred_check
        %p3239 = pneg %p175
      $region62: #{block_forward.5} parent=59 // pred_check_branch
        %3241 = sbr.rel (%p3239) target = $region64
      $region63: #{block_forward.5} parent=59 // pred_region
        %p3242 = scmp.lt.s32.totalorder %s21, 1
        %s3243 = scalar_select %p3242, %s21, 1
        %s3244 = smul.addr %s3243, 32
        %s3245 = smul.addr %s3244, 4
        %s3246 = scalar_lea.vmem %s6, %s3245
      $region64: #{block_forward.5} parent=59 // pred_fallthru
        _
      // Predicated region
      $region65: #{block_forward.5} parent=59 // pred_check
        %p3247 = pneg %p201
      $region66: #{block_forward.5} parent=59 // pred_check_branch
        %3249 = sbr.rel (%p3247) target = $region68
      $region67: #{block_forward.5} parent=59 // pred_region
        %p3250 = scmp.lt.s32.totalorder %s21, 1
        %s3251 = scalar_select %p3250, %s21, 1
        %s3252 = scalar_lea.vmem %s7, %s3251
      $region68: #{block_forward.5} parent=59 // pred_fallthru
        _
      // Predicated region
      $region69: #{block_forward.5} parent=59 // pred_check
        %p3253 = pneg %p227
      $region70: #{block_forward.5} parent=59 // pred_check_branch
        %3255 = sbr.rel (%p3253) target = $region72
      $region71: #{block_forward.5} parent=59 // pred_region
        %p3256 = scmp.lt.s32.totalorder %s21, 1
        %s3257 = scalar_select %p3256, %s21, 1
        %s3258 = scalar_lea.vmem %s8, %s3257
      $region72: #{block_forward.5} parent=59 // pred_fallthru
        _
    $region60: #{block_forward.5} parent=5 // pred_fallthru
      _
  $region6: #{block_forward.5} parent=0 // loop_footer
    %s19 = sadd.s32 1, %s15
  $region7: #{block_forward.5} parent=0 // loop_footer_branch
    %14 = sbr.rel target = $region3
  $region8: #{block_forward.5} parent=0 // loop_exit
    _

</llo_original>
